<compile_context>
chip_gen: v7x
topology: tpu7x:2x2x1
jax: 0.10.0
libtpu: 0.0.40
codegen_flags: <defaults>
</compile_context>

<pallas_src>
import functools
import math

import jax
import jax.numpy as jnp
from jax.experimental import pallas as pl
from jax.experimental.pallas import tpu as pltpu

LANE = 128


def _round_up(n, m):
    return ((n + m - 1) // m) * m


def _pad_to(a, shape):
    return jnp.pad(a, [(0, s - d) for s, d in zip(shape, a.shape)])


# ---------------------------------------------------------------------------
# Fused kernel
# ---------------------------------------------------------------------------
def _layernorm(h, w, b, d_model, eps=1e-5):
    # Padded lanes of h/w/b are exactly zero, so lane-axis sums only see the
    # true d_model channels.  Single-pass E[x^2] - mu^2 variance (one fewer
    # cross-lane (XLU) reduction than the two-pass form).
    mu = jnp.sum(h, axis=-1, keepdims=True) / d_model
    var = jnp.sum(h * h, axis=-1, keepdims=True) / d_model - mu * mu
    var = jnp.maximum(var, 0.0)
    return (h - mu) * jax.lax.rsqrt(var + eps) * w + b


def _fused_forward_kernel(num_layers, d_model, dp, op, tm,
                          a_ref, x_ref, gw1_ref, gw2_ref, fcw_ref,
                          attnw_ref, fw1_ref, fw2_ref, fb1_ref,
                          lvec_ref, misc_ref,
                          out_ref, h1_ref, h2_ref):
    phase = pl.program_id(0)
    i = pl.program_id(1)
    row0 = pl.multiple_of(i * tm, tm)

    @pl.when(phase == 0)
    def _gcn1():
        # GCNConv 1 + ReLU:  h1 = relu((A @ X) @ W1 + b1)
        ax = jnp.dot(a_ref[...], x_ref[...], preferred_element_type=jnp.float32)
        h = jnp.dot(ax.astype(jnp.bfloat16), gw1_ref[...],
                    preferred_element_type=jnp.float32)
        h = h + misc_ref[0:1, :dp]
        h1_ref[pl.ds(row0, tm), :] = jnp.maximum(h, 0.0).astype(jnp.bfloat16)

    @pl.when(phase == 1)
    def _gcn2():
        # GCNConv 2 (no ReLU):  h2 = (A @ h1) @ W2 + b2
        ah = jnp.dot(a_ref[...], h1_ref[...], preferred_element_type=jnp.float32)
        h = jnp.dot(ah.astype(jnp.bfloat16), gw2_ref[...],
                    preferred_element_type=jnp.float32)
        h2_ref[pl.ds(row0, tm), :] = h + misc_ref[1:2, :dp]

    @pl.when(phase == 2)
    def _encoder_and_fc():
        # Post-LN TransformerEncoderLayer stack + final Linear, per node row.
        # seq_len == 1  =>  softmax over the key axis is identically 1, so
        # MHA(x) == x @ (Wv@Wo) + (bv@Wo + bo); Wq/Wk are dead (folded on the
        # host).  Dropout is identity in eval mode.
        h = h2_ref[pl.ds(row0, tm), :]
        for l in range(num_layers):
            lv = lvec_ref[l]                      # (8, dp) packed vectors
            attn = jnp.dot(h.astype(jnp.bfloat16), attnw_ref[l],
                           preferred_element_type=jnp.float32) + lv[0:1, :]
            h = _layernorm(h + attn, lv[1:2, :], lv[2:3, :], d_model)
            ff = jnp.dot(h.astype(jnp.bfloat16), fw1_ref[l],
                         preferred_element_type=jnp.float32) + fb1_ref[l]
            ff = jnp.maximum(ff, 0.0)
            ff = jnp.dot(ff.astype(jnp.bfloat16), fw2_ref[l],
                         preferred_element_type=jnp.float32) + lv[3:4, :]
            h = _layernorm(h + ff, lv[4:5, :], lv[5:6, :], d_model)
        out = jnp.dot(h.astype(jnp.bfloat16), fcw_ref[...],
                      preferred_element_type=jnp.float32)
        out_ref[...] = out + misc_ref[2:3, :op]


# ---------------------------------------------------------------------------
# Host-side glue: graph normalization, packing, wrapper
# ---------------------------------------------------------------------------
def gcn_norm_adj(edge_index, num_nodes):
    # torch_geometric gcn_norm: A_hat = D^-1/2 (A + remaining self loops) D^-1/2
    src, dst = edge_index[0], edge_index[1]
    a = jnp.zeros((num_nodes, num_nodes), jnp.float32)
    a = a.at[dst, src].add(1.0)                      # message x_src -> dst
    diag = jnp.diagonal(a)
    # add_remaining_self_loops: only nodes WITHOUT an existing self loop get one
    a = a + jnp.diag(jnp.where(diag > 0.0, 0.0, 1.0))
    deg = jnp.sum(a, axis=1)
    dinv = jnp.where(deg > 0.0, jax.lax.rsqrt(deg), 0.0)
    return a * dinv[:, None] * dinv[None, :]


def gcn_transformer_forward(x, edge_index, params, num_heads=4):
    # num_heads kept for API parity; with seq_len == 1 the head count cannot
    # change the output (softmax over a single key is 1 for every head).
    del num_heads
    n, input_dim = x.shape
    hidden = params["gcn1_w"].shape[1]
    out_dim = params["fc_w"].shape[1]
    num_layers = len(params["layers"])
    dim_ff = params["layers"][0]["w1"].shape[1]

    dp = _round_up(hidden, LANE)
    fp = _round_up(input_dim, LANE)
    op = _round_up(out_dim, LANE)
    ffp = _round_up(dim_ff, LANE)
    tm = 128 if n >= 128 else _round_up(n, 16)
    n_pad = _round_up(n, tm)
    n_tiles = n_pad // tm

    a = gcn_norm_adj(edge_index, n)
    a_pad = _pad_to(a, (n_pad, n_pad)).astype(jnp.bfloat16)
    x_pad = _pad_to(x, (n_pad, fp)).astype(jnp.bfloat16)

    gw1 = _pad_to(params["gcn1_w"], (fp, dp)).astype(jnp.bfloat16)
    gw2 = _pad_to(params["gcn2_w"], (dp, dp)).astype(jnp.bfloat16)
    fcw = _pad_to(params["fc_w"], (dp, op)).astype(jnp.bfloat16)

    width = max(dp, op)
    misc = jnp.zeros((8, width), jnp.float32)
    misc = misc.at[0, :hidden].set(params["gcn1_b"])
    misc = misc.at[1, :hidden].set(params["gcn2_b"])
    misc = misc.at[2, :out_dim].set(params["fc_b"])

    attn_w, fw1, fw2, fb1, lvec = [], [], [], [], []
    for lp in params["layers"]:
        # Fold the degenerate attention:  MHA(x) = x @ (Wv@Wo) + (bv@Wo + bo)
        aw = lp["wv"] @ lp["wo"]
        ab = lp["bv"] @ lp["wo"] + lp["bo"]
        attn_w.append(_pad_to(aw, (dp, dp)))
        fw1.append(_pad_to(lp["w1"], (dp, ffp)))
        fw2.append(_pad_to(lp["w2"], (ffp, dp)))
        fb1.append(_pad_to(lp["b1"].reshape(1, -1), (1, ffp)))
        v = jnp.zeros((8, dp), jnp.float32)
        v = v.at[0, :hidden].set(ab)
        v = v.at[1, :hidden].set(lp["ln1_w"])
        v = v.at[2, :hidden].set(lp["ln1_b"])
        v = v.at[3, :hidden].set(lp["b2"])
        v = v.at[4, :hidden].set(lp["ln2_w"])
        v = v.at[5, :hidden].set(lp["ln2_b"])
        lvec.append(v)
    attn_w = jnp.stack(attn_w).astype(jnp.bfloat16)   # (L, dp, dp)
    fw1 = jnp.stack(fw1).astype(jnp.bfloat16)         # (L, dp, ffp)
    fw2 = jnp.stack(fw2).astype(jnp.bfloat16)         # (L, ffp, dp)
    fb1 = jnp.stack(fb1)                              # (L, 1, ffp) f32
    lvec = jnp.stack(lvec)                            # (L, 8, dp)  f32

    kernel = functools.partial(_fused_forward_kernel,
                               num_layers, float(hidden), dp, op, tm)
    whole = pl.BlockSpec(memory_space=pltpu.MemorySpace.VMEM)

    # A row tile is only needed in phases 0/1; during phase 2 it is pinned to
    # the last block visited so no extra DMA is issued at the phase boundary.
    a_map = lambda p, i, last=n_tiles - 1: (jnp.where(p < 2, i, last), 0)
    # Output only walks row tiles in phase 2; pinning it to block 0 during
    # phases 0/1 avoids writing back uninitialized blocks and keeps the
    # output visitation monotonic (no leave-and-revisit).
    out_map = lambda p, i: (jnp.where(p == 2, i, 0), 0)

    out = pl.pallas_call(
        kernel,
        out_shape=jax.ShapeDtypeStruct((n_pad, op), jnp.float32),
        grid_spec=pltpu.PrefetchScalarGridSpec(
            num_scalar_prefetch=0,
            grid=(3, n_tiles),
            in_specs=[
                pl.BlockSpec((tm, n_pad), a_map),
                whole,                     # x_pad
                whole, whole, whole,       # gw1, gw2, fcw
                whole, whole, whole, whole,  # attn_w, fw1, fw2, fb1
                whole, whole,              # lvec, misc
            ],
            out_specs=pl.BlockSpec((tm, op), out_map),
            scratch_shapes=[
                pltpu.VMEM((n_pad, dp), jnp.bfloat16),   # h1 (post-GCN1)
                pltpu.VMEM((n_pad, dp), jnp.float32),    # h2 (post-GCN2)
            ],
        ),
        compiler_params=pltpu.CompilerParams(
            # Phases are sequential and all row tiles of a phase feed the
            # shared VMEM scratch of the next, so both axes stay "arbitrary".
            dimension_semantics=("arbitrary", "arbitrary"),
            vmem_limit_bytes=48 * 1024 * 1024,   # fits v7x's 64 MiB VMEM
        ),
    )(a_pad, x_pad, gw1, gw2, fcw, attn_w, fw1, fw2, fb1, lvec, misc)

    return out[:n, :out_dim]


# ---------------------------------------------------------------------------
# Parameter init (weights stored in right-multiply (in, out) form)
# ---------------------------------------------------------------------------
def init_params(key, input_dim, hidden_dim, output_dim, num_layers, dim_ff=2048):
    keys = jax.random.split(key, 3 + num_layers)

    def w(k, shape, scale=0.05):
        return scale * jax.random.normal(k, shape, jnp.float32)

    params = {
        "gcn1_w": w(keys[0], (input_dim, hidden_dim)),
        "gcn1_b": w(jax.random.fold_in(keys[0], 1), (hidden_dim,)),
        "gcn2_w": w(keys[1], (hidden_dim, hidden_dim)),
        "gcn2_b": w(jax.random.fold_in(keys[1], 1), (hidden_dim,)),
        "fc_w":   w(keys[2], (hidden_dim, output_dim)),
        "fc_b":   w(jax.random.fold_in(keys[2], 1), (output_dim,)),
        "layers": [],
    }
    for l in range(num_layers):
        lk = jax.random.split(keys[3 + l], 10)
        params["layers"].append({
            "wq": w(lk[0], (hidden_dim, hidden_dim)),
            "wk": w(lk[1], (hidden_dim, hidden_dim)),
            "wv": w(lk[2], (hidden_dim, hidden_dim)),
            "bq": w(lk[3], (hidden_dim,)),
            "bk": w(lk[4], (hidden_dim,)),
            "bv": w(lk[5], (hidden_dim,)),
            "wo": w(lk[6], (hidden_dim, hidden_dim)),
            "bo": w(jax.random.fold_in(lk[6], 1), (hidden_dim,)),
            "ln1_w": jnp.ones((hidden_dim,), jnp.float32),
            "ln1_b": jnp.zeros((hidden_dim,), jnp.float32),
            "w1": w(lk[7], (hidden_dim, dim_ff)),
            "b1": w(jax.random.fold_in(lk[7], 1), (dim_ff,)),
            "w2": w(lk[8], (dim_ff, hidden_dim)),
            "b2": w(jax.random.fold_in(lk[8], 1), (hidden_dim,)),
            "ln2_w": jnp.ones((hidden_dim,), jnp.float32),
            "ln2_b": jnp.zeros((hidden_dim,), jnp.float32),
        })
    return params


# ---------------------------------------------------------------------------
# Pure-JAX f32 reference (full q/k/softmax path) for validation
# ---------------------------------------------------------------------------
def _ln_ref(h, w, b, eps=1e-5):
    mu = jnp.mean(h, axis=-1, keepdims=True)
    var = jnp.mean((h - mu) ** 2, axis=-1, keepdims=True)
    return (h - mu) * jax.lax.rsqrt(var + eps) * w + b


def reference_forward(x, a, params, num_heads):
    h = jnp.maximum(a @ (x @ params["gcn1_w"]) + params["gcn1_b"], 0.0)
    h = a @ (h @ params["gcn2_w"]) + params["gcn2_b"]
    n, d = h.shape
    hd = d // num_heads
    for lp in params["layers"]:
        q = h @ lp["wq"] + lp["bq"]
        k = h @ lp["wk"] + lp["bk"]
        v = h @ lp["wv"] + lp["bv"]
        s = jnp.sum(q.reshape(n, num_heads, hd) * k.reshape(n, num_heads, hd),
                    axis=-1) / math.sqrt(hd)
        p = jax.nn.softmax(s[..., None], axis=-1)        # length-1 key axis == 1
        attn = (p[..., None] * v.reshape(n, num_heads, 1, hd)).reshape(n, d)
        attn = attn @ lp["wo"] + lp["bo"]
        h = _ln_ref(h + attn, lp["ln1_w"], lp["ln1_b"])
        ff = jnp.maximum(h @ lp["w1"] + lp["b1"], 0.0) @ lp["w2"] + lp["b2"]
        h = _ln_ref(h + ff, lp["ln2_w"], lp["ln2_b"])
    return h @ params["fc_w"] + params["fc_b"]


# ---------------------------------------------------------------------------
if __name__ == "__main__":
    key = jax.random.PRNGKey(0)
    k_x, k_src, k_dst, k_p = jax.random.split(key, 4)

    N, E = 16, 40
    input_dim, hidden_dim, output_dim = 8, 32, 4
    num_heads, num_layers = 4, 2

    x = jax.random.normal(k_x, (N, input_dim), jnp.float32)
    src = jax.random.randint(k_src, (E,), 0, N)
    dst = jax.random.randint(k_dst, (E,), 0, N)
    edge_index = jnp.stack([src, dst], axis=0)

    params = init_params(k_p, input_dim, hidden_dim, output_dim, num_layers)

    out = gcn_transformer_forward(x, edge_index, params, num_heads)
    out = jax.block_until_ready(out)

    assert out.shape == (N, output_dim), out.shape
    assert bool(jnp.all(jnp.isfinite(out)))

    ref = reference_forward(x, gcn_norm_adj(edge_index, N), params, num_heads)
    err = float(jnp.max(jnp.abs(out - ref)))
    assert err < 0.25, f"max |kernel - reference| too large: {err}"

    print("KERNEL_OK")
</pallas_src>

<mosaic_0001>
module attributes {stable_mosaic.version = 11 : i64} {
  func.func @_fused_forward_kernel(%arg0: i32, %arg1: i32, %arg2: memref<16x16xbf16, #tpu.memory_space<vmem>>, %arg3: memref<16x128xbf16, #tpu.memory_space<vmem>>, %arg4: memref<128x128xbf16, #tpu.memory_space<vmem>>, %arg5: memref<128x128xbf16, #tpu.memory_space<vmem>>, %arg6: memref<128x128xbf16, #tpu.memory_space<vmem>>, %arg7: memref<2x128x128xbf16, #tpu.memory_space<vmem>>, %arg8: memref<2x128x2048xbf16, #tpu.memory_space<vmem>>, %arg9: memref<2x2048x128xbf16, #tpu.memory_space<vmem>>, %arg10: memref<2x1x2048xf32, #tpu.memory_space<vmem>>, %arg11: memref<2x8x128xf32, #tpu.memory_space<vmem>>, %arg12: memref<8x128xf32, #tpu.memory_space<vmem>>, %arg13: memref<16x128xf32, #tpu.memory_space<vmem>>, %arg14: memref<16x128xbf16, #tpu.memory_space<vmem>>, %arg15: memref<16x128xf32, #tpu.memory_space<vmem>>) attributes {dimension_semantics = [#tpu.dimension_semantics<arbitrary>, #tpu.dimension_semantics<arbitrary>], iteration_bounds = array<i64: 3, 1>, scalar_prefetch = 0 : i64, scratch_operands = 2 : i64, tpu.core_type = #tpu.core_type<tc>, window_params = [{transform_indices = @transform_0, window_bounds = array<i64: 16, 16>}, {pipeline_mode = #tpu.pipeline_mode<synchronous>, transform_indices = @transform_1, window_bounds = array<i64: 16, 128>}, {pipeline_mode = #tpu.pipeline_mode<synchronous>, transform_indices = @transform_2, window_bounds = array<i64: 128, 128>}, {pipeline_mode = #tpu.pipeline_mode<synchronous>, transform_indices = @transform_3, window_bounds = array<i64: 128, 128>}, {pipeline_mode = #tpu.pipeline_mode<synchronous>, transform_indices = @transform_4, window_bounds = array<i64: 128, 128>}, {pipeline_mode = #tpu.pipeline_mode<synchronous>, transform_indices = @transform_5, window_bounds = array<i64: 2, 128, 128>}, {pipeline_mode = #tpu.pipeline_mode<synchronous>, transform_indices = @transform_6, window_bounds = array<i64: 2, 128, 2048>}, {pipeline_mode = #tpu.pipeline_mode<synchronous>, transform_indices = @transform_7, window_bounds = array<i64: 2, 2048, 128>}, {pipeline_mode = #tpu.pipeline_mode<synchronous>, transform_indices = @transform_8, window_bounds = array<i64: 2, 1, 2048>}, {pipeline_mode = #tpu.pipeline_mode<synchronous>, transform_indices = @transform_9, window_bounds = array<i64: 2, 8, 128>}, {pipeline_mode = #tpu.pipeline_mode<synchronous>, transform_indices = @transform_10, window_bounds = array<i64: 8, 128>}, {transform_indices = @transform_11, window_bounds = array<i64: 16, 128>}]} {
    %c16_i32 = arith.constant 16 : i32
    %0 = arith.muli %arg1, %c16_i32 : i32
    %1 = tpu.assume_multiple %0, 16 : i32
    %c0_i32 = arith.constant 0 : i32
    %2 = arith.cmpi eq, %arg0, %c0_i32 : i32
    %3 = arith.extui %2 : i1 to i32
    %c0_i32_0 = arith.constant 0 : i32
    %4 = arith.cmpi ne, %3, %c0_i32_0 : i32
    scf.if %4 {
      %c0 = arith.constant 0 : index
      %c0_3 = arith.constant 0 : index
      %11 = vector.load %arg2[%c0, %c0_3] : memref<16x16xbf16, #tpu.memory_space<vmem>>, vector<16x16xbf16>
      %c0_4 = arith.constant 0 : index
      %c0_5 = arith.constant 0 : index
      %12 = vector.load %arg3[%c0_4, %c0_5] : memref<16x128xbf16, #tpu.memory_space<vmem>>, vector<16x128xbf16>
      %cst = arith.constant dense<0.000000e+00> : vector<16x128xf32>
      %13 = tpu.matmul %11, %12, %cst {dimension_numbers = #tpu.dot_dimension_numbers<[1], [0], [0], [1], [0, 0, 1, 1], [], []>} : vector<16x16xbf16>, vector<16x128xbf16>, vector<16x128xf32> -> vector<16x128xf32>
      %14 = arith.truncf %13 : vector<16x128xf32> to vector<16x128xbf16>
      %c0_6 = arith.constant 0 : index
      %c0_7 = arith.constant 0 : index
      %15 = vector.load %arg4[%c0_6, %c0_7] : memref<128x128xbf16, #tpu.memory_space<vmem>>, vector<128x128xbf16>
      %cst_8 = arith.constant dense<0.000000e+00> : vector<16x128xf32>
      %16 = tpu.matmul %14, %15, %cst_8 {dimension_numbers = #tpu.dot_dimension_numbers<[1], [0], [0], [1], [0, 0, 1, 1], [], []>} : vector<16x128xbf16>, vector<128x128xbf16>, vector<16x128xf32> -> vector<16x128xf32>
      %c0_9 = arith.constant 0 : index
      %c0_10 = arith.constant 0 : index
      %17 = vector.load %arg12[%c0_9, %c0_10] : memref<8x128xf32, #tpu.memory_space<vmem>>, vector<1x128xf32>
      %18 = vector.broadcast %17 : vector<1x128xf32> to vector<16x128xf32>
      %19 = arith.addf %16, %18 : vector<16x128xf32>
      %cst_11 = arith.constant 0.000000e+00 : f32
      %20 = vector.broadcast %cst_11 : f32 to vector<16x128xf32>
      %21 = arith.maximumf %19, %20 : vector<16x128xf32>
      %22 = arith.truncf %21 : vector<16x128xf32> to vector<16x128xbf16>
      %23 = arith.index_cast %1 : i32 to index
      %c0_12 = arith.constant 0 : index
      %24 = vector.load %arg14[%23, %c0_12] : memref<16x128xbf16, #tpu.memory_space<vmem>>, vector<16x128xbf16>
      tpu.vector_store %arg14[%23, %c0_12], %22 {strides = array<i32>} : memref<16x128xbf16, #tpu.memory_space<vmem>>, vector<16x128xbf16>,
    } else {
    }
    %c1_i32 = arith.constant 1 : i32
    %5 = arith.cmpi eq, %arg0, %c1_i32 : i32
    %6 = arith.extui %5 : i1 to i32
    %c0_i32_1 = arith.constant 0 : i32
    %7 = arith.cmpi ne, %6, %c0_i32_1 : i32
    scf.if %7 {
      %c0 = arith.constant 0 : index
      %c0_3 = arith.constant 0 : index
      %11 = vector.load %arg2[%c0, %c0_3] : memref<16x16xbf16, #tpu.memory_space<vmem>>, vector<16x16xbf16>
      %c0_4 = arith.constant 0 : index
      %c0_5 = arith.constant 0 : index
      %12 = vector.load %arg14[%c0_4, %c0_5] : memref<16x128xbf16, #tpu.memory_space<vmem>>, vector<16x128xbf16>
      %cst = arith.constant dense<0.000000e+00> : vector<16x128xf32>
      %13 = tpu.matmul %11, %12, %cst {dimension_numbers = #tpu.dot_dimension_numbers<[1], [0], [0], [1], [0, 0, 1, 1], [], []>} : vector<16x16xbf16>, vector<16x128xbf16>, vector<16x128xf32> -> vector<16x128xf32>
      %14 = arith.truncf %13 : vector<16x128xf32> to vector<16x128xbf16>
      %c0_6 = arith.constant 0 : index
      %c0_7 = arith.constant 0 : index
      %15 = vector.load %arg5[%c0_6, %c0_7] : memref<128x128xbf16, #tpu.memory_space<vmem>>, vector<128x128xbf16>
      %cst_8 = arith.constant dense<0.000000e+00> : vector<16x128xf32>
      %16 = tpu.matmul %14, %15, %cst_8 {dimension_numbers = #tpu.dot_dimension_numbers<[1], [0], [0], [1], [0, 0, 1, 1], [], []>} : vector<16x128xbf16>, vector<128x128xbf16>, vector<16x128xf32> -> vector<16x128xf32>
      %c1 = arith.constant 1 : index
      %c0_9 = arith.constant 0 : index
      %17 = vector.load %arg12[%c1, %c0_9] : memref<8x128xf32, #tpu.memory_space<vmem>>, vector<1x128xf32>
      %18 = vector.broadcast %17 : vector<1x128xf32> to vector<16x128xf32>
      %19 = arith.addf %16, %18 : vector<16x128xf32>
      %20 = arith.index_cast %1 : i32 to index
      %c0_10 = arith.constant 0 : index
      %21 = vector.load %arg15[%20, %c0_10] : memref<16x128xf32, #tpu.memory_space<vmem>>, vector<16x128xf32>
      tpu.vector_store %arg15[%20, %c0_10], %19 {strides = array<i32>} : memref<16x128xf32, #tpu.memory_space<vmem>>, vector<16x128xf32>,
    } else {
    }
    %c2_i32 = arith.constant 2 : i32
    %8 = arith.cmpi eq, %arg0, %c2_i32 : i32
    %9 = arith.extui %8 : i1 to i32
    %c0_i32_2 = arith.constant 0 : i32
    %10 = arith.cmpi ne, %9, %c0_i32_2 : i32
    scf.if %10 {
      %11 = arith.index_cast %1 : i32 to index
      %c0 = arith.constant 0 : index
      %12 = vector.load %arg15[%11, %c0] : memref<16x128xf32, #tpu.memory_space<vmem>>, vector<16x128xf32>
      %c0_3 = arith.constant 0 : index
      %c0_4 = arith.constant 0 : index
      %c0_5 = arith.constant 0 : index
      %13 = vector.load %arg11[%c0_3, %c0_4, %c0_5] : memref<2x8x128xf32, #tpu.memory_space<vmem>>, vector<1x8x128xf32>
      %14 = vector.shape_cast %13 : vector<1x8x128xf32> to vector<8x128xf32>
      %15 = arith.truncf %12 : vector<16x128xf32> to vector<16x128xbf16>
      %c0_6 = arith.constant 0 : index
      %c0_7 = arith.constant 0 : index
      %c0_8 = arith.constant 0 : index
      %16 = vector.load %arg7[%c0_6, %c0_7, %c0_8] : memref<2x128x128xbf16, #tpu.memory_space<vmem>>, vector<1x128x128xbf16>
      %17 = vector.shape_cast %16 : vector<1x128x128xbf16> to vector<128x128xbf16>
      %cst = arith.constant dense<0.000000e+00> : vector<16x128xf32>
      %18 = tpu.matmul %15, %17, %cst {dimension_numbers = #tpu.dot_dimension_numbers<[1], [0], [0], [1], [0, 0, 1, 1], [], []>} : vector<16x128xbf16>, vector<128x128xbf16>, vector<16x128xf32> -> vector<16x128xf32>
      %19 = vector.extract_strided_slice %14 {offsets = [0, 0], sizes = [1, 128], strides = [1, 1]} : vector<8x128xf32> to vector<1x128xf32>
      %20 = vector.broadcast %19 : vector<1x128xf32> to vector<16x128xf32>
      %21 = arith.addf %18, %20 : vector<16x128xf32>
      %22 = arith.addf %12, %21 : vector<16x128xf32>
      %23 = vector.extract_strided_slice %14 {offsets = [1, 0], sizes = [1, 128], strides = [1, 1]} : vector<8x128xf32> to vector<1x128xf32>
      %24 = vector.extract_strided_slice %14 {offsets = [2, 0], sizes = [1, 128], strides = [1, 1]} : vector<8x128xf32> to vector<1x128xf32>
      %cst_9 = arith.constant dense<0.000000e+00> : vector<16xf32>
      %25 = vector.multi_reduction <add>, %22, %cst_9 [1] : vector<16x128xf32> to vector<16xf32>
      %26 = vector.shape_cast %25 : vector<16xf32> to vector<16x1xf32>
      %cst_10 = arith.constant 3.200000e+01 : f32
      %27 = vector.broadcast %cst_10 : f32 to vector<16x1xf32>
      %28 = arith.divf %26, %27 : vector<16x1xf32>
      %29 = arith.mulf %22, %22 : vector<16x128xf32>
      %cst_11 = arith.constant dense<0.000000e+00> : vector<16xf32>
      %30 = vector.multi_reduction <add>, %29, %cst_11 [1] : vector<16x128xf32> to vector<16xf32>
      %31 = vector.shape_cast %30 : vector<16xf32> to vector<16x1xf32>
      %cst_12 = arith.constant 3.200000e+01 : f32
      %32 = vector.broadcast %cst_12 : f32 to vector<16x1xf32>
      %33 = arith.divf %31, %32 : vector<16x1xf32>
      %34 = arith.mulf %28, %28 : vector<16x1xf32>
      %35 = arith.subf %33, %34 : vector<16x1xf32>
      %cst_13 = arith.constant 0.000000e+00 : f32
      %36 = vector.broadcast %cst_13 : f32 to vector<16x1xf32>
      %37 = arith.maximumf %35, %36 : vector<16x1xf32>
      %38 = vector.broadcast %28 : vector<16x1xf32> to vector<16x128xf32>
      %39 = arith.subf %22, %38 : vector<16x128xf32>
      %cst_14 = arith.constant 9.99999974E-6 : f32
      %40 = vector.broadcast %cst_14 : f32 to vector<16x1xf32>
      %41 = arith.addf %37, %40 : vector<16x1xf32>
      %42 = math.rsqrt %41 : vector<16x1xf32>
      %43 = vector.broadcast %42 : vector<16x1xf32> to vector<16x128xf32>
      %44 = arith.mulf %39, %43 : vector<16x128xf32>
      %45 = vector.broadcast %23 : vector<1x128xf32> to vector<16x128xf32>
      %46 = arith.mulf %44, %45 : vector<16x128xf32>
      %47 = vector.broadcast %24 : vector<1x128xf32> to vector<16x128xf32>
      %48 = arith.addf %46, %47 : vector<16x128xf32>
      %49 = arith.truncf %48 : vector<16x128xf32> to vector<16x128xbf16>
      %c0_15 = arith.constant 0 : index
      %c0_16 = arith.constant 0 : index
      %c0_17 = arith.constant 0 : index
      %50 = vector.load %arg8[%c0_15, %c0_16, %c0_17] : memref<2x128x2048xbf16, #tpu.memory_space<vmem>>, vector<1x128x2048xbf16>
      %51 = vector.shape_cast %50 : vector<1x128x2048xbf16> to vector<128x2048xbf16>
      %cst_18 = arith.constant dense<0.000000e+00> : vector<16x2048xf32>
      %52 = tpu.matmul %49, %51, %cst_18 {dimension_numbers = #tpu.dot_dimension_numbers<[1], [0], [0], [1], [0, 0, 1, 1], [], []>} : vector<16x128xbf16>, vector<128x2048xbf16>, vector<16x2048xf32> -> vector<16x2048xf32>
      %c0_19 = arith.constant 0 : index
      %c0_20 = arith.constant 0 : index
      %c0_21 = arith.constant 0 : index
      %53 = vector.load %arg10[%c0_19, %c0_20, %c0_21] : memref<2x1x2048xf32, #tpu.memory_space<vmem>>, vector<1x1x2048xf32>
      %54 = vector.shape_cast %53 : vector<1x1x2048xf32> to vector<1x2048xf32>
      %55 = vector.broadcast %54 : vector<1x2048xf32> to vector<16x2048xf32>
      %56 = arith.addf %52, %55 : vector<16x2048xf32>
      %cst_22 = arith.constant 0.000000e+00 : f32
      %57 = vector.broadcast %cst_22 : f32 to vector<16x2048xf32>
      %58 = arith.maximumf %56, %57 : vector<16x2048xf32>
      %59 = arith.truncf %58 : vector<16x2048xf32> to vector<16x2048xbf16>
      %c0_23 = arith.constant 0 : index
      %c0_24 = arith.constant 0 : index
      %c0_25 = arith.constant 0 : index
      %60 = vector.load %arg9[%c0_23, %c0_24, %c0_25] : memref<2x2048x128xbf16, #tpu.memory_space<vmem>>, vector<1x2048x128xbf16>
      %61 = vector.shape_cast %60 : vector<1x2048x128xbf16> to vector<2048x128xbf16>
      %cst_26 = arith.constant dense<0.000000e+00> : vector<16x128xf32>
      %62 = tpu.matmul %59, %61, %cst_26 {dimension_numbers = #tpu.dot_dimension_numbers<[1], [0], [0], [1], [0, 0, 1, 1], [], []>} : vector<16x2048xbf16>, vector<2048x128xbf16>, vector<16x128xf32> -> vector<16x128xf32>
      %63 = vector.extract_strided_slice %14 {offsets = [3, 0], sizes = [1, 128], strides = [1, 1]} : vector<8x128xf32> to vector<1x128xf32>
      %64 = vector.broadcast %63 : vector<1x128xf32> to vector<16x128xf32>
      %65 = arith.addf %62, %64 : vector<16x128xf32>
      %66 = arith.addf %48, %65 : vector<16x128xf32>
      %67 = vector.extract_strided_slice %14 {offsets = [4, 0], sizes = [1, 128], strides = [1, 1]} : vector<8x128xf32> to vector<1x128xf32>
      %68 = vector.extract_strided_slice %14 {offsets = [5, 0], sizes = [1, 128], strides = [1, 1]} : vector<8x128xf32> to vector<1x128xf32>
      %cst_27 = arith.constant dense<0.000000e+00> : vector<16xf32>
      %69 = vector.multi_reduction <add>, %66, %cst_27 [1] : vector<16x128xf32> to vector<16xf32>
      %70 = vector.shape_cast %69 : vector<16xf32> to vector<16x1xf32>
      %cst_28 = arith.constant 3.200000e+01 : f32
      %71 = vector.broadcast %cst_28 : f32 to vector<16x1xf32>
      %72 = arith.divf %70, %71 : vector<16x1xf32>
      %73 = arith.mulf %66, %66 : vector<16x128xf32>
      %cst_29 = arith.constant dense<0.000000e+00> : vector<16xf32>
      %74 = vector.multi_reduction <add>, %73, %cst_29 [1] : vector<16x128xf32> to vector<16xf32>
      %75 = vector.shape_cast %74 : vector<16xf32> to vector<16x1xf32>
      %cst_30 = arith.constant 3.200000e+01 : f32
      %76 = vector.broadcast %cst_30 : f32 to vector<16x1xf32>
      %77 = arith.divf %75, %76 : vector<16x1xf32>
      %78 = arith.mulf %72, %72 : vector<16x1xf32>
      %79 = arith.subf %77, %78 : vector<16x1xf32>
      %cst_31 = arith.constant 0.000000e+00 : f32
      %80 = vector.broadcast %cst_31 : f32 to vector<16x1xf32>
      %81 = arith.maximumf %79, %80 : vector<16x1xf32>
      %82 = vector.broadcast %72 : vector<16x1xf32> to vector<16x128xf32>
      %83 = arith.subf %66, %82 : vector<16x128xf32>
      %cst_32 = arith.constant 9.99999974E-6 : f32
      %84 = vector.broadcast %cst_32 : f32 to vector<16x1xf32>
      %85 = arith.addf %81, %84 : vector<16x1xf32>
      %86 = math.rsqrt %85 : vector<16x1xf32>
      %87 = vector.broadcast %86 : vector<16x1xf32> to vector<16x128xf32>
      %88 = arith.mulf %83, %87 : vector<16x128xf32>
      %89 = vector.broadcast %67 : vector<1x128xf32> to vector<16x128xf32>
      %90 = arith.mulf %88, %89 : vector<16x128xf32>
      %91 = vector.broadcast %68 : vector<1x128xf32> to vector<16x128xf32>
      %92 = arith.addf %90, %91 : vector<16x128xf32>
      %c1 = arith.constant 1 : index
      %c0_33 = arith.constant 0 : index
      %c0_34 = arith.constant 0 : index
      %93 = vector.load %arg11[%c1, %c0_33, %c0_34] : memref<2x8x128xf32, #tpu.memory_space<vmem>>, vector<1x8x128xf32>
      %94 = vector.shape_cast %93 : vector<1x8x128xf32> to vector<8x128xf32>
      %95 = arith.truncf %92 : vector<16x128xf32> to vector<16x128xbf16>
      %c1_35 = arith.constant 1 : index
      %c0_36 = arith.constant 0 : index
      %c0_37 = arith.constant 0 : index
      %96 = vector.load %arg7[%c1_35, %c0_36, %c0_37] : memref<2x128x128xbf16, #tpu.memory_space<vmem>>, vector<1x128x128xbf16>
      %97 = vector.shape_cast %96 : vector<1x128x128xbf16> to vector<128x128xbf16>
      %cst_38 = arith.constant dense<0.000000e+00> : vector<16x128xf32>
      %98 = tpu.matmul %95, %97, %cst_38 {dimension_numbers = #tpu.dot_dimension_numbers<[1], [0], [0], [1], [0, 0, 1, 1], [], []>} : vector<16x128xbf16>, vector<128x128xbf16>, vector<16x128xf32> -> vector<16x128xf32>
      %99 = vector.extract_strided_slice %94 {offsets = [0, 0], sizes = [1, 128], strides = [1, 1]} : vector<8x128xf32> to vector<1x128xf32>
      %100 = vector.broadcast %99 : vector<1x128xf32> to vector<16x128xf32>
      %101 = arith.addf %98, %100 : vector<16x128xf32>
      %102 = arith.addf %92, %101 : vector<16x128xf32>
      %103 = vector.extract_strided_slice %94 {offsets = [1, 0], sizes = [1, 128], strides = [1, 1]} : vector<8x128xf32> to vector<1x128xf32>
      %104 = vector.extract_strided_slice %94 {offsets = [2, 0], sizes = [1, 128], strides = [1, 1]} : vector<8x128xf32> to vector<1x128xf32>
      %cst_39 = arith.constant dense<0.000000e+00> : vector<16xf32>
      %105 = vector.multi_reduction <add>, %102, %cst_39 [1] : vector<16x128xf32> to vector<16xf32>
      %106 = vector.shape_cast %105 : vector<16xf32> to vector<16x1xf32>
      %cst_40 = arith.constant 3.200000e+01 : f32
      %107 = vector.broadcast %cst_40 : f32 to vector<16x1xf32>
      %108 = arith.divf %106, %107 : vector<16x1xf32>
      %109 = arith.mulf %102, %102 : vector<16x128xf32>
      %cst_41 = arith.constant dense<0.000000e+00> : vector<16xf32>
      %110 = vector.multi_reduction <add>, %109, %cst_41 [1] : vector<16x128xf32> to vector<16xf32>
      %111 = vector.shape_cast %110 : vector<16xf32> to vector<16x1xf32>
      %cst_42 = arith.constant 3.200000e+01 : f32
      %112 = vector.broadcast %cst_42 : f32 to vector<16x1xf32>
      %113 = arith.divf %111, %112 : vector<16x1xf32>
      %114 = arith.mulf %108, %108 : vector<16x1xf32>
      %115 = arith.subf %113, %114 : vector<16x1xf32>
      %cst_43 = arith.constant 0.000000e+00 : f32
      %116 = vector.broadcast %cst_43 : f32 to vector<16x1xf32>
      %117 = arith.maximumf %115, %116 : vector<16x1xf32>
      %118 = vector.broadcast %108 : vector<16x1xf32> to vector<16x128xf32>
      %119 = arith.subf %102, %118 : vector<16x128xf32>
      %cst_44 = arith.constant 9.99999974E-6 : f32
      %120 = vector.broadcast %cst_44 : f32 to vector<16x1xf32>
      %121 = arith.addf %117, %120 : vector<16x1xf32>
      %122 = math.rsqrt %121 : vector<16x1xf32>
      %123 = vector.broadcast %122 : vector<16x1xf32> to vector<16x128xf32>
      %124 = arith.mulf %119, %123 : vector<16x128xf32>
      %125 = vector.broadcast %103 : vector<1x128xf32> to vector<16x128xf32>
      %126 = arith.mulf %124, %125 : vector<16x128xf32>
      %127 = vector.broadcast %104 : vector<1x128xf32> to vector<16x128xf32>
      %128 = arith.addf %126, %127 : vector<16x128xf32>
      %129 = arith.truncf %128 : vector<16x128xf32> to vector<16x128xbf16>
      %c1_45 = arith.constant 1 : index
      %c0_46 = arith.constant 0 : index
      %c0_47 = arith.constant 0 : index
      %130 = vector.load %arg8[%c1_45, %c0_46, %c0_47] : memref<2x128x2048xbf16, #tpu.memory_space<vmem>>, vector<1x128x2048xbf16>
      %131 = vector.shape_cast %130 : vector<1x128x2048xbf16> to vector<128x2048xbf16>
      %cst_48 = arith.constant dense<0.000000e+00> : vector<16x2048xf32>
      %132 = tpu.matmul %129, %131, %cst_48 {dimension_numbers = #tpu.dot_dimension_numbers<[1], [0], [0], [1], [0, 0, 1, 1], [], []>} : vector<16x128xbf16>, vector<128x2048xbf16>, vector<16x2048xf32> -> vector<16x2048xf32>
      %c1_49 = arith.constant 1 : index
      %c0_50 = arith.constant 0 : index
      %c0_51 = arith.constant 0 : index
      %133 = vector.load %arg10[%c1_49, %c0_50, %c0_51] : memref<2x1x2048xf32, #tpu.memory_space<vmem>>, vector<1x1x2048xf32>
      %134 = vector.shape_cast %133 : vector<1x1x2048xf32> to vector<1x2048xf32>
      %135 = vector.broadcast %134 : vector<1x2048xf32> to vector<16x2048xf32>
      %136 = arith.addf %132, %135 : vector<16x2048xf32>
      %cst_52 = arith.constant 0.000000e+00 : f32
      %137 = vector.broadcast %cst_52 : f32 to vector<16x2048xf32>
      %138 = arith.maximumf %136, %137 : vector<16x2048xf32>
      %139 = arith.truncf %138 : vector<16x2048xf32> to vector<16x2048xbf16>
      %c1_53 = arith.constant 1 : index
      %c0_54 = arith.constant 0 : index
      %c0_55 = arith.constant 0 : index
      %140 = vector.load %arg9[%c1_53, %c0_54, %c0_55] : memref<2x2048x128xbf16, #tpu.memory_space<vmem>>, vector<1x2048x128xbf16>
      %141 = vector.shape_cast %140 : vector<1x2048x128xbf16> to vector<2048x128xbf16>
      %cst_56 = arith.constant dense<0.000000e+00> : vector<16x128xf32>
      %142 = tpu.matmul %139, %141, %cst_56 {dimension_numbers = #tpu.dot_dimension_numbers<[1], [0], [0], [1], [0, 0, 1, 1], [], []>} : vector<16x2048xbf16>, vector<2048x128xbf16>, vector<16x128xf32> -> vector<16x128xf32>
      %143 = vector.extract_strided_slice %94 {offsets = [3, 0], sizes = [1, 128], strides = [1, 1]} : vector<8x128xf32> to vector<1x128xf32>
      %144 = vector.broadcast %143 : vector<1x128xf32> to vector<16x128xf32>
      %145 = arith.addf %142, %144 : vector<16x128xf32>
      %146 = arith.addf %128, %145 : vector<16x128xf32>
      %147 = vector.extract_strided_slice %94 {offsets = [4, 0], sizes = [1, 128], strides = [1, 1]} : vector<8x128xf32> to vector<1x128xf32>
      %148 = vector.extract_strided_slice %94 {offsets = [5, 0], sizes = [1, 128], strides = [1, 1]} : vector<8x128xf32> to vector<1x128xf32>
      %cst_57 = arith.constant dense<0.000000e+00> : vector<16xf32>
      %149 = vector.multi_reduction <add>, %146, %cst_57 [1] : vector<16x128xf32> to vector<16xf32>
      %150 = vector.shape_cast %149 : vector<16xf32> to vector<16x1xf32>
      %cst_58 = arith.constant 3.200000e+01 : f32
      %151 = vector.broadcast %cst_58 : f32 to vector<16x1xf32>
      %152 = arith.divf %150, %151 : vector<16x1xf32>
      %153 = arith.mulf %146, %146 : vector<16x128xf32>
      %cst_59 = arith.constant dense<0.000000e+00> : vector<16xf32>
      %154 = vector.multi_reduction <add>, %153, %cst_59 [1] : vector<16x128xf32> to vector<16xf32>
      %155 = vector.shape_cast %154 : vector<16xf32> to vector<16x1xf32>
      %cst_60 = arith.constant 3.200000e+01 : f32
      %156 = vector.broadcast %cst_60 : f32 to vector<16x1xf32>
      %157 = arith.divf %155, %156 : vector<16x1xf32>
      %158 = arith.mulf %152, %152 : vector<16x1xf32>
      %159 = arith.subf %157, %158 : vector<16x1xf32>
      %cst_61 = arith.constant 0.000000e+00 : f32
      %160 = vector.broadcast %cst_61 : f32 to vector<16x1xf32>
      %161 = arith.maximumf %159, %160 : vector<16x1xf32>
      %162 = vector.broadcast %152 : vector<16x1xf32> to vector<16x128xf32>
      %163 = arith.subf %146, %162 : vector<16x128xf32>
      %cst_62 = arith.constant 9.99999974E-6 : f32
      %164 = vector.broadcast %cst_62 : f32 to vector<16x1xf32>
      %165 = arith.addf %161, %164 : vector<16x1xf32>
      %166 = math.rsqrt %165 : vector<16x1xf32>
      %167 = vector.broadcast %166 : vector<16x1xf32> to vector<16x128xf32>
      %168 = arith.mulf %163, %167 : vector<16x128xf32>
      %169 = vector.broadcast %147 : vector<1x128xf32> to vector<16x128xf32>
      %170 = arith.mulf %168, %169 : vector<16x128xf32>
      %171 = vector.broadcast %148 : vector<1x128xf32> to vector<16x128xf32>
      %172 = arith.addf %170, %171 : vector<16x128xf32>
      %173 = arith.truncf %172 : vector<16x128xf32> to vector<16x128xbf16>
      %c0_63 = arith.constant 0 : index
      %c0_64 = arith.constant 0 : index
      %174 = vector.load %arg6[%c0_63, %c0_64] : memref<128x128xbf16, #tpu.memory_space<vmem>>, vector<128x128xbf16>
      %cst_65 = arith.constant dense<0.000000e+00> : vector<16x128xf32>
      %175 = tpu.matmul %173, %174, %cst_65 {dimension_numbers = #tpu.dot_dimension_numbers<[1], [0], [0], [1], [0, 0, 1, 1], [], []>} : vector<16x128xbf16>, vector<128x128xbf16>, vector<16x128xf32> -> vector<16x128xf32>
      %c2 = arith.constant 2 : index
      %c0_66 = arith.constant 0 : index
      %176 = vector.load %arg12[%c2, %c0_66] : memref<8x128xf32, #tpu.memory_space<vmem>>, vector<1x128xf32>
      %177 = vector.broadcast %176 : vector<1x128xf32> to vector<16x128xf32>
      %178 = arith.addf %175, %177 : vector<16x128xf32>
      %c0_67 = arith.constant 0 : index
      %c0_68 = arith.constant 0 : index
      %179 = vector.load %arg13[%c0_67, %c0_68] : memref<16x128xf32, #tpu.memory_space<vmem>>, vector<16x128xf32>
      tpu.vector_store %arg13[%c0_67, %c0_68], %178 {strides = array<i32>} : memref<16x128xf32, #tpu.memory_space<vmem>>, vector<16x128xf32>,
    } else {
    }
    return
  }
  func.func @transform_0(%arg0: i32, %arg1: i32) -> (i32, i32) {
    %c2_i32 = arith.constant 2 : i32
    %0 = arith.cmpi slt, %arg0, %c2_i32 : i32
    %c0_i32 = arith.constant 0 : i32
    %1 = arith.select %0, %arg1, %c0_i32 : i32
    %c0_i32_0 = arith.constant 0 : i32
    %c0_i32_1 = arith.constant 0 : i32
    return %1, %c0_i32_0 : i32, i32
  }
  func.func @transform_1(%arg0: i32, %arg1: i32) -> (i32, i32) {
    %c0_i32 = arith.constant 0 : i32
    %c0_i32_0 = arith.constant 0 : i32
    %c0_i32_1 = arith.constant 0 : i32
    return %c0_i32, %c0_i32_0 : i32, i32
  }
  func.func @transform_2(%arg0: i32, %arg1: i32) -> (i32, i32) {
    %c0_i32 = arith.constant 0 : i32
    %c0_i32_0 = arith.constant 0 : i32
    %c0_i32_1 = arith.constant 0 : i32
    return %c0_i32, %c0_i32_0 : i32, i32
  }
  func.func @transform_3(%arg0: i32, %arg1: i32) -> (i32, i32) {
    %c0_i32 = arith.constant 0 : i32
    %c0_i32_0 = arith.constant 0 : i32
    %c0_i32_1 = arith.constant 0 : i32
    return %c0_i32, %c0_i32_0 : i32, i32
  }
  func.func @transform_4(%arg0: i32, %arg1: i32) -> (i32, i32) {
    %c0_i32 = arith.constant 0 : i32
    %c0_i32_0 = arith.constant 0 : i32
    %c0_i32_1 = arith.constant 0 : i32
    return %c0_i32, %c0_i32_0 : i32, i32
  }
  func.func @transform_5(%arg0: i32, %arg1: i32) -> (i32, i32, i32) {
    %c0_i32 = arith.constant 0 : i32
    %c0_i32_0 = arith.constant 0 : i32
    %c0_i32_1 = arith.constant 0 : i32
    %c0_i32_2 = arith.constant 0 : i32
    return %c0_i32, %c0_i32_0, %c0_i32_1 : i32, i32, i32
  }
  func.func @transform_6(%arg0: i32, %arg1: i32) -> (i32, i32, i32) {
    %c0_i32 = arith.constant 0 : i32
    %c0_i32_0 = arith.constant 0 : i32
    %c0_i32_1 = arith.constant 0 : i32
    %c0_i32_2 = arith.constant 0 : i32
    return %c0_i32, %c0_i32_0, %c0_i32_1 : i32, i32, i32
  }
  func.func @transform_7(%arg0: i32, %arg1: i32) -> (i32, i32, i32) {
    %c0_i32 = arith.constant 0 : i32
    %c0_i32_0 = arith.constant 0 : i32
    %c0_i32_1 = arith.constant 0 : i32
    %c0_i32_2 = arith.constant 0 : i32
    return %c0_i32, %c0_i32_0, %c0_i32_1 : i32, i32, i32
  }
  func.func @transform_8(%arg0: i32, %arg1: i32) -> (i32, i32, i32) {
    %c0_i32 = arith.constant 0 : i32
    %c0_i32_0 = arith.constant 0 : i32
    %c0_i32_1 = arith.constant 0 : i32
    %c0_i32_2 = arith.constant 0 : i32
    return %c0_i32, %c0_i32_0, %c0_i32_1 : i32, i32, i32
  }
  func.func @transform_9(%arg0: i32, %arg1: i32) -> (i32, i32, i32) {
    %c0_i32 = arith.constant 0 : i32
    %c0_i32_0 = arith.constant 0 : i32
    %c0_i32_1 = arith.constant 0 : i32
    %c0_i32_2 = arith.constant 0 : i32
    return %c0_i32, %c0_i32_0, %c0_i32_1 : i32, i32, i32
  }
  func.func @transform_10(%arg0: i32, %arg1: i32) -> (i32, i32) {
    %c0_i32 = arith.constant 0 : i32
    %c0_i32_0 = arith.constant 0 : i32
    %c0_i32_1 = arith.constant 0 : i32
    return %c0_i32, %c0_i32_0 : i32, i32
  }
  func.func @transform_11(%arg0: i32, %arg1: i32) -> (i32, i32) {
    %c2_i32 = arith.constant 2 : i32
    %0 = arith.cmpi eq, %arg0, %c2_i32 : i32
    %c0_i32 = arith.constant 0 : i32
    %1 = arith.select %0, %arg1, %c0_i32 : i32
    %c0_i32_0 = arith.constant 0 : i32
    %c0_i32_1 = arith.constant 0 : i32
    return %1, %c0_i32_0 : i32, i32
  }
}

</mosaic_0001>

<llo_original>
// kernel: tpu_custom_call.1
$region0: #{tpu_custom_call.1}
  #allocation0 [shape = 'u32[]', space=smem, size = 0x4, offset = 0x4, fixed_abs, tag = 'smem constant byte address 0x4 - core index']
  #allocation1 [shape = 'u32[144,128]{1,0:T(1,128)}', space=vmem, size = 0x12000, scoped, tag = 'internal scratch']
  #allocation2 [shape = 'bf16[16,128]{1,0:T(16,128)(2,1)}', space=vmem, size = 0x1000, scoped, tag = 'scratch operand']
  #allocation3 [shape = 'f32[16,128]{1,0:T(8,128)}', space=vmem, size = 0x2000, scoped, tag = 'scratch operand']
  %s0 = inlined_call_operand.hbm [shape: bf16[16,16], index: 0, kind: input, shape index: {}]
  %s1 = inlined_call_operand.hbm [shape: bf16[16,128], index: 1, kind: input, shape index: {}]
  %s2 = inlined_call_operand.hbm [shape: bf16[128,128], index: 2, kind: input, shape index: {}]
  %s3 = inlined_call_operand.hbm [shape: bf16[128,128], index: 3, kind: input, shape index: {}]
  %s4 = inlined_call_operand.hbm [shape: bf16[128,128], index: 4, kind: input, shape index: {}]
  %s5 = inlined_call_operand.hbm [shape: bf16[2,128,128], index: 5, kind: input, shape index: {}]
  %s6 = inlined_call_operand.hbm [shape: bf16[2,128,2048], index: 6, kind: input, shape index: {}]
  %s7 = inlined_call_operand.hbm [shape: bf16[2,2048,128], index: 7, kind: input, shape index: {}]
  %s8 = inlined_call_operand.hbm [shape: f32[2,1,2048], index: 8, kind: input, shape index: {}]
  %s9 = inlined_call_operand.vmem [shape: f32[2,8,128], index: 9, kind: input, shape index: {}]
  %s10 = inlined_call_operand.vmem [shape: f32[8,128], index: 10, kind: input, shape index: {}]
  %s11 = inlined_call_operand.hbm [shape: f32[16,128], index: 11, kind: output, shape index: {}]
  %s12 = sld [smem:[#allocation0]]
  $region125: #{tpu_custom_call.1} parent=0
    _
  %s14 = ssub.s32 1, %s12
  %s15 = scalar_select 0, %s14, %s12
  $region1: #{tpu_custom_call.1} parent=0
    #allocation4 [shape = 'u8[8192]{0}', space=vmem, size = 0x2000, scoped, tag = 'input window, operand 0']
    #allocation5 [shape = 's32[2]{0}', space=sflag, size = 0x8, scoped, tag = 'scoped memory for tpu_custom_call.1']
    #allocation6 [shape = 's32[2]{0}', space=sflag, size = 0x8, scoped, tag = 'scoped memory for tpu_custom_call.1']
    #allocation7 [shape = 'u8[4096]{0}', space=vmem, size = 0x1000, scoped, tag = 'input window, operand 1, single buffered']
    #allocation8 [shape = 's32[1]{0}', space=sflag, size = 0x4, scoped, tag = 'scoped memory for tpu_custom_call.1']
    #allocation9 [shape = 'u8[32768]{0}', space=vmem, size = 0x8000, scoped, tag = 'input window, operand 2, single buffered']
    #allocation10 [shape = 'u8[32768]{0}', space=vmem, size = 0x8000, scoped, tag = 'input window, operand 3, single buffered']
    #allocation11 [shape = 's32[1]{0}', space=sflag, size = 0x4, scoped, tag = 'scoped memory for tpu_custom_call.1']
    #allocation12 [shape = 'u8[32768]{0}', space=vmem, size = 0x8000, scoped, tag = 'input window, operand 4, single buffered']
    #allocation13 [shape = 'u8[65536]{0}', space=vmem, size = 0x10000, scoped, tag = 'input window, operand 5, single buffered']
    #allocation14 [shape = 's32[1]{0}', space=sflag, size = 0x4, scoped, tag = 'scoped memory for tpu_custom_call.1']
    #allocation15 [shape = 'u8[1048576]{0}', space=vmem, size = 0x100000, scoped, tag = 'input window, operand 6, single buffered']
    #allocation16 [shape = 'u8[1048576]{0}', space=vmem, size = 0x100000, scoped, tag = 'input window, operand 7, single buffered']
    #allocation17 [shape = 's32[1]{0}', space=sflag, size = 0x4, scoped, tag = 'scoped memory for tpu_custom_call.1']
    #allocation18 [shape = 'u8[16384]{0}', space=vmem, size = 0x4000, scoped, tag = 'input window, operand 8, single buffered']
    #allocation19 [shape = 'u8[16384]{0}', space=vmem, size = 0x4000, scoped, tag = 'output window, operand 0']
    %16 = vsyncpa [#allocation5], 0
    %s17 = scalar_lea.sflag [#allocation5], 1
    %18 = vsyncpa %s17, 0
    %19 = vsyncpa [#allocation8], 0
    %20 = vsyncpa [#allocation11], 0
    %21 = vsyncpa [#allocation14], 0
    %22 = vsyncpa [#allocation17], 0
    %23 = vsyncpa [#allocation6], 0
    %s24 = scalar_lea.sflag [#allocation6], 1
    %25 = vsyncpa %s24, 0
    loop: start=0, step=1, limit=5
    $region2: #{tpu_custom_call.1} parent=1 // loop_pre_header
      _
    $region3: #{tpu_custom_call.1} parent=1 // loop_header
      %s27 = sphi 0, %s31
      %p28 = scmp.ge.s32.totalorder %s27, 5
      %s34 = sphi 0, %s46
      %s35 = sphi 0, %s42
      %s36 = sphi 0, %s34
      %s37 = sphi 0, %s35
      %s38 = sphi 0, %s36
      %s39 = sphi 0, %s37
      %s53 = sphi 0, %s55
      %s56 = sphi 0, %s53
      %s57 = sphi 0, %s56
      %s73 = sphi 0, %s57
      %s77 = sphi 0, %s77
      %s79 = sphi 0, %s77
      %s80 = sphi 0, %s79
      %s94 = sphi 0, %s80
      %s98 = sphi 0, %s98
      %s100 = sphi 0, %s98
      %s101 = sphi 0, %s100
      %s115 = sphi 0, %s101
      %s119 = sphi 0, %s119
      %s121 = sphi 0, %s119
      %s122 = sphi 0, %s121
      %s136 = sphi 0, %s122
      %s140 = sphi 0, %s140
      %s142 = sphi 0, %s140
      %s143 = sphi 0, %s142
      %s157 = sphi 0, %s143
      %s161 = sphi 0, %s161
      %s163 = sphi 0, %s161
      %s164 = sphi 0, %s163
      %s178 = sphi 0, %s164
      %s182 = sphi 0, %s182
      %s184 = sphi 0, %s182
      %s185 = sphi 0, %s184
      %s199 = sphi 0, %s185
      %s203 = sphi 0, %s203
      %s205 = sphi 0, %s203
      %s206 = sphi 0, %s205
      %s220 = sphi 0, %s206
      %s224 = sphi 0, %s224
      %s226 = sphi 0, %s224
      %s227 = sphi 0, %s226
      %s241 = sphi 0, %s227
      %s245 = sphi 0, %s245
      %s247 = sphi 0, %s245
      %s248 = sphi 0, %s247
      %s262 = sphi 0, %s248
      %s266 = sphi 0, %s266
      %s268 = sphi 0, %s266
      %s269 = sphi 0, %s268
      %s283 = sphi 0, %s269
      %s293 = sphi 0, %s295
      %s296 = sphi 0, %s293
      %s297 = sphi 0, %s296
      %s313 = sphi 0, %s297
    $region4: #{tpu_custom_call.1} parent=1 // loop_header_branch
      %30 = sbr.rel (%p28) target = $region8
    $region5: #{tpu_custom_call.1} parent=1 // loop_body
      %s32 = ssub.s32 %s27, 1
      %s33 = ssub.s32 %s27, 2
      %s40 = sadd.s32 1, %s35
      %p41 = scmp.ge.s32.totalorder %s40, 1
      %s42 = scalar_select %p41, 0, %s40
      %s43 = sadd.s32 1, %s34
      %s44 = scalar_select %p41, %s43, %s34
      %p45 = scmp.ge.s32.totalorder %s44, 3
      %s46 = scalar_select %p45, 0, %s44
      %p47 = scmp.lt.s32.totalorder %s34, 2
      %s48 = scalar_select %p47, %s35, 0
      %p49 = scmp.lt.s32.totalorder %s46, 2
      %s50 = scalar_select %p49, %s42, 0
      %s51 = ssub.s32 %s48, %s50
      %p52 = scmp.eq.s32.totalorder %s51, 0
      %s54 = sadd.s32 %s53, 1
      %s55 = scalar_select %p52, %s53, %s54
      %p58 = pneg %p52
      %p59 = scmp.eq.s32.totalorder %s27, 2
      %p60 = por %p58, %p59
      %p61 = scmp.ne.s32.totalorder %s53, %s56
      %p62 = scmp.eq.s32.totalorder %s27, 0
      %p63 = por %p61, %p62
      %p64 = scmp.ne.s32.totalorder %s53, %s56
      %p65 = scmp.eq.s32.totalorder %s32, 2
      %p66 = por %p64, %p65
      %p67 = scmp.ne.s32.totalorder %s56, %s57
      %p68 = scmp.eq.s32.totalorder %s32, 0
      %p69 = por %p67, %p68
      %p70 = scmp.ne.s32.totalorder %s56, %s57
      %p71 = scmp.eq.s32.totalorder %s33, 2
      %p72 = por %p70, %p71
      %p74 = scmp.ne.s32.totalorder %s57, %s73
      %p75 = scmp.eq.s32.totalorder %s33, 0
      %p76 = por %p74, %p75
      %s78 = sadd.s32 %s77, 1
      %p81 = scmp.eq.s32.totalorder %s27, 2
      %p82 = scmp.ne.s32.totalorder %s77, %s79
      %p83 = scmp.eq.s32.totalorder %s27, 0
      %p84 = por %p82, %p83
      %p85 = scmp.ne.s32.totalorder %s77, %s79
      %p86 = scmp.eq.s32.totalorder %s32, 2
      %p87 = por %p85, %p86
      %p88 = scmp.ne.s32.totalorder %s79, %s80
      %p89 = scmp.eq.s32.totalorder %s32, 0
      %p90 = por %p88, %p89
      %p91 = scmp.ne.s32.totalorder %s79, %s80
      %p92 = scmp.eq.s32.totalorder %s33, 2
      %p93 = por %p91, %p92
      %p95 = scmp.ne.s32.totalorder %s80, %s94
      %p96 = scmp.eq.s32.totalorder %s33, 0
      %p97 = por %p95, %p96
      %s99 = sadd.s32 %s98, 1
      %p102 = scmp.eq.s32.totalorder %s27, 2
      %p103 = scmp.ne.s32.totalorder %s98, %s100
      %p104 = scmp.eq.s32.totalorder %s27, 0
      %p105 = por %p103, %p104
      %p106 = scmp.ne.s32.totalorder %s98, %s100
      %p107 = scmp.eq.s32.totalorder %s32, 2
      %p108 = por %p106, %p107
      %p109 = scmp.ne.s32.totalorder %s100, %s101
      %p110 = scmp.eq.s32.totalorder %s32, 0
      %p111 = por %p109, %p110
      %p112 = scmp.ne.s32.totalorder %s100, %s101
      %p113 = scmp.eq.s32.totalorder %s33, 2
      %p114 = por %p112, %p113
      %p116 = scmp.ne.s32.totalorder %s101, %s115
      %p117 = scmp.eq.s32.totalorder %s33, 0
      %p118 = por %p116, %p117
      %s120 = sadd.s32 %s119, 1
      %p123 = scmp.eq.s32.totalorder %s27, 2
      %p124 = scmp.ne.s32.totalorder %s119, %s121
      %p125 = scmp.eq.s32.totalorder %s27, 0
      %p126 = por %p124, %p125
      %p127 = scmp.ne.s32.totalorder %s119, %s121
      %p128 = scmp.eq.s32.totalorder %s32, 2
      %p129 = por %p127, %p128
      %p130 = scmp.ne.s32.totalorder %s121, %s122
      %p131 = scmp.eq.s32.totalorder %s32, 0
      %p132 = por %p130, %p131
      %p133 = scmp.ne.s32.totalorder %s121, %s122
      %p134 = scmp.eq.s32.totalorder %s33, 2
      %p135 = por %p133, %p134
      %p137 = scmp.ne.s32.totalorder %s122, %s136
      %p138 = scmp.eq.s32.totalorder %s33, 0
      %p139 = por %p137, %p138
      %s141 = sadd.s32 %s140, 1
      %p144 = scmp.eq.s32.totalorder %s27, 2
      %p145 = scmp.ne.s32.totalorder %s140, %s142
      %p146 = scmp.eq.s32.totalorder %s27, 0
      %p147 = por %p145, %p146
      %p148 = scmp.ne.s32.totalorder %s140, %s142
      %p149 = scmp.eq.s32.totalorder %s32, 2
      %p150 = por %p148, %p149
      %p151 = scmp.ne.s32.totalorder %s142, %s143
      %p152 = scmp.eq.s32.totalorder %s32, 0
      %p153 = por %p151, %p152
      %p154 = scmp.ne.s32.totalorder %s142, %s143
      %p155 = scmp.eq.s32.totalorder %s33, 2
      %p156 = por %p154, %p155
      %p158 = scmp.ne.s32.totalorder %s143, %s157
      %p159 = scmp.eq.s32.totalorder %s33, 0
      %p160 = por %p158, %p159
      %s162 = sadd.s32 %s161, 1
      %p165 = scmp.eq.s32.totalorder %s27, 2
      %p166 = scmp.ne.s32.totalorder %s161, %s163
      %p167 = scmp.eq.s32.totalorder %s27, 0
      %p168 = por %p166, %p167
      %p169 = scmp.ne.s32.totalorder %s161, %s163
      %p170 = scmp.eq.s32.totalorder %s32, 2
      %p171 = por %p169, %p170
      %p172 = scmp.ne.s32.totalorder %s163, %s164
      %p173 = scmp.eq.s32.totalorder %s32, 0
      %p174 = por %p172, %p173
      %p175 = scmp.ne.s32.totalorder %s163, %s164
      %p176 = scmp.eq.s32.totalorder %s33, 2
      %p177 = por %p175, %p176
      %p179 = scmp.ne.s32.totalorder %s164, %s178
      %p180 = scmp.eq.s32.totalorder %s33, 0
      %p181 = por %p179, %p180
      %s183 = sadd.s32 %s182, 1
      %p186 = scmp.eq.s32.totalorder %s27, 2
      %p187 = scmp.ne.s32.totalorder %s182, %s184
      %p188 = scmp.eq.s32.totalorder %s27, 0
      %p189 = por %p187, %p188
      %p190 = scmp.ne.s32.totalorder %s182, %s184
      %p191 = scmp.eq.s32.totalorder %s32, 2
      %p192 = por %p190, %p191
      %p193 = scmp.ne.s32.totalorder %s184, %s185
      %p194 = scmp.eq.s32.totalorder %s32, 0
      %p195 = por %p193, %p194
      %p196 = scmp.ne.s32.totalorder %s184, %s185
      %p197 = scmp.eq.s32.totalorder %s33, 2
      %p198 = por %p196, %p197
      %p200 = scmp.ne.s32.totalorder %s185, %s199
      %p201 = scmp.eq.s32.totalorder %s33, 0
      %p202 = por %p200, %p201
      %s204 = sadd.s32 %s203, 1
      %p207 = scmp.eq.s32.totalorder %s27, 2
      %p208 = scmp.ne.s32.totalorder %s203, %s205
      %p209 = scmp.eq.s32.totalorder %s27, 0
      %p210 = por %p208, %p209
      %p211 = scmp.ne.s32.totalorder %s203, %s205
      %p212 = scmp.eq.s32.totalorder %s32, 2
      %p213 = por %p211, %p212
      %p214 = scmp.ne.s32.totalorder %s205, %s206
      %p215 = scmp.eq.s32.totalorder %s32, 0
      %p216 = por %p214, %p215
      %p217 = scmp.ne.s32.totalorder %s205, %s206
      %p218 = scmp.eq.s32.totalorder %s33, 2
      %p219 = por %p217, %p218
      %p221 = scmp.ne.s32.totalorder %s206, %s220
      %p222 = scmp.eq.s32.totalorder %s33, 0
      %p223 = por %p221, %p222
      %s225 = sadd.s32 %s224, 1
      %p228 = scmp.eq.s32.totalorder %s27, 2
      %p229 = scmp.ne.s32.totalorder %s224, %s226
      %p230 = scmp.eq.s32.totalorder %s27, 0
      %p231 = por %p229, %p230
      %p232 = scmp.ne.s32.totalorder %s224, %s226
      %p233 = scmp.eq.s32.totalorder %s32, 2
      %p234 = por %p232, %p233
      %p235 = scmp.ne.s32.totalorder %s226, %s227
      %p236 = scmp.eq.s32.totalorder %s32, 0
      %p237 = por %p235, %p236
      %p238 = scmp.ne.s32.totalorder %s226, %s227
      %p239 = scmp.eq.s32.totalorder %s33, 2
      %p240 = por %p238, %p239
      %p242 = scmp.ne.s32.totalorder %s227, %s241
      %p243 = scmp.eq.s32.totalorder %s33, 0
      %p244 = por %p242, %p243
      %s246 = sadd.s32 %s245, 1
      %p249 = scmp.eq.s32.totalorder %s27, 2
      %p250 = scmp.ne.s32.totalorder %s245, %s247
      %p251 = scmp.eq.s32.totalorder %s27, 0
      %p252 = por %p250, %p251
      %p253 = scmp.ne.s32.totalorder %s245, %s247
      %p254 = scmp.eq.s32.totalorder %s32, 2
      %p255 = por %p253, %p254
      %p256 = scmp.ne.s32.totalorder %s247, %s248
      %p257 = scmp.eq.s32.totalorder %s32, 0
      %p258 = por %p256, %p257
      %p259 = scmp.ne.s32.totalorder %s247, %s248
      %p260 = scmp.eq.s32.totalorder %s33, 2
      %p261 = por %p259, %p260
      %p263 = scmp.ne.s32.totalorder %s248, %s262
      %p264 = scmp.eq.s32.totalorder %s33, 0
      %p265 = por %p263, %p264
      %s267 = sadd.s32 %s266, 1
      %p270 = scmp.eq.s32.totalorder %s27, 2
      %p271 = scmp.ne.s32.totalorder %s266, %s268
      %p272 = scmp.eq.s32.totalorder %s27, 0
      %p273 = por %p271, %p272
      %p274 = scmp.ne.s32.totalorder %s266, %s268
      %p275 = scmp.eq.s32.totalorder %s32, 2
      %p276 = por %p274, %p275
      %p277 = scmp.ne.s32.totalorder %s268, %s269
      %p278 = scmp.eq.s32.totalorder %s32, 0
      %p279 = por %p277, %p278
      %p280 = scmp.ne.s32.totalorder %s268, %s269
      %p281 = scmp.eq.s32.totalorder %s33, 2
      %p282 = por %p280, %p281
      %p284 = scmp.ne.s32.totalorder %s269, %s283
      %p285 = scmp.eq.s32.totalorder %s33, 0
      %p286 = por %p284, %p285
      %p287 = scmp.eq.s32.totalorder %s34, 2
      %s288 = scalar_select %p287, %s35, 0
      %p289 = scmp.eq.s32.totalorder %s46, 2
      %s290 = scalar_select %p289, %s42, 0
      %s291 = ssub.s32 %s288, %s290
      %p292 = scmp.eq.s32.totalorder %s291, 0
      %s294 = sadd.s32 %s293, 1
      %s295 = scalar_select %p292, %s293, %s294
      %p298 = pneg %p292
      %p299 = scmp.eq.s32.totalorder %s27, 2
      %p300 = por %p298, %p299
      %p301 = scmp.ne.s32.totalorder %s293, %s296
      %p302 = scmp.eq.s32.totalorder %s27, 0
      %p303 = por %p301, %p302
      %p304 = scmp.ne.s32.totalorder %s293, %s296
      %p305 = scmp.eq.s32.totalorder %s32, 2
      %p306 = por %p304, %p305
      %p307 = scmp.ne.s32.totalorder %s296, %s297
      %p308 = scmp.eq.s32.totalorder %s32, 0
      %p309 = por %p307, %p308
      %p310 = scmp.ne.s32.totalorder %s296, %s297
      %p311 = scmp.eq.s32.totalorder %s33, 2
      %p312 = por %p310, %p311
      %p314 = scmp.ne.s32.totalorder %s297, %s313
      %p315 = scmp.eq.s32.totalorder %s33, 0
      %p316 = por %p314, %p315
      %p317 = scmp.le.s32.totalorder 1, %s27
      %p318 = scmp.lt.s32.totalorder %s27, 4
      %p319 = pnand %p317, %p318
      %p320 = pneg %p319
      // Predicated region
      $region9: #{tpu_custom_call.1} parent=5 // pred_check
        _
      $region10: #{tpu_custom_call.1} parent=5 // pred_check_branch
        %322 = sbr.rel (%p319) target = $region12
      $region11: #{tpu_custom_call.1} parent=5 // pred_region
        %s323 = ssub.s32 %s27, 1
        // Predicated region
        $region13: #{tpu_custom_call.1} parent=11 // pred_check
          %p324 = pneg %p90
        $region14: #{tpu_custom_call.1} parent=11 // pred_check_branch
          %326 = sbr.rel (%p324) target = $region16
        $region15: #{tpu_custom_call.1} parent=11 // pred_region
          %s328 = ssub.s32 128, 128
          %329 = vsyncadd [#allocation8], %s328
          %s330 = sshll.u32 [#allocation7], 4
          %s331 = int_to_ptr.vmem [resolvable:$true] %s330
          %336 = dma.hbm_to_vmem [thread:$0]  %s1, 128, %s331, [#allocation8], 64, 64, 4
        $region16: #{tpu_custom_call.1} parent=11 // pred_fallthru
          _
        // Predicated region
        $region17: #{tpu_custom_call.1} parent=11 // pred_check
          %p337 = pneg %p111
        $region18: #{tpu_custom_call.1} parent=11 // pred_check_branch
          %339 = sbr.rel (%p337) target = $region20
        $region19: #{tpu_custom_call.1} parent=11 // pred_region
          %s341 = ssub.s32 1024, 1024
          %342 = vsyncadd [#allocation8], %s341
          %s343 = sshll.u32 [#allocation9], 4
          %s344 = int_to_ptr.vmem [resolvable:$true] %s343
          %349 = dma.hbm_to_vmem [thread:$0]  %s2, 1024, %s344, [#allocation8], 64, 64, 4
        $region20: #{tpu_custom_call.1} parent=11 // pred_fallthru
          _
        // Predicated region
        $region21: #{tpu_custom_call.1} parent=11 // pred_check
          %p350 = pneg %p132
        $region22: #{tpu_custom_call.1} parent=11 // pred_check_branch
          %352 = sbr.rel (%p350) target = $region24
        $region23: #{tpu_custom_call.1} parent=11 // pred_region
          %s354 = ssub.s32 1024, 1024
          %355 = vsyncadd [#allocation11], %s354
          %s356 = sshll.u32 [#allocation10], 4
          %s357 = int_to_ptr.vmem [resolvable:$true] %s356
          %362 = dma.hbm_to_vmem [thread:$0]  %s3, 1024, %s357, [#allocation11], 64, 64, 4
        $region24: #{tpu_custom_call.1} parent=11 // pred_fallthru
          _
        // Predicated region
        $region25: #{tpu_custom_call.1} parent=11 // pred_check
          %p363 = pneg %p153
        $region26: #{tpu_custom_call.1} parent=11 // pred_check_branch
          %365 = sbr.rel (%p363) target = $region28
        $region27: #{tpu_custom_call.1} parent=11 // pred_region
          %s367 = ssub.s32 1024, 1024
          %368 = vsyncadd [#allocation11], %s367
          %s369 = sshll.u32 [#allocation12], 4
          %s370 = int_to_ptr.vmem [resolvable:$true] %s369
          %375 = dma.hbm_to_vmem [thread:$0]  %s4, 1024, %s370, [#allocation11], 64, 64, 4
        $region28: #{tpu_custom_call.1} parent=11 // pred_fallthru
          _
        // Predicated region
        $region29: #{tpu_custom_call.1} parent=11 // pred_check
          %p376 = pneg %p174
        $region30: #{tpu_custom_call.1} parent=11 // pred_check_branch
          %378 = sbr.rel (%p376) target = $region32
        $region31: #{tpu_custom_call.1} parent=11 // pred_region
          %s380 = ssub.s32 2048, 2048
          %381 = vsyncadd [#allocation14], %s380
          %s382 = sshll.u32 [#allocation13], 4
          %s383 = int_to_ptr.vmem [resolvable:$true] %s382
          %388 = dma.hbm_to_vmem [thread:$0]  %s5, 2048, %s383, [#allocation14], 64, 64, 4
        $region32: #{tpu_custom_call.1} parent=11 // pred_fallthru
          _
        // Predicated region
        $region33: #{tpu_custom_call.1} parent=11 // pred_check
          %p389 = pneg %p195
        $region34: #{tpu_custom_call.1} parent=11 // pred_check_branch
          %391 = sbr.rel (%p389) target = $region36
        $region35: #{tpu_custom_call.1} parent=11 // pred_region
          %s393 = ssub.s32 32768, 32768
          %394 = vsyncadd [#allocation14], %s393
          %s395 = sshll.u32 [#allocation15], 4
          %s396 = int_to_ptr.vmem [resolvable:$true] %s395
          %401 = dma.hbm_to_vmem [thread:$0]  %s6, 32768, %s396, [#allocation14], 1024, 1024, 64
        $region36: #{tpu_custom_call.1} parent=11 // pred_fallthru
          _
        // Predicated region
        $region37: #{tpu_custom_call.1} parent=11 // pred_check
          %p402 = pneg %p216
        $region38: #{tpu_custom_call.1} parent=11 // pred_check_branch
          %404 = sbr.rel (%p402) target = $region40
        $region39: #{tpu_custom_call.1} parent=11 // pred_region
          %s406 = ssub.s32 32768, 32768
          %407 = vsyncadd [#allocation17], %s406
          %s408 = sshll.u32 [#allocation16], 4
          %s409 = int_to_ptr.vmem [resolvable:$true] %s408
          %414 = dma.hbm_to_vmem [thread:$0]  %s7, 32768, %s409, [#allocation17], 64, 64, 4
        $region40: #{tpu_custom_call.1} parent=11 // pred_fallthru
          _
        // Predicated region
        $region41: #{tpu_custom_call.1} parent=11 // pred_check
          %p415 = pneg %p237
        $region42: #{tpu_custom_call.1} parent=11 // pred_check_branch
          %417 = sbr.rel (%p415) target = $region44
        $region43: #{tpu_custom_call.1} parent=11 // pred_region
          %s419 = ssub.s32 512, 512
          %420 = vsyncadd [#allocation17], %s419
          %s421 = sshll.u32 [#allocation18], 4
          %s422 = int_to_ptr.vmem [resolvable:$true] %s421
          %427 = dma.hbm_to_vmem [thread:$0]  %s8, 512, %s422, [#allocation17], 256, 256, 16
        $region44: #{tpu_custom_call.1} parent=11 // pred_fallthru
          _
        // Predicated region
        $region45: #{tpu_custom_call.1} parent=11 // pred_check
          %p428 = pneg %p258
        $region46: #{tpu_custom_call.1} parent=11 // pred_check_branch
          %430 = sbr.rel (%p428) target = $region48
        $region47: #{tpu_custom_call.1} parent=11 // pred_region
          _
        $region48: #{tpu_custom_call.1} parent=11 // pred_fallthru
          _
        // Predicated region
        $region49: #{tpu_custom_call.1} parent=11 // pred_check
          %p431 = pneg %p279
        $region50: #{tpu_custom_call.1} parent=11 // pred_check_branch
          %433 = sbr.rel (%p431) target = $region52
        $region51: #{tpu_custom_call.1} parent=11 // pred_region
          _
        $region52: #{tpu_custom_call.1} parent=11 // pred_fallthru
          _
      $region12: #{tpu_custom_call.1} parent=5 // pred_fallthru
        _
      %p434 = scmp.lt.s32.totalorder %s27, 3
      // Predicated region
      $region53: #{tpu_custom_call.1} parent=5 // pred_check
        %p435 = pneg %p434
      $region54: #{tpu_custom_call.1} parent=5 // pred_check_branch
        %437 = sbr.rel (%p435) target = $region56
      $region55: #{tpu_custom_call.1} parent=5 // pred_region
        // Predicated region
        $region57: #{tpu_custom_call.1} parent=55 // pred_check
          %p438 = pneg %p63
        $region58: #{tpu_custom_call.1} parent=55 // pred_check_branch
          %440 = sbr.rel (%p438) target = $region60
        $region59: #{tpu_custom_call.1} parent=55 // pred_region
          %s441 = sand.u32 %s53, 1
          %s442 = scalar_lea.sflag [#allocation5], %s441
          %s443 = sand.u32 %s53, 1
          %s444 = smul.addr %s443, 8
          %s445 = scalar_lea.vmem [#allocation4], %s444
          %p446 = scmp.lt.s32.totalorder %s34, 2
          %s447 = scalar_select %p446, %s35, 0
          %s448 = smul.u32 2, %s447
          %s450 = ssub.s32 128, 128
          %451 = vsyncadd %s442, %s450
          %s452 = smul.addr %s448, 64
          %s453 = scalar_lea.hbm %s0, %s452
          %s454 = sshll.u32 %s445, 4
          %s455 = int_to_ptr.vmem [resolvable:$true] %s454
          %460 = dma.hbm_to_vmem [thread:$0]  %s453, 128, %s455, %s442, 64, 64, 4
        $region60: #{tpu_custom_call.1} parent=55 // pred_fallthru
          _
      $region56: #{tpu_custom_call.1} parent=5 // pred_fallthru
        _
      %p461 = scmp.le.s32.totalorder 1, %s27
      %p462 = scmp.lt.s32.totalorder %s27, 4
      %p463 = pnand %p461, %p462
      %p464 = pneg %p463
      // Predicated region
      $region61: #{tpu_custom_call.1} parent=5 // pred_check
        _
      $region62: #{tpu_custom_call.1} parent=5 // pred_check_branch
        %466 = sbr.rel (%p463) target = $region64
      $region63: #{tpu_custom_call.1} parent=5 // pred_region
        %s467 = ssub.s32 %s27, 1
        %s468 = sand.u32 %s56, 1
        %s469 = scalar_lea.sflag [#allocation5], %s468
        %s470 = sand.u32 %s56, 1
        %s471 = smul.addr %s470, 8
        %s472 = scalar_lea.vmem [#allocation4], %s471
        // Predicated region
        $region65: #{tpu_custom_call.1} parent=63 // pred_check
          %p473 = pneg %p69
        $region66: #{tpu_custom_call.1} parent=63 // pred_check_branch
          %475 = sbr.rel (%p473) target = $region68
        $region67: #{tpu_custom_call.1} parent=63 // pred_region
          %476 = dma.done %s469, 128
        $region68: #{tpu_custom_call.1} parent=63 // pred_fallthru
          _
        // Predicated region
        $region69: #{tpu_custom_call.1} parent=63 // pred_check
          %p477 = pneg %p90
        $region70: #{tpu_custom_call.1} parent=63 // pred_check_branch
          %479 = sbr.rel (%p477) target = $region72
        $region71: #{tpu_custom_call.1} parent=63 // pred_region
          %480 = dma.done [#allocation8], 128
        $region72: #{tpu_custom_call.1} parent=63 // pred_fallthru
          _
        // Predicated region
        $region73: #{tpu_custom_call.1} parent=63 // pred_check
          %p481 = pneg %p111
        $region74: #{tpu_custom_call.1} parent=63 // pred_check_branch
          %483 = sbr.rel (%p481) target = $region76
        $region75: #{tpu_custom_call.1} parent=63 // pred_region
          %484 = dma.done [#allocation8], 1024
        $region76: #{tpu_custom_call.1} parent=63 // pred_fallthru
          _
        // Predicated region
        $region77: #{tpu_custom_call.1} parent=63 // pred_check
          %p485 = pneg %p132
        $region78: #{tpu_custom_call.1} parent=63 // pred_check_branch
          %487 = sbr.rel (%p485) target = $region80
        $region79: #{tpu_custom_call.1} parent=63 // pred_region
          %488 = dma.done [#allocation11], 1024
        $region80: #{tpu_custom_call.1} parent=63 // pred_fallthru
          _
        // Predicated region
        $region81: #{tpu_custom_call.1} parent=63 // pred_check
          %p489 = pneg %p153
        $region82: #{tpu_custom_call.1} parent=63 // pred_check_branch
          %491 = sbr.rel (%p489) target = $region84
        $region83: #{tpu_custom_call.1} parent=63 // pred_region
          %492 = dma.done [#allocation11], 1024
        $region84: #{tpu_custom_call.1} parent=63 // pred_fallthru
          _
        // Predicated region
        $region85: #{tpu_custom_call.1} parent=63 // pred_check
          %p493 = pneg %p174
        $region86: #{tpu_custom_call.1} parent=63 // pred_check_branch
          %495 = sbr.rel (%p493) target = $region88
        $region87: #{tpu_custom_call.1} parent=63 // pred_region
          %496 = dma.done [#allocation14], 2048
        $region88: #{tpu_custom_call.1} parent=63 // pred_fallthru
          _
        // Predicated region
        $region89: #{tpu_custom_call.1} parent=63 // pred_check
          %p497 = pneg %p195
        $region90: #{tpu_custom_call.1} parent=63 // pred_check_branch
          %499 = sbr.rel (%p497) target = $region92
        $region91: #{tpu_custom_call.1} parent=63 // pred_region
          %500 = dma.done [#allocation14], 32768
        $region92: #{tpu_custom_call.1} parent=63 // pred_fallthru
          _
        // Predicated region
        $region93: #{tpu_custom_call.1} parent=63 // pred_check
          %p501 = pneg %p216
        $region94: #{tpu_custom_call.1} parent=63 // pred_check_branch
          %503 = sbr.rel (%p501) target = $region96
        $region95: #{tpu_custom_call.1} parent=63 // pred_region
          %504 = dma.done [#allocation17], 32768
        $region96: #{tpu_custom_call.1} parent=63 // pred_fallthru
          _
        // Predicated region
        $region97: #{tpu_custom_call.1} parent=63 // pred_check
          %p505 = pneg %p237
        $region98: #{tpu_custom_call.1} parent=63 // pred_check_branch
          %507 = sbr.rel (%p505) target = $region100
        $region99: #{tpu_custom_call.1} parent=63 // pred_region
          %508 = dma.done [#allocation17], 512
        $region100: #{tpu_custom_call.1} parent=63 // pred_fallthru
          _
        %s509 = sand.u32 %s56, 1
        %s510 = scalar_lea.sflag [#allocation5], %s509
        %s511 = sand.u32 %s56, 1
        %s512 = smul.addr %s511, 8
        %s513 = scalar_lea.vmem [#allocation4], %s512
        %p514 = pneg %p69
        %p515 = pneg %p66
        %p516 = pneg %p90
        %p517 = pneg %p87
        %p518 = pneg %p111
        %p519 = pneg %p108
        %p520 = pneg %p132
        %p521 = pneg %p129
        %p522 = pneg %p153
        %p523 = pneg %p150
        %p524 = pneg %p174
        %p525 = pneg %p171
        %p526 = pneg %p195
        %p527 = pneg %p192
        %p528 = pneg %p216
        %p529 = pneg %p213
        %p530 = pneg %p237
        %p531 = pneg %p234
        %p532 = pneg %p258
        %p533 = pneg %p255
        %p534 = pneg %p279
        %p535 = pneg %p276
        %p536 = pneg %p309
        %p537 = pneg %p306
        %s538 = sand.u32 %s296, 1
        %s539 = scalar_lea.sflag [#allocation6], %s538
        %s540 = sand.u32 %s296, 1
        %s541 = smul.addr %s540, 16
        %s542 = scalar_lea.vmem [#allocation19], %s541
        %p543 = scmp.lt.s32.totalorder %s36, 2
        %s544 = scalar_select %p543, %s37, 0
        %s545 = smul.u32 2, %s544
        %p546 = scmp.eq.s32.totalorder %s36, 2
        %s547 = scalar_select %p546, %s37, 0
        %s548 = smul.u32 2, %s547
        %s550 = smul.u32 %s37, 16
        %p551 = scmp.eq.s32.totalorder %s36, 0
        // Predicated region
        $region101: #{tpu_custom_call.1} parent=63 // pred_check
          %p552 = pneg %p551
        $region102: #{tpu_custom_call.1} parent=63 // pred_check_branch
          %554 = sbr.rel (%p552) target = $region104
        $region103: #{tpu_custom_call.1} parent=63 // pred_region
          %v555 = vld [vmem:[%s472] sm:$0xf]
          %v556 = vld [vmem:[%s472 + $0x4] sm:$0xf]
          %v557 = vld [vmem:[#allocation7] sm:$0xf]
          %v558 = vld [vmem:[#allocation7 + $0x4] sm:$0xf]
          %v561 = vunpack.c.l.b16 %v555
          %v562 = vunpack.c.l.b16 %v556
          %v563 = vpack.c.b16 %v562, %v561
          %v566 = vunpack.c.l.b16 %v557
          %v567 = vunpack.c.l.b16 %v558
          %v568 = vpack.c.b16 %v567, %v566
          %vm570 = vcmask 130048
          %v572 = vsel %vm570, %v563, 0
          %574 = vmatprep.subr.bf16.mxu0 0
          %575 = vmatpush1.bf16.msra.mxu0 %v568
          %576 = vmatprep.subr.bf16.mxu0 0
          %577 = vmatpush1.bf16.msra.mxu0 0
          %578 = vmatprep.subr.bf16.mxu0 0
          %579 = vmatpush1.bf16.msra.mxu0 0
          %580 = vmatprep.subr.bf16.mxu0 0
          %581 = vmatpush1.bf16.msra.mxu0 0
          %582 = vmatprep.subr.bf16.mxu0 0
          %583 = vmatpush1.bf16.msra.mxu0 0
          %584 = vmatprep.subr.bf16.mxu0 0
          %585 = vmatpush1.bf16.msra.mxu0 0
          %586 = vmatprep.subr.bf16.mxu0 0
          %587 = vmatpush1.bf16.msra.mxu0 0
          %588 = vmatprep.subr.bf16.mxu0 0
          %589 = vmatpush1.bf16.msra.mxu0 0
          %590 = vmatprep.subr.bf16.mxu0 0
          %591 = vmatpush1.bf16.msra.mxu0 0
          %592 = vmatprep.subr.bf16.mxu0 0
          %593 = vmatpush1.bf16.msra.mxu0 0
          %594 = vmatprep.subr.bf16.mxu0 0
          %595 = vmatpush1.bf16.msra.mxu0 0
          %596 = vmatprep.subr.bf16.mxu0 0
          %597 = vmatpush1.bf16.msra.mxu0 0
          %598 = vmatprep.subr.bf16.mxu0 0
          %599 = vmatpush1.bf16.msra.mxu0 0
          %600 = vmatprep.subr.bf16.mxu0 0
          %601 = vmatpush1.bf16.msra.mxu0 0
          %602 = vmatprep.subr.bf16.mxu0 0
          %603 = vmatpush1.bf16.msra.mxu0 0
          %604 = vmatprep.subr.bf16.mxu0 0
          %605 = vmatpush1.bf16.msra.mxu0 0
          %606 = vmatprep.mubr.bf16.mxu0 0
          %607 = vmatmul.mubr.bf16.gmra.mrb[0].mxu0 %v572
          %v608 = vpop.f32.mrb[0].mxu0
          %v609 = vadd.f32 0.0, %v608
          %v610 = vpop.f32.mrb[0].mxu0
          %v611 = vpop.f32.mrb[0].mxu0
          %v612 = vadd.f32 0.0, %v611
          %v613 = vpop.f32.mrb[0].mxu0
          %614 = vdwg.mxu0
          %v615 = vpack.c.bf16 %v612, %v609
          %v616 = vld [vmem:[#allocation9] sm:$0xf]
          %v617 = vld [vmem:[#allocation9 + $0x4] sm:$0xf]
          %v618 = vld [vmem:[#allocation9 + $0x8] sm:$0xf]
          %v619 = vld [vmem:[#allocation9 + $0xc] sm:$0xf]
          %v620 = vld [vmem:[#allocation9 + $0x10] sm:$0xf]
          %v621 = vld [vmem:[#allocation9 + $0x14] sm:$0xf]
          %v622 = vld [vmem:[#allocation9 + $0x18] sm:$0xf]
          %v623 = vld [vmem:[#allocation9 + $0x1c] sm:$0xf]
          %v624 = vld [vmem:[#allocation9 + $0x20] sm:$0xf]
          %v625 = vld [vmem:[#allocation9 + $0x24] sm:$0xf]
          %v626 = vld [vmem:[#allocation9 + $0x28] sm:$0xf]
          %v627 = vld [vmem:[#allocation9 + $0x2c] sm:$0xf]
          %v628 = vld [vmem:[#allocation9 + $0x30] sm:$0xf]
          %v629 = vld [vmem:[#allocation9 + $0x34] sm:$0xf]
          %v630 = vld [vmem:[#allocation9 + $0x38] sm:$0xf]
          %v631 = vld [vmem:[#allocation9 + $0x3c] sm:$0xf]
          %v632 = vld [vmem:[%s10] sm:$0x1]
          %v633 = vlaneseq
          %v634 = vshrl.u32 %v633, 7
          %v635 = vsub.s32 0, %v634
          %v636 = vrot.slane %v632, %v635
          %v653 = vunpack.c.l.b16 %v616
          %v654 = vunpack.c.l.b16 %v617
          %v655 = vunpack.c.l.b16 %v618
          %v656 = vunpack.c.l.b16 %v619
          %v657 = vunpack.c.l.b16 %v620
          %v658 = vunpack.c.l.b16 %v621
          %v659 = vunpack.c.l.b16 %v622
          %v660 = vunpack.c.l.b16 %v623
          %v661 = vunpack.c.l.b16 %v624
          %v662 = vunpack.c.l.b16 %v625
          %v663 = vunpack.c.l.b16 %v626
          %v664 = vunpack.c.l.b16 %v627
          %v665 = vunpack.c.l.b16 %v628
          %v666 = vunpack.c.l.b16 %v629
          %v667 = vunpack.c.l.b16 %v630
          %v668 = vunpack.c.l.b16 %v631
          %v669 = vpack.c.b16 %v654, %v653
          %v670 = vpack.c.b16 %v656, %v655
          %v671 = vpack.c.b16 %v658, %v657
          %v672 = vpack.c.b16 %v660, %v659
          %v673 = vpack.c.b16 %v662, %v661
          %v674 = vpack.c.b16 %v664, %v663
          %v675 = vpack.c.b16 %v666, %v665
          %v676 = vpack.c.b16 %v668, %v667
          %685 = vmatprep.subr.bf16.mxu0 0
          %686 = vmatpush1.bf16.msra.mxu0 %v669
          %687 = vmatprep.subr.bf16.mxu0 0
          %688 = vmatpush1.bf16.msra.mxu0 %v670
          %689 = vmatprep.subr.bf16.mxu0 0
          %690 = vmatpush1.bf16.msra.mxu0 %v671
          %691 = vmatprep.subr.bf16.mxu0 0
          %692 = vmatpush1.bf16.msra.mxu0 %v672
          %693 = vmatprep.subr.bf16.mxu0 0
          %694 = vmatpush1.bf16.msra.mxu0 %v673
          %695 = vmatprep.subr.bf16.mxu0 0
          %696 = vmatpush1.bf16.msra.mxu0 %v674
          %697 = vmatprep.subr.bf16.mxu0 0
          %698 = vmatpush1.bf16.msra.mxu0 %v675
          %699 = vmatprep.subr.bf16.mxu0 0
          %700 = vmatpush1.bf16.msra.mxu0 %v676
          %701 = vmatprep.subr.bf16.mxu0 0
          %702 = vmatpush1.bf16.msra.mxu0 0
          %703 = vmatprep.subr.bf16.mxu0 0
          %704 = vmatpush1.bf16.msra.mxu0 0
          %705 = vmatprep.subr.bf16.mxu0 0
          %706 = vmatpush1.bf16.msra.mxu0 0
          %707 = vmatprep.subr.bf16.mxu0 0
          %708 = vmatpush1.bf16.msra.mxu0 0
          %709 = vmatprep.subr.bf16.mxu0 0
          %710 = vmatpush1.bf16.msra.mxu0 0
          %711 = vmatprep.subr.bf16.mxu0 0
          %712 = vmatpush1.bf16.msra.mxu0 0
          %713 = vmatprep.subr.bf16.mxu0 0
          %714 = vmatpush1.bf16.msra.mxu0 0
          %715 = vmatprep.subr.bf16.mxu0 0
          %716 = vmatpush1.bf16.msra.mxu0 0
          %717 = vmatprep.mubr.bf16.mxu0 0
          %718 = vmatmul.mubr.bf16.gmra.mrb[0].mxu0 %v615
          %v719 = vpop.f32.mrb[0].mxu0
          %v720 = vadd.f32 %v636, %v719
          %v721 = vpop.f32.mrb[0].mxu0
          %v722 = vpop.f32.mrb[0].mxu0
          %v723 = vadd.f32 %v636, %v722
          %v724 = vpop.f32.mrb[0].mxu0
          %725 = vdwg.mxu0
          %v726 = vmax.f32 %v720, 0.0
          %v727 = vmax.f32 %v723, 0.0
          %v728 = vpack.c.bf16 %v727, %v726
          %s729 = sshra.s32 %s550, 4
          %s730 = sand.u32 %s550, 15
          %s731 = smul.addr %s729, 8
          %s732 = scalar_lea.vmem [#allocation2], %s731
          %733 = vst [vmem:[%s732] sm:$0xff] %v728
        $region104: #{tpu_custom_call.1} parent=63 // pred_fallthru
          _
        %p734 = scmp.eq.s32.totalorder %s36, 1
        // Predicated region
        $region105: #{tpu_custom_call.1} parent=63 // pred_check
          %p735 = pneg %p734
        $region106: #{tpu_custom_call.1} parent=63 // pred_check_branch
          %737 = sbr.rel (%p735) target = $region108
        $region107: #{tpu_custom_call.1} parent=63 // pred_region
          %v738 = vld [vmem:[%s472] sm:$0xf]
          %v739 = vld [vmem:[%s472 + $0x4] sm:$0xf]
          %v740 = vld [vmem:[#allocation2] sm:$0xff]
          %v743 = vunpack.c.l.b16 %v738
          %v744 = vunpack.c.l.b16 %v739
          %v745 = vpack.c.b16 %v744, %v743
          %vm746 = vcmask 130048
          %v748 = vsel %vm746, %v745, 0
          %750 = vmatprep.subr.bf16.mxu0 0
          %751 = vmatpush1.bf16.msra.mxu0 %v740
          %752 = vmatprep.subr.bf16.mxu0 0
          %753 = vmatpush1.bf16.msra.mxu0 0
          %754 = vmatprep.subr.bf16.mxu0 0
          %755 = vmatpush1.bf16.msra.mxu0 0
          %756 = vmatprep.subr.bf16.mxu0 0
          %757 = vmatpush1.bf16.msra.mxu0 0
          %758 = vmatprep.subr.bf16.mxu0 0
          %759 = vmatpush1.bf16.msra.mxu0 0
          %760 = vmatprep.subr.bf16.mxu0 0
          %761 = vmatpush1.bf16.msra.mxu0 0
          %762 = vmatprep.subr.bf16.mxu0 0
          %763 = vmatpush1.bf16.msra.mxu0 0
          %764 = vmatprep.subr.bf16.mxu0 0
          %765 = vmatpush1.bf16.msra.mxu0 0
          %766 = vmatprep.subr.bf16.mxu0 0
          %767 = vmatpush1.bf16.msra.mxu0 0
          %768 = vmatprep.subr.bf16.mxu0 0
          %769 = vmatpush1.bf16.msra.mxu0 0
          %770 = vmatprep.subr.bf16.mxu0 0
          %771 = vmatpush1.bf16.msra.mxu0 0
          %772 = vmatprep.subr.bf16.mxu0 0
          %773 = vmatpush1.bf16.msra.mxu0 0
          %774 = vmatprep.subr.bf16.mxu0 0
          %775 = vmatpush1.bf16.msra.mxu0 0
          %776 = vmatprep.subr.bf16.mxu0 0
          %777 = vmatpush1.bf16.msra.mxu0 0
          %778 = vmatprep.subr.bf16.mxu0 0
          %779 = vmatpush1.bf16.msra.mxu0 0
          %780 = vmatprep.subr.bf16.mxu0 0
          %781 = vmatpush1.bf16.msra.mxu0 0
          %782 = vmatprep.mubr.bf16.mxu0 0
          %783 = vmatmul.mubr.bf16.gmra.mrb[0].mxu0 %v748
          %v784 = vpop.f32.mrb[0].mxu0
          %v785 = vadd.f32 0.0, %v784
          %v786 = vpop.f32.mrb[0].mxu0
          %v787 = vpop.f32.mrb[0].mxu0
          %v788 = vadd.f32 0.0, %v787
          %v789 = vpop.f32.mrb[0].mxu0
          %790 = vdwg.mxu0
          %v791 = vpack.c.bf16 %v788, %v785
          %v792 = vld [vmem:[#allocation10] sm:$0xf]
          %v793 = vld [vmem:[#allocation10 + $0x4] sm:$0xf]
          %v794 = vld [vmem:[#allocation10 + $0x8] sm:$0xf]
          %v795 = vld [vmem:[#allocation10 + $0xc] sm:$0xf]
          %v796 = vld [vmem:[#allocation10 + $0x10] sm:$0xf]
          %v797 = vld [vmem:[#allocation10 + $0x14] sm:$0xf]
          %v798 = vld [vmem:[#allocation10 + $0x18] sm:$0xf]
          %v799 = vld [vmem:[#allocation10 + $0x1c] sm:$0xf]
          %v800 = vld [vmem:[#allocation10 + $0x20] sm:$0xf]
          %v801 = vld [vmem:[#allocation10 + $0x24] sm:$0xf]
          %v802 = vld [vmem:[#allocation10 + $0x28] sm:$0xf]
          %v803 = vld [vmem:[#allocation10 + $0x2c] sm:$0xf]
          %v804 = vld [vmem:[#allocation10 + $0x30] sm:$0xf]
          %v805 = vld [vmem:[#allocation10 + $0x34] sm:$0xf]
          %v806 = vld [vmem:[#allocation10 + $0x38] sm:$0xf]
          %v807 = vld [vmem:[#allocation10 + $0x3c] sm:$0xf]
          %v808 = vld [vmem:[%s10 + $0x1] sm:$0x1]
          %v809 = vlaneseq
          %v810 = vshrl.u32 %v809, 7
          %v811 = vsub.s32 0, %v810
          %v812 = vrot.slane %v808, %v811
          %v829 = vunpack.c.l.b16 %v792
          %v830 = vunpack.c.l.b16 %v793
          %v831 = vunpack.c.l.b16 %v794
          %v832 = vunpack.c.l.b16 %v795
          %v833 = vunpack.c.l.b16 %v796
          %v834 = vunpack.c.l.b16 %v797
          %v835 = vunpack.c.l.b16 %v798
          %v836 = vunpack.c.l.b16 %v799
          %v837 = vunpack.c.l.b16 %v800
          %v838 = vunpack.c.l.b16 %v801
          %v839 = vunpack.c.l.b16 %v802
          %v840 = vunpack.c.l.b16 %v803
          %v841 = vunpack.c.l.b16 %v804
          %v842 = vunpack.c.l.b16 %v805
          %v843 = vunpack.c.l.b16 %v806
          %v844 = vunpack.c.l.b16 %v807
          %v845 = vpack.c.b16 %v830, %v829
          %v846 = vpack.c.b16 %v832, %v831
          %v847 = vpack.c.b16 %v834, %v833
          %v848 = vpack.c.b16 %v836, %v835
          %v849 = vpack.c.b16 %v838, %v837
          %v850 = vpack.c.b16 %v840, %v839
          %v851 = vpack.c.b16 %v842, %v841
          %v852 = vpack.c.b16 %v844, %v843
          %861 = vmatprep.subr.bf16.mxu0 0
          %862 = vmatpush1.bf16.msra.mxu0 %v845
          %863 = vmatprep.subr.bf16.mxu0 0
          %864 = vmatpush1.bf16.msra.mxu0 %v846
          %865 = vmatprep.subr.bf16.mxu0 0
          %866 = vmatpush1.bf16.msra.mxu0 %v847
          %867 = vmatprep.subr.bf16.mxu0 0
          %868 = vmatpush1.bf16.msra.mxu0 %v848
          %869 = vmatprep.subr.bf16.mxu0 0
          %870 = vmatpush1.bf16.msra.mxu0 %v849
          %871 = vmatprep.subr.bf16.mxu0 0
          %872 = vmatpush1.bf16.msra.mxu0 %v850
          %873 = vmatprep.subr.bf16.mxu0 0
          %874 = vmatpush1.bf16.msra.mxu0 %v851
          %875 = vmatprep.subr.bf16.mxu0 0
          %876 = vmatpush1.bf16.msra.mxu0 %v852
          %877 = vmatprep.subr.bf16.mxu0 0
          %878 = vmatpush1.bf16.msra.mxu0 0
          %879 = vmatprep.subr.bf16.mxu0 0
          %880 = vmatpush1.bf16.msra.mxu0 0
          %881 = vmatprep.subr.bf16.mxu0 0
          %882 = vmatpush1.bf16.msra.mxu0 0
          %883 = vmatprep.subr.bf16.mxu0 0
          %884 = vmatpush1.bf16.msra.mxu0 0
          %885 = vmatprep.subr.bf16.mxu0 0
          %886 = vmatpush1.bf16.msra.mxu0 0
          %887 = vmatprep.subr.bf16.mxu0 0
          %888 = vmatpush1.bf16.msra.mxu0 0
          %889 = vmatprep.subr.bf16.mxu0 0
          %890 = vmatpush1.bf16.msra.mxu0 0
          %891 = vmatprep.subr.bf16.mxu0 0
          %892 = vmatpush1.bf16.msra.mxu0 0
          %893 = vmatprep.mubr.bf16.mxu0 0
          %894 = vmatmul.mubr.bf16.gmra.mrb[0].mxu0 %v791
          %v895 = vpop.f32.mrb[0].mxu0
          %v896 = vadd.f32 %v812, %v895
          %v897 = vpop.f32.mrb[0].mxu0
          %v898 = vpop.f32.mrb[0].mxu0
          %v899 = vadd.f32 %v812, %v898
          %v900 = vpop.f32.mrb[0].mxu0
          %901 = vdwg.mxu0
          %s902 = scalar_lea.vmem [#allocation3], %s550
          %903 = vst [vmem:[%s902] sm:$0xff] %v896
          %904 = vst [vmem:[%s902 + $0x8] sm:$0xff] %v899
        $region108: #{tpu_custom_call.1} parent=63 // pred_fallthru
          _
        %p905 = scmp.eq.s32.totalorder %s36, 2
        // Predicated region
        $region109: #{tpu_custom_call.1} parent=63 // pred_check
          %p906 = pneg %p905
        $region110: #{tpu_custom_call.1} parent=63 // pred_check_branch
          %908 = sbr.rel (%p906) target = $region112
        $region111: #{tpu_custom_call.1} parent=63 // pred_region
          %s909 = scalar_lea.vmem [#allocation3], %s550
          %v910 = vld [vmem:[%s909] sm:$0xff]
          %v911 = vld [vmem:[%s909 + $0x8] sm:$0xff]
          %v912 = vld [vmem:[%s9] sm:$0xff]
          %v913 = vpack.c.bf16 %v911, %v910
          %v914 = vld [vmem:[#allocation13] sm:$0xf]
          %v915 = vld [vmem:[#allocation13 + $0x4] sm:$0xf]
          %v916 = vld [vmem:[#allocation13 + $0x8] sm:$0xf]
          %v917 = vld [vmem:[#allocation13 + $0xc] sm:$0xf]
          %v918 = vld [vmem:[#allocation13 + $0x10] sm:$0xf]
          %v919 = vld [vmem:[#allocation13 + $0x14] sm:$0xf]
          %v920 = vld [vmem:[#allocation13 + $0x18] sm:$0xf]
          %v921 = vld [vmem:[#allocation13 + $0x1c] sm:$0xf]
          %v922 = vld [vmem:[#allocation13 + $0x20] sm:$0xf]
          %v923 = vld [vmem:[#allocation13 + $0x24] sm:$0xf]
          %v924 = vld [vmem:[#allocation13 + $0x28] sm:$0xf]
          %v925 = vld [vmem:[#allocation13 + $0x2c] sm:$0xf]
          %v926 = vld [vmem:[#allocation13 + $0x30] sm:$0xf]
          %v927 = vld [vmem:[#allocation13 + $0x34] sm:$0xf]
          %v928 = vld [vmem:[#allocation13 + $0x38] sm:$0xf]
          %v929 = vld [vmem:[#allocation13 + $0x3c] sm:$0xf]
          %v930 = vlaneseq
          %v931 = vshrl.u32 %v930, 7
          %v932 = vsub.s32 0, %v931
          %v933 = vrot.slane %v912, %v932
          %v950 = vunpack.c.l.b16 %v914
          %v951 = vunpack.c.l.b16 %v915
          %v952 = vunpack.c.l.b16 %v916
          %v953 = vunpack.c.l.b16 %v917
          %v954 = vunpack.c.l.b16 %v918
          %v955 = vunpack.c.l.b16 %v919
          %v956 = vunpack.c.l.b16 %v920
          %v957 = vunpack.c.l.b16 %v921
          %v958 = vunpack.c.l.b16 %v922
          %v959 = vunpack.c.l.b16 %v923
          %v960 = vunpack.c.l.b16 %v924
          %v961 = vunpack.c.l.b16 %v925
          %v962 = vunpack.c.l.b16 %v926
          %v963 = vunpack.c.l.b16 %v927
          %v964 = vunpack.c.l.b16 %v928
          %v965 = vunpack.c.l.b16 %v929
          %v966 = vpack.c.b16 %v951, %v950
          %v967 = vpack.c.b16 %v953, %v952
          %v968 = vpack.c.b16 %v955, %v954
          %v969 = vpack.c.b16 %v957, %v956
          %v970 = vpack.c.b16 %v959, %v958
          %v971 = vpack.c.b16 %v961, %v960
          %v972 = vpack.c.b16 %v963, %v962
          %v973 = vpack.c.b16 %v965, %v964
          %982 = vmatprep.subr.bf16.mxu0 0
          %983 = vmatpush1.bf16.msra.mxu0 %v966
          %984 = vmatprep.subr.bf16.mxu0 0
          %985 = vmatpush1.bf16.msra.mxu0 %v967
          %986 = vmatprep.subr.bf16.mxu0 0
          %987 = vmatpush1.bf16.msra.mxu0 %v968
          %988 = vmatprep.subr.bf16.mxu0 0
          %989 = vmatpush1.bf16.msra.mxu0 %v969
          %990 = vmatprep.subr.bf16.mxu0 0
          %991 = vmatpush1.bf16.msra.mxu0 %v970
          %992 = vmatprep.subr.bf16.mxu0 0
          %993 = vmatpush1.bf16.msra.mxu0 %v971
          %994 = vmatprep.subr.bf16.mxu0 0
          %995 = vmatpush1.bf16.msra.mxu0 %v972
          %996 = vmatprep.subr.bf16.mxu0 0
          %997 = vmatpush1.bf16.msra.mxu0 %v973
          %998 = vmatprep.subr.bf16.mxu0 0
          %999 = vmatpush1.bf16.msra.mxu0 0
          %1000 = vmatprep.subr.bf16.mxu0 0
          %1001 = vmatpush1.bf16.msra.mxu0 0
          %1002 = vmatprep.subr.bf16.mxu0 0
          %1003 = vmatpush1.bf16.msra.mxu0 0
          %1004 = vmatprep.subr.bf16.mxu0 0
          %1005 = vmatpush1.bf16.msra.mxu0 0
          %1006 = vmatprep.subr.bf16.mxu0 0
          %1007 = vmatpush1.bf16.msra.mxu0 0
          %1008 = vmatprep.subr.bf16.mxu0 0
          %1009 = vmatpush1.bf16.msra.mxu0 0
          %1010 = vmatprep.subr.bf16.mxu0 0
          %1011 = vmatpush1.bf16.msra.mxu0 0
          %1012 = vmatprep.subr.bf16.mxu0 0
          %1013 = vmatpush1.bf16.msra.mxu0 0
          %1014 = vmatprep.mubr.bf16.mxu0 0
          %1015 = vmatmul.mubr.bf16.gmra.mrb[0].mxu0 %v913
          %v1016 = vpop.f32.mrb[0].mxu0
          %v1017 = vadd.f32 %v933, %v1016
          %v1018 = vpop.f32.mrb[0].mxu0
          %v1019 = vpop.f32.mrb[0].mxu0
          %v1020 = vadd.f32 %v933, %v1019
          %v1021 = vpop.f32.mrb[0].mxu0
          %1022 = vdwg.mxu0
          %v1023 = vadd.f32 %v910, %v1017
          %v1024 = vadd.f32 %v911, %v1020
          %1025 = vadd.xlane.f32.xlu0 %v1023
          %v1026 = vpop.xlane.xlu0 %1025
          %1027 = vadd.xlane.f32.xlu0 %v1024
          %v1028 = vpop.xlane.xlu0 %1027
          %v1029 = vrcp.pop 32.0
          %v1030 = vmul.f32 %v1026, %v1029
          %v1031 = vmul.f32 %v1028, %v1029
          %v1032 = vmul.f32 %v1023, %v1023
          %v1033 = vmul.f32 %v1024, %v1024
          %1034 = vadd.xlane.f32.xlu0 %v1032
          %v1035 = vpop.xlane.xlu0 %1034
          %1036 = vadd.xlane.f32.xlu0 %v1033
          %v1037 = vpop.xlane.xlu0 %1036
          %v1038 = vmul.f32 %v1035, %v1029
          %v1039 = vmul.f32 %v1037, %v1029
          %v1040 = vmul.f32 %v1030, %v1030
          %v1041 = vmul.f32 %v1031, %v1031
          %v1042 = vsub.f32 %v1038, %v1040
          %v1043 = vsub.f32 %v1039, %v1041
          %v1044 = vmax.f32 %v1042, 0.0
          %v1045 = vmax.f32 %v1043, 0.0
          %v1046 = vsub.f32 %v1023, %v1030
          %v1047 = vsub.f32 %v1024, %v1031
          %v1048 = vadd.f32 %v1044, 1e-05
          %v1049 = vadd.f32 %v1045, 1e-05
          %v1050 = vrsqrt.pop %v1048
          %v1051 = vrsqrt.pop %v1049
          %v1052 = vmul.f32 %v1046, %v1050
          %v1053 = vmul.f32 %v1047, %v1051
          %v1054 = vlaneseq
          %v1055 = vshrl.u32 %v1054, 7
          %v1056 = vsub.s32 1, %v1055
          %v1057 = vrot.slane %v912, %v1056
          %v1058 = vmul.f32 %v1052, %v1057
          %v1059 = vmul.f32 %v1053, %v1057
          %v1060 = vlaneseq
          %v1061 = vshrl.u32 %v1060, 7
          %v1062 = vsub.s32 2, %v1061
          %v1063 = vrot.slane %v912, %v1062
          %v1064 = vadd.f32 %v1058, %v1063
          %v1065 = vadd.f32 %v1059, %v1063
          %v1066 = vpack.c.bf16 %v1065, %v1064
          %v1067 = vld [vmem:[#allocation15] sm:$0xff]
          %v1068 = vld [vmem:[#allocation15 + $0x8] sm:$0xff]
          %v1069 = vld [vmem:[#allocation15 + $0x10] sm:$0xff]
          %v1070 = vld [vmem:[#allocation15 + $0x18] sm:$0xff]
          %v1071 = vld [vmem:[#allocation15 + $0x20] sm:$0xff]
          %v1072 = vld [vmem:[#allocation15 + $0x28] sm:$0xff]
          %v1073 = vld [vmem:[#allocation15 + $0x30] sm:$0xff]
          %v1074 = vld [vmem:[#allocation15 + $0x38] sm:$0xff]
          %v1075 = vld [vmem:[#allocation15 + $0x40] sm:$0xff]
          %v1076 = vld [vmem:[#allocation15 + $0x48] sm:$0xff]
          %v1077 = vld [vmem:[#allocation15 + $0x50] sm:$0xff]
          %v1078 = vld [vmem:[#allocation15 + $0x58] sm:$0xff]
          %v1079 = vld [vmem:[#allocation15 + $0x60] sm:$0xff]
          %v1080 = vld [vmem:[#allocation15 + $0x68] sm:$0xff]
          %v1081 = vld [vmem:[#allocation15 + $0x70] sm:$0xff]
          %v1082 = vld [vmem:[#allocation15 + $0x78] sm:$0xff]
          %v1083 = vld [vmem:[#allocation15 + $0x80] sm:$0xff]
          %v1084 = vld [vmem:[#allocation15 + $0x88] sm:$0xff]
          %v1085 = vld [vmem:[#allocation15 + $0x90] sm:$0xff]
          %v1086 = vld [vmem:[#allocation15 + $0x98] sm:$0xff]
          %v1087 = vld [vmem:[#allocation15 + $0xa0] sm:$0xff]
          %v1088 = vld [vmem:[#allocation15 + $0xa8] sm:$0xff]
          %v1089 = vld [vmem:[#allocation15 + $0xb0] sm:$0xff]
          %v1090 = vld [vmem:[#allocation15 + $0xb8] sm:$0xff]
          %v1091 = vld [vmem:[#allocation15 + $0xc0] sm:$0xff]
          %v1092 = vld [vmem:[#allocation15 + $0xc8] sm:$0xff]
          %v1093 = vld [vmem:[#allocation15 + $0xd0] sm:$0xff]
          %v1094 = vld [vmem:[#allocation15 + $0xd8] sm:$0xff]
          %v1095 = vld [vmem:[#allocation15 + $0xe0] sm:$0xff]
          %v1096 = vld [vmem:[#allocation15 + $0xe8] sm:$0xff]
          %v1097 = vld [vmem:[#allocation15 + $0xf0] sm:$0xff]
          %v1098 = vld [vmem:[#allocation15 + $0xf8] sm:$0xff]
          %v1099 = vld [vmem:[#allocation15 + $0x100] sm:$0xff]
          %v1100 = vld [vmem:[#allocation15 + $0x108] sm:$0xff]
          %v1101 = vld [vmem:[#allocation15 + $0x110] sm:$0xff]
          %v1102 = vld [vmem:[#allocation15 + $0x118] sm:$0xff]
          %v1103 = vld [vmem:[#allocation15 + $0x120] sm:$0xff]
          %v1104 = vld [vmem:[#allocation15 + $0x128] sm:$0xff]
          %v1105 = vld [vmem:[#allocation15 + $0x130] sm:$0xff]
          %v1106 = vld [vmem:[#allocation15 + $0x138] sm:$0xff]
          %v1107 = vld [vmem:[#allocation15 + $0x140] sm:$0xff]
          %v1108 = vld [vmem:[#allocation15 + $0x148] sm:$0xff]
          %v1109 = vld [vmem:[#allocation15 + $0x150] sm:$0xff]
          %v1110 = vld [vmem:[#allocation15 + $0x158] sm:$0xff]
          %v1111 = vld [vmem:[#allocation15 + $0x160] sm:$0xff]
          %v1112 = vld [vmem:[#allocation15 + $0x168] sm:$0xff]
          %v1113 = vld [vmem:[#allocation15 + $0x170] sm:$0xff]
          %v1114 = vld [vmem:[#allocation15 + $0x178] sm:$0xff]
          %v1115 = vld [vmem:[#allocation15 + $0x180] sm:$0xff]
          %v1116 = vld [vmem:[#allocation15 + $0x188] sm:$0xff]
          %v1117 = vld [vmem:[#allocation15 + $0x190] sm:$0xff]
          %v1118 = vld [vmem:[#allocation15 + $0x198] sm:$0xff]
          %v1119 = vld [vmem:[#allocation15 + $0x1a0] sm:$0xff]
          %v1120 = vld [vmem:[#allocation15 + $0x1a8] sm:$0xff]
          %v1121 = vld [vmem:[#allocation15 + $0x1b0] sm:$0xff]
          %v1122 = vld [vmem:[#allocation15 + $0x1b8] sm:$0xff]
          %v1123 = vld [vmem:[#allocation15 + $0x1c0] sm:$0xff]
          %v1124 = vld [vmem:[#allocation15 + $0x1c8] sm:$0xff]
          %v1125 = vld [vmem:[#allocation15 + $0x1d0] sm:$0xff]
          %v1126 = vld [vmem:[#allocation15 + $0x1d8] sm:$0xff]
          %v1127 = vld [vmem:[#allocation15 + $0x1e0] sm:$0xff]
          %v1128 = vld [vmem:[#allocation15 + $0x1e8] sm:$0xff]
          %v1129 = vld [vmem:[#allocation15 + $0x1f0] sm:$0xff]
          %v1130 = vld [vmem:[#allocation15 + $0x1f8] sm:$0xff]
          %v1131 = vld [vmem:[#allocation15 + $0x200] sm:$0xff]
          %v1132 = vld [vmem:[#allocation15 + $0x208] sm:$0xff]
          %v1133 = vld [vmem:[#allocation15 + $0x210] sm:$0xff]
          %v1134 = vld [vmem:[#allocation15 + $0x218] sm:$0xff]
          %v1135 = vld [vmem:[#allocation15 + $0x220] sm:$0xff]
          %v1136 = vld [vmem:[#allocation15 + $0x228] sm:$0xff]
          %v1137 = vld [vmem:[#allocation15 + $0x230] sm:$0xff]
          %v1138 = vld [vmem:[#allocation15 + $0x238] sm:$0xff]
          %v1139 = vld [vmem:[#allocation15 + $0x240] sm:$0xff]
          %v1140 = vld [vmem:[#allocation15 + $0x248] sm:$0xff]
          %v1141 = vld [vmem:[#allocation15 + $0x250] sm:$0xff]
          %v1142 = vld [vmem:[#allocation15 + $0x258] sm:$0xff]
          %v1143 = vld [vmem:[#allocation15 + $0x260] sm:$0xff]
          %v1144 = vld [vmem:[#allocation15 + $0x268] sm:$0xff]
          %v1145 = vld [vmem:[#allocation15 + $0x270] sm:$0xff]
          %v1146 = vld [vmem:[#allocation15 + $0x278] sm:$0xff]
          %v1147 = vld [vmem:[#allocation15 + $0x280] sm:$0xff]
          %v1148 = vld [vmem:[#allocation15 + $0x288] sm:$0xff]
          %v1149 = vld [vmem:[#allocation15 + $0x290] sm:$0xff]
          %v1150 = vld [vmem:[#allocation15 + $0x298] sm:$0xff]
          %v1151 = vld [vmem:[#allocation15 + $0x2a0] sm:$0xff]
          %v1152 = vld [vmem:[#allocation15 + $0x2a8] sm:$0xff]
          %v1153 = vld [vmem:[#allocation15 + $0x2b0] sm:$0xff]
          %v1154 = vld [vmem:[#allocation15 + $0x2b8] sm:$0xff]
          %v1155 = vld [vmem:[#allocation15 + $0x2c0] sm:$0xff]
          %v1156 = vld [vmem:[#allocation15 + $0x2c8] sm:$0xff]
          %v1157 = vld [vmem:[#allocation15 + $0x2d0] sm:$0xff]
          %v1158 = vld [vmem:[#allocation15 + $0x2d8] sm:$0xff]
          %v1159 = vld [vmem:[#allocation15 + $0x2e0] sm:$0xff]
          %v1160 = vld [vmem:[#allocation15 + $0x2e8] sm:$0xff]
          %v1161 = vld [vmem:[#allocation15 + $0x2f0] sm:$0xff]
          %v1162 = vld [vmem:[#allocation15 + $0x2f8] sm:$0xff]
          %v1163 = vld [vmem:[#allocation15 + $0x300] sm:$0xff]
          %v1164 = vld [vmem:[#allocation15 + $0x308] sm:$0xff]
          %v1165 = vld [vmem:[#allocation15 + $0x310] sm:$0xff]
          %v1166 = vld [vmem:[#allocation15 + $0x318] sm:$0xff]
          %v1167 = vld [vmem:[#allocation15 + $0x320] sm:$0xff]
          %v1168 = vld [vmem:[#allocation15 + $0x328] sm:$0xff]
          %v1169 = vld [vmem:[#allocation15 + $0x330] sm:$0xff]
          %v1170 = vld [vmem:[#allocation15 + $0x338] sm:$0xff]
          %v1171 = vld [vmem:[#allocation15 + $0x340] sm:$0xff]
          %v1172 = vld [vmem:[#allocation15 + $0x348] sm:$0xff]
          %v1173 = vld [vmem:[#allocation15 + $0x350] sm:$0xff]
          %v1174 = vld [vmem:[#allocation15 + $0x358] sm:$0xff]
          %v1175 = vld [vmem:[#allocation15 + $0x360] sm:$0xff]
          %v1176 = vld [vmem:[#allocation15 + $0x368] sm:$0xff]
          %v1177 = vld [vmem:[#allocation15 + $0x370] sm:$0xff]
          %v1178 = vld [vmem:[#allocation15 + $0x378] sm:$0xff]
          %v1179 = vld [vmem:[#allocation15 + $0x380] sm:$0xff]
          %v1180 = vld [vmem:[#allocation15 + $0x388] sm:$0xff]
          %v1181 = vld [vmem:[#allocation15 + $0x390] sm:$0xff]
          %v1182 = vld [vmem:[#allocation15 + $0x398] sm:$0xff]
          %v1183 = vld [vmem:[#allocation15 + $0x3a0] sm:$0xff]
          %v1184 = vld [vmem:[#allocation15 + $0x3a8] sm:$0xff]
          %v1185 = vld [vmem:[#allocation15 + $0x3b0] sm:$0xff]
          %v1186 = vld [vmem:[#allocation15 + $0x3b8] sm:$0xff]
          %v1187 = vld [vmem:[#allocation15 + $0x3c0] sm:$0xff]
          %v1188 = vld [vmem:[#allocation15 + $0x3c8] sm:$0xff]
          %v1189 = vld [vmem:[#allocation15 + $0x3d0] sm:$0xff]
          %v1190 = vld [vmem:[#allocation15 + $0x3d8] sm:$0xff]
          %v1191 = vld [vmem:[#allocation15 + $0x3e0] sm:$0xff]
          %v1192 = vld [vmem:[#allocation15 + $0x3e8] sm:$0xff]
          %v1193 = vld [vmem:[#allocation15 + $0x3f0] sm:$0xff]
          %v1194 = vld [vmem:[#allocation15 + $0x3f8] sm:$0xff]
          %v1195 = vld [vmem:[#allocation18] sm:$0xff]
          %v1196 = vld [vmem:[#allocation18 + $0x8] sm:$0xff]
          %v1199 = vlaneseq
          %v1200 = vshrl.u32 %v1199, 7
          %v1201 = vsub.s32 0, %v1200
          %v1202 = vrot.slane %v1195, %v1201
          %v1203 = vlaneseq
          %v1204 = vshrl.u32 %v1203, 7
          %v1205 = vsub.s32 1, %v1204
          %v1206 = vrot.slane %v1195, %v1205
          %v1207 = vlaneseq
          %v1208 = vshrl.u32 %v1207, 7
          %v1209 = vsub.s32 2, %v1208
          %v1210 = vrot.slane %v1195, %v1209
          %v1211 = vlaneseq
          %v1212 = vshrl.u32 %v1211, 7
          %v1213 = vsub.s32 3, %v1212
          %v1214 = vrot.slane %v1195, %v1213
          %v1215 = vlaneseq
          %v1216 = vshrl.u32 %v1215, 7
          %v1217 = vsub.s32 4, %v1216
          %v1218 = vrot.slane %v1195, %v1217
          %v1219 = vlaneseq
          %v1220 = vshrl.u32 %v1219, 7
          %v1221 = vsub.s32 5, %v1220
          %v1222 = vrot.slane %v1195, %v1221
          %v1223 = vlaneseq
          %v1224 = vshrl.u32 %v1223, 7
          %v1225 = vsub.s32 6, %v1224
          %v1226 = vrot.slane %v1195, %v1225
          %v1227 = vlaneseq
          %v1228 = vshrl.u32 %v1227, 7
          %v1229 = vsub.s32 7, %v1228
          %v1230 = vrot.slane %v1195, %v1229
          %v1231 = vlaneseq
          %v1232 = vshrl.u32 %v1231, 7
          %v1233 = vsub.s32 0, %v1232
          %v1234 = vrot.slane %v1196, %v1233
          %v1235 = vlaneseq
          %v1236 = vshrl.u32 %v1235, 7
          %v1237 = vsub.s32 1, %v1236
          %v1238 = vrot.slane %v1196, %v1237
          %v1239 = vlaneseq
          %v1240 = vshrl.u32 %v1239, 7
          %v1241 = vsub.s32 2, %v1240
          %v1242 = vrot.slane %v1196, %v1241
          %v1243 = vlaneseq
          %v1244 = vshrl.u32 %v1243, 7
          %v1245 = vsub.s32 3, %v1244
          %v1246 = vrot.slane %v1196, %v1245
          %v1247 = vlaneseq
          %v1248 = vshrl.u32 %v1247, 7
          %v1249 = vsub.s32 4, %v1248
          %v1250 = vrot.slane %v1196, %v1249
          %v1251 = vlaneseq
          %v1252 = vshrl.u32 %v1251, 7
          %v1253 = vsub.s32 5, %v1252
          %v1254 = vrot.slane %v1196, %v1253
          %v1255 = vlaneseq
          %v1256 = vshrl.u32 %v1255, 7
          %v1257 = vsub.s32 6, %v1256
          %v1258 = vrot.slane %v1196, %v1257
          %v1259 = vlaneseq
          %v1260 = vshrl.u32 %v1259, 7
          %v1261 = vsub.s32 7, %v1260
          %v1262 = vrot.slane %v1196, %v1261
          %v1407 = vunpack.c.l.b16 %v1067
          %v1408 = vunpack.c.h.b16 %v1067
          %v1409 = vunpack.c.l.b16 %v1068
          %v1410 = vunpack.c.h.b16 %v1068
          %v1411 = vunpack.c.l.b16 %v1069
          %v1412 = vunpack.c.h.b16 %v1069
          %v1413 = vunpack.c.l.b16 %v1070
          %v1414 = vunpack.c.h.b16 %v1070
          %v1415 = vunpack.c.l.b16 %v1071
          %v1416 = vunpack.c.h.b16 %v1071
          %v1417 = vunpack.c.l.b16 %v1072
          %v1418 = vunpack.c.h.b16 %v1072
          %v1419 = vunpack.c.l.b16 %v1073
          %v1420 = vunpack.c.h.b16 %v1073
          %v1421 = vunpack.c.l.b16 %v1074
          %v1422 = vunpack.c.h.b16 %v1074
          %v1423 = vunpack.c.l.b16 %v1075
          %v1424 = vunpack.c.h.b16 %v1075
          %v1425 = vunpack.c.l.b16 %v1076
          %v1426 = vunpack.c.h.b16 %v1076
          %v1427 = vunpack.c.l.b16 %v1077
          %v1428 = vunpack.c.h.b16 %v1077
          %v1429 = vunpack.c.l.b16 %v1078
          %v1430 = vunpack.c.h.b16 %v1078
          %v1431 = vunpack.c.l.b16 %v1079
          %v1432 = vunpack.c.h.b16 %v1079
          %v1433 = vunpack.c.l.b16 %v1080
          %v1434 = vunpack.c.h.b16 %v1080
          %v1435 = vunpack.c.l.b16 %v1081
          %v1436 = vunpack.c.h.b16 %v1081
          %v1437 = vunpack.c.l.b16 %v1082
          %v1438 = vunpack.c.h.b16 %v1082
          %v1439 = vunpack.c.l.b16 %v1083
          %v1440 = vunpack.c.h.b16 %v1083
          %v1441 = vunpack.c.l.b16 %v1084
          %v1442 = vunpack.c.h.b16 %v1084
          %v1443 = vunpack.c.l.b16 %v1085
          %v1444 = vunpack.c.h.b16 %v1085
          %v1445 = vunpack.c.l.b16 %v1086
          %v1446 = vunpack.c.h.b16 %v1086
          %v1447 = vunpack.c.l.b16 %v1087
          %v1448 = vunpack.c.h.b16 %v1087
          %v1449 = vunpack.c.l.b16 %v1088
          %v1450 = vunpack.c.h.b16 %v1088
          %v1451 = vunpack.c.l.b16 %v1089
          %v1452 = vunpack.c.h.b16 %v1089
          %v1453 = vunpack.c.l.b16 %v1090
          %v1454 = vunpack.c.h.b16 %v1090
          %v1455 = vunpack.c.l.b16 %v1091
          %v1456 = vunpack.c.h.b16 %v1091
          %v1457 = vunpack.c.l.b16 %v1092
          %v1458 = vunpack.c.h.b16 %v1092
          %v1459 = vunpack.c.l.b16 %v1093
          %v1460 = vunpack.c.h.b16 %v1093
          %v1461 = vunpack.c.l.b16 %v1094
          %v1462 = vunpack.c.h.b16 %v1094
          %v1463 = vunpack.c.l.b16 %v1095
          %v1464 = vunpack.c.h.b16 %v1095
          %v1465 = vunpack.c.l.b16 %v1096
          %v1466 = vunpack.c.h.b16 %v1096
          %v1467 = vunpack.c.l.b16 %v1097
          %v1468 = vunpack.c.h.b16 %v1097
          %v1469 = vunpack.c.l.b16 %v1098
          %v1470 = vunpack.c.h.b16 %v1098
          %v1471 = vunpack.c.l.b16 %v1099
          %v1472 = vunpack.c.h.b16 %v1099
          %v1473 = vunpack.c.l.b16 %v1100
          %v1474 = vunpack.c.h.b16 %v1100
          %v1475 = vunpack.c.l.b16 %v1101
          %v1476 = vunpack.c.h.b16 %v1101
          %v1477 = vunpack.c.l.b16 %v1102
          %v1478 = vunpack.c.h.b16 %v1102
          %v1479 = vunpack.c.l.b16 %v1103
          %v1480 = vunpack.c.h.b16 %v1103
          %v1481 = vunpack.c.l.b16 %v1104
          %v1482 = vunpack.c.h.b16 %v1104
          %v1483 = vunpack.c.l.b16 %v1105
          %v1484 = vunpack.c.h.b16 %v1105
          %v1485 = vunpack.c.l.b16 %v1106
          %v1486 = vunpack.c.h.b16 %v1106
          %v1487 = vunpack.c.l.b16 %v1107
          %v1488 = vunpack.c.h.b16 %v1107
          %v1489 = vunpack.c.l.b16 %v1108
          %v1490 = vunpack.c.h.b16 %v1108
          %v1491 = vunpack.c.l.b16 %v1109
          %v1492 = vunpack.c.h.b16 %v1109
          %v1493 = vunpack.c.l.b16 %v1110
          %v1494 = vunpack.c.h.b16 %v1110
          %v1495 = vunpack.c.l.b16 %v1111
          %v1496 = vunpack.c.h.b16 %v1111
          %v1497 = vunpack.c.l.b16 %v1112
          %v1498 = vunpack.c.h.b16 %v1112
          %v1499 = vunpack.c.l.b16 %v1113
          %v1500 = vunpack.c.h.b16 %v1113
          %v1501 = vunpack.c.l.b16 %v1114
          %v1502 = vunpack.c.h.b16 %v1114
          %v1503 = vunpack.c.l.b16 %v1115
          %v1504 = vunpack.c.h.b16 %v1115
          %v1505 = vunpack.c.l.b16 %v1116
          %v1506 = vunpack.c.h.b16 %v1116
          %v1507 = vunpack.c.l.b16 %v1117
          %v1508 = vunpack.c.h.b16 %v1117
          %v1509 = vunpack.c.l.b16 %v1118
          %v1510 = vunpack.c.h.b16 %v1118
          %v1511 = vunpack.c.l.b16 %v1119
          %v1512 = vunpack.c.h.b16 %v1119
          %v1513 = vunpack.c.l.b16 %v1120
          %v1514 = vunpack.c.h.b16 %v1120
          %v1515 = vunpack.c.l.b16 %v1121
          %v1516 = vunpack.c.h.b16 %v1121
          %v1517 = vunpack.c.l.b16 %v1122
          %v1518 = vunpack.c.h.b16 %v1122
          %v1519 = vunpack.c.l.b16 %v1123
          %v1520 = vunpack.c.h.b16 %v1123
          %v1521 = vunpack.c.l.b16 %v1124
          %v1522 = vunpack.c.h.b16 %v1124
          %v1523 = vunpack.c.l.b16 %v1125
          %v1524 = vunpack.c.h.b16 %v1125
          %v1525 = vunpack.c.l.b16 %v1126
          %v1526 = vunpack.c.h.b16 %v1126
          %v1527 = vunpack.c.l.b16 %v1127
          %v1528 = vunpack.c.h.b16 %v1127
          %v1529 = vunpack.c.l.b16 %v1128
          %v1530 = vunpack.c.h.b16 %v1128
          %v1531 = vunpack.c.l.b16 %v1129
          %v1532 = vunpack.c.h.b16 %v1129
          %v1533 = vunpack.c.l.b16 %v1130
          %v1534 = vunpack.c.h.b16 %v1130
          %v1535 = vunpack.c.l.b16 %v1131
          %v1536 = vunpack.c.h.b16 %v1131
          %v1537 = vunpack.c.l.b16 %v1132
          %v1538 = vunpack.c.h.b16 %v1132
          %v1539 = vunpack.c.l.b16 %v1133
          %v1540 = vunpack.c.h.b16 %v1133
          %v1541 = vunpack.c.l.b16 %v1134
          %v1542 = vunpack.c.h.b16 %v1134
          %v1543 = vunpack.c.l.b16 %v1135
          %v1544 = vunpack.c.h.b16 %v1135
          %v1545 = vunpack.c.l.b16 %v1136
          %v1546 = vunpack.c.h.b16 %v1136
          %v1547 = vunpack.c.l.b16 %v1137
          %v1548 = vunpack.c.h.b16 %v1137
          %v1549 = vunpack.c.l.b16 %v1138
          %v1550 = vunpack.c.h.b16 %v1138
          %v1551 = vunpack.c.l.b16 %v1139
          %v1552 = vunpack.c.h.b16 %v1139
          %v1553 = vunpack.c.l.b16 %v1140
          %v1554 = vunpack.c.h.b16 %v1140
          %v1555 = vunpack.c.l.b16 %v1141
          %v1556 = vunpack.c.h.b16 %v1141
          %v1557 = vunpack.c.l.b16 %v1142
          %v1558 = vunpack.c.h.b16 %v1142
          %v1559 = vunpack.c.l.b16 %v1143
          %v1560 = vunpack.c.h.b16 %v1143
          %v1561 = vunpack.c.l.b16 %v1144
          %v1562 = vunpack.c.h.b16 %v1144
          %v1563 = vunpack.c.l.b16 %v1145
          %v1564 = vunpack.c.h.b16 %v1145
          %v1565 = vunpack.c.l.b16 %v1146
          %v1566 = vunpack.c.h.b16 %v1146
          %v1567 = vunpack.c.l.b16 %v1147
          %v1568 = vunpack.c.h.b16 %v1147
          %v1569 = vunpack.c.l.b16 %v1148
          %v1570 = vunpack.c.h.b16 %v1148
          %v1571 = vunpack.c.l.b16 %v1149
          %v1572 = vunpack.c.h.b16 %v1149
          %v1573 = vunpack.c.l.b16 %v1150
          %v1574 = vunpack.c.h.b16 %v1150
          %v1575 = vunpack.c.l.b16 %v1151
          %v1576 = vunpack.c.h.b16 %v1151
          %v1577 = vunpack.c.l.b16 %v1152
          %v1578 = vunpack.c.h.b16 %v1152
          %v1579 = vunpack.c.l.b16 %v1153
          %v1580 = vunpack.c.h.b16 %v1153
          %v1581 = vunpack.c.l.b16 %v1154
          %v1582 = vunpack.c.h.b16 %v1154
          %v1583 = vunpack.c.l.b16 %v1155
          %v1584 = vunpack.c.h.b16 %v1155
          %v1585 = vunpack.c.l.b16 %v1156
          %v1586 = vunpack.c.h.b16 %v1156
          %v1587 = vunpack.c.l.b16 %v1157
          %v1588 = vunpack.c.h.b16 %v1157
          %v1589 = vunpack.c.l.b16 %v1158
          %v1590 = vunpack.c.h.b16 %v1158
          %v1591 = vunpack.c.l.b16 %v1159
          %v1592 = vunpack.c.h.b16 %v1159
          %v1593 = vunpack.c.l.b16 %v1160
          %v1594 = vunpack.c.h.b16 %v1160
          %v1595 = vunpack.c.l.b16 %v1161
          %v1596 = vunpack.c.h.b16 %v1161
          %v1597 = vunpack.c.l.b16 %v1162
          %v1598 = vunpack.c.h.b16 %v1162
          %v1599 = vunpack.c.l.b16 %v1163
          %v1600 = vunpack.c.h.b16 %v1163
          %v1601 = vunpack.c.l.b16 %v1164
          %v1602 = vunpack.c.h.b16 %v1164
          %v1603 = vunpack.c.l.b16 %v1165
          %v1604 = vunpack.c.h.b16 %v1165
          %v1605 = vunpack.c.l.b16 %v1166
          %v1606 = vunpack.c.h.b16 %v1166
          %v1607 = vunpack.c.l.b16 %v1167
          %v1608 = vunpack.c.h.b16 %v1167
          %v1609 = vunpack.c.l.b16 %v1168
          %v1610 = vunpack.c.h.b16 %v1168
          %v1611 = vunpack.c.l.b16 %v1169
          %v1612 = vunpack.c.h.b16 %v1169
          %v1613 = vunpack.c.l.b16 %v1170
          %v1614 = vunpack.c.h.b16 %v1170
          %v1615 = vunpack.c.l.b16 %v1171
          %v1616 = vunpack.c.h.b16 %v1171
          %v1617 = vunpack.c.l.b16 %v1172
          %v1618 = vunpack.c.h.b16 %v1172
          %v1619 = vunpack.c.l.b16 %v1173
          %v1620 = vunpack.c.h.b16 %v1173
          %v1621 = vunpack.c.l.b16 %v1174
          %v1622 = vunpack.c.h.b16 %v1174
          %v1623 = vunpack.c.l.b16 %v1175
          %v1624 = vunpack.c.h.b16 %v1175
          %v1625 = vunpack.c.l.b16 %v1176
          %v1626 = vunpack.c.h.b16 %v1176
          %v1627 = vunpack.c.l.b16 %v1177
          %v1628 = vunpack.c.h.b16 %v1177
          %v1629 = vunpack.c.l.b16 %v1178
          %v1630 = vunpack.c.h.b16 %v1178
          %v1631 = vunpack.c.l.b16 %v1179
          %v1632 = vunpack.c.h.b16 %v1179
          %v1633 = vunpack.c.l.b16 %v1180
          %v1634 = vunpack.c.h.b16 %v1180
          %v1635 = vunpack.c.l.b16 %v1181
          %v1636 = vunpack.c.h.b16 %v1181
          %v1637 = vunpack.c.l.b16 %v1182
          %v1638 = vunpack.c.h.b16 %v1182
          %v1639 = vunpack.c.l.b16 %v1183
          %v1640 = vunpack.c.h.b16 %v1183
          %v1641 = vunpack.c.l.b16 %v1184
          %v1642 = vunpack.c.h.b16 %v1184
          %v1643 = vunpack.c.l.b16 %v1185
          %v1644 = vunpack.c.h.b16 %v1185
          %v1645 = vunpack.c.l.b16 %v1186
          %v1646 = vunpack.c.h.b16 %v1186
          %v1647 = vunpack.c.l.b16 %v1187
          %v1648 = vunpack.c.h.b16 %v1187
          %v1649 = vunpack.c.l.b16 %v1188
          %v1650 = vunpack.c.h.b16 %v1188
          %v1651 = vunpack.c.l.b16 %v1189
          %v1652 = vunpack.c.h.b16 %v1189
          %v1653 = vunpack.c.l.b16 %v1190
          %v1654 = vunpack.c.h.b16 %v1190
          %v1655 = vunpack.c.l.b16 %v1191
          %v1656 = vunpack.c.h.b16 %v1191
          %v1657 = vunpack.c.l.b16 %v1192
          %v1658 = vunpack.c.h.b16 %v1192
          %v1659 = vunpack.c.l.b16 %v1193
          %v1660 = vunpack.c.h.b16 %v1193
          %v1661 = vunpack.c.l.b16 %v1194
          %v1662 = vunpack.c.h.b16 %v1194
          %v1663 = vpack.c.b16 %v1423, %v1407
          %v1664 = vpack.c.b16 %v1424, %v1408
          %v1665 = vpack.c.b16 %v1425, %v1409
          %v1666 = vpack.c.b16 %v1426, %v1410
          %v1667 = vpack.c.b16 %v1427, %v1411
          %v1668 = vpack.c.b16 %v1428, %v1412
          %v1669 = vpack.c.b16 %v1429, %v1413
          %v1670 = vpack.c.b16 %v1430, %v1414
          %v1671 = vpack.c.b16 %v1431, %v1415
          %v1672 = vpack.c.b16 %v1432, %v1416
          %v1673 = vpack.c.b16 %v1433, %v1417
          %v1674 = vpack.c.b16 %v1434, %v1418
          %v1675 = vpack.c.b16 %v1435, %v1419
          %v1676 = vpack.c.b16 %v1436, %v1420
          %v1677 = vpack.c.b16 %v1437, %v1421
          %v1678 = vpack.c.b16 %v1438, %v1422
          %v1679 = vpack.c.b16 %v1455, %v1439
          %v1680 = vpack.c.b16 %v1456, %v1440
          %v1681 = vpack.c.b16 %v1457, %v1441
          %v1682 = vpack.c.b16 %v1458, %v1442
          %v1683 = vpack.c.b16 %v1459, %v1443
          %v1684 = vpack.c.b16 %v1460, %v1444
          %v1685 = vpack.c.b16 %v1461, %v1445
          %v1686 = vpack.c.b16 %v1462, %v1446
          %v1687 = vpack.c.b16 %v1463, %v1447
          %v1688 = vpack.c.b16 %v1464, %v1448
          %v1689 = vpack.c.b16 %v1465, %v1449
          %v1690 = vpack.c.b16 %v1466, %v1450
          %v1691 = vpack.c.b16 %v1467, %v1451
          %v1692 = vpack.c.b16 %v1468, %v1452
          %v1693 = vpack.c.b16 %v1469, %v1453
          %v1694 = vpack.c.b16 %v1470, %v1454
          %v1695 = vpack.c.b16 %v1487, %v1471
          %v1696 = vpack.c.b16 %v1488, %v1472
          %v1697 = vpack.c.b16 %v1489, %v1473
          %v1698 = vpack.c.b16 %v1490, %v1474
          %v1699 = vpack.c.b16 %v1491, %v1475
          %v1700 = vpack.c.b16 %v1492, %v1476
          %v1701 = vpack.c.b16 %v1493, %v1477
          %v1702 = vpack.c.b16 %v1494, %v1478
          %v1703 = vpack.c.b16 %v1495, %v1479
          %v1704 = vpack.c.b16 %v1496, %v1480
          %v1705 = vpack.c.b16 %v1497, %v1481
          %v1706 = vpack.c.b16 %v1498, %v1482
          %v1707 = vpack.c.b16 %v1499, %v1483
          %v1708 = vpack.c.b16 %v1500, %v1484
          %v1709 = vpack.c.b16 %v1501, %v1485
          %v1710 = vpack.c.b16 %v1502, %v1486
          %v1711 = vpack.c.b16 %v1519, %v1503
          %v1712 = vpack.c.b16 %v1520, %v1504
          %v1713 = vpack.c.b16 %v1521, %v1505
          %v1714 = vpack.c.b16 %v1522, %v1506
          %v1715 = vpack.c.b16 %v1523, %v1507
          %v1716 = vpack.c.b16 %v1524, %v1508
          %v1717 = vpack.c.b16 %v1525, %v1509
          %v1718 = vpack.c.b16 %v1526, %v1510
          %v1719 = vpack.c.b16 %v1527, %v1511
          %v1720 = vpack.c.b16 %v1528, %v1512
          %v1721 = vpack.c.b16 %v1529, %v1513
          %v1722 = vpack.c.b16 %v1530, %v1514
          %v1723 = vpack.c.b16 %v1531, %v1515
          %v1724 = vpack.c.b16 %v1532, %v1516
          %v1725 = vpack.c.b16 %v1533, %v1517
          %v1726 = vpack.c.b16 %v1534, %v1518
          %v1727 = vpack.c.b16 %v1551, %v1535
          %v1728 = vpack.c.b16 %v1552, %v1536
          %v1729 = vpack.c.b16 %v1553, %v1537
          %v1730 = vpack.c.b16 %v1554, %v1538
          %v1731 = vpack.c.b16 %v1555, %v1539
          %v1732 = vpack.c.b16 %v1556, %v1540
          %v1733 = vpack.c.b16 %v1557, %v1541
          %v1734 = vpack.c.b16 %v1558, %v1542
          %v1735 = vpack.c.b16 %v1559, %v1543
          %v1736 = vpack.c.b16 %v1560, %v1544
          %v1737 = vpack.c.b16 %v1561, %v1545
          %v1738 = vpack.c.b16 %v1562, %v1546
          %v1739 = vpack.c.b16 %v1563, %v1547
          %v1740 = vpack.c.b16 %v1564, %v1548
          %v1741 = vpack.c.b16 %v1565, %v1549
          %v1742 = vpack.c.b16 %v1566, %v1550
          %v1743 = vpack.c.b16 %v1583, %v1567
          %v1744 = vpack.c.b16 %v1584, %v1568
          %v1745 = vpack.c.b16 %v1585, %v1569
          %v1746 = vpack.c.b16 %v1586, %v1570
          %v1747 = vpack.c.b16 %v1587, %v1571
          %v1748 = vpack.c.b16 %v1588, %v1572
          %v1749 = vpack.c.b16 %v1589, %v1573
          %v1750 = vpack.c.b16 %v1590, %v1574
          %v1751 = vpack.c.b16 %v1591, %v1575
          %v1752 = vpack.c.b16 %v1592, %v1576
          %v1753 = vpack.c.b16 %v1593, %v1577
          %v1754 = vpack.c.b16 %v1594, %v1578
          %v1755 = vpack.c.b16 %v1595, %v1579
          %v1756 = vpack.c.b16 %v1596, %v1580
          %v1757 = vpack.c.b16 %v1597, %v1581
          %v1758 = vpack.c.b16 %v1598, %v1582
          %v1759 = vpack.c.b16 %v1615, %v1599
          %v1760 = vpack.c.b16 %v1616, %v1600
          %v1761 = vpack.c.b16 %v1617, %v1601
          %v1762 = vpack.c.b16 %v1618, %v1602
          %v1763 = vpack.c.b16 %v1619, %v1603
          %v1764 = vpack.c.b16 %v1620, %v1604
          %v1765 = vpack.c.b16 %v1621, %v1605
          %v1766 = vpack.c.b16 %v1622, %v1606
          %v1767 = vpack.c.b16 %v1623, %v1607
          %v1768 = vpack.c.b16 %v1624, %v1608
          %v1769 = vpack.c.b16 %v1625, %v1609
          %v1770 = vpack.c.b16 %v1626, %v1610
          %v1771 = vpack.c.b16 %v1627, %v1611
          %v1772 = vpack.c.b16 %v1628, %v1612
          %v1773 = vpack.c.b16 %v1629, %v1613
          %v1774 = vpack.c.b16 %v1630, %v1614
          %v1775 = vpack.c.b16 %v1647, %v1631
          %v1776 = vpack.c.b16 %v1648, %v1632
          %v1777 = vpack.c.b16 %v1649, %v1633
          %v1778 = vpack.c.b16 %v1650, %v1634
          %v1779 = vpack.c.b16 %v1651, %v1635
          %v1780 = vpack.c.b16 %v1652, %v1636
          %v1781 = vpack.c.b16 %v1653, %v1637
          %v1782 = vpack.c.b16 %v1654, %v1638
          %v1783 = vpack.c.b16 %v1655, %v1639
          %v1784 = vpack.c.b16 %v1656, %v1640
          %v1785 = vpack.c.b16 %v1657, %v1641
          %v1786 = vpack.c.b16 %v1658, %v1642
          %v1787 = vpack.c.b16 %v1659, %v1643
          %v1788 = vpack.c.b16 %v1660, %v1644
          %v1789 = vpack.c.b16 %v1661, %v1645
          %v1790 = vpack.c.b16 %v1662, %v1646
          %1919 = vmatprep.subr.bf16.mxu0 %v1664
          %1920 = vmatpush1.bf16.msra.mxu0 %v1663
          %1921 = vmatprep.subr.bf16.mxu0 %v1680
          %1922 = vmatpush1.bf16.msra.mxu0 %v1679
          %1923 = vmatprep.subr.bf16.mxu0 %v1696
          %1924 = vmatpush1.bf16.msra.mxu0 %v1695
          %1925 = vmatprep.subr.bf16.mxu0 %v1712
          %1926 = vmatpush1.bf16.msra.mxu0 %v1711
          %1927 = vmatprep.subr.bf16.mxu0 %v1728
          %1928 = vmatpush1.bf16.msra.mxu0 %v1727
          %1929 = vmatprep.subr.bf16.mxu0 %v1744
          %1930 = vmatpush1.bf16.msra.mxu0 %v1743
          %1931 = vmatprep.subr.bf16.mxu0 %v1760
          %1932 = vmatpush1.bf16.msra.mxu0 %v1759
          %1933 = vmatprep.subr.bf16.mxu0 %v1776
          %1934 = vmatpush1.bf16.msra.mxu0 %v1775
          %1935 = vmatprep.subr.bf16.mxu0 0
          %1936 = vmatpush1.bf16.msra.mxu0 0
          %1937 = vmatprep.subr.bf16.mxu0 0
          %1938 = vmatpush1.bf16.msra.mxu0 0
          %1939 = vmatprep.subr.bf16.mxu0 0
          %1940 = vmatpush1.bf16.msra.mxu0 0
          %1941 = vmatprep.subr.bf16.mxu0 0
          %1942 = vmatpush1.bf16.msra.mxu0 0
          %1943 = vmatprep.subr.bf16.mxu0 0
          %1944 = vmatpush1.bf16.msra.mxu0 0
          %1945 = vmatprep.subr.bf16.mxu0 0
          %1946 = vmatpush1.bf16.msra.mxu0 0
          %1947 = vmatprep.subr.bf16.mxu0 0
          %1948 = vmatpush1.bf16.msra.mxu0 0
          %1949 = vmatprep.subr.bf16.mxu0 0
          %1950 = vmatpush1.bf16.msra.mxu0 0
          %1951 = vmatprep.mubr.bf16.mxu0 0
          %1952 = vmatmul.mubr.bf16.gmra.mrb[0].mxu0 %v1066
          %v1953 = vpop.f32.mrb[0].mxu0
          %v1954 = vadd.f32 %v1202, %v1953
          %v1955 = vpop.f32.mrb[0].mxu0
          %v1956 = vadd.f32 %v1206, %v1955
          %v1957 = vpop.f32.mrb[0].mxu0
          %v1958 = vadd.f32 %v1202, %v1957
          %v1959 = vpop.f32.mrb[0].mxu0
          %v1960 = vadd.f32 %v1206, %v1959
          %1961 = vdwg.mxu0
          %1962 = vmatprep.subr.bf16.mxu0 %v1666
          %1963 = vmatpush1.bf16.msra.mxu0 %v1665
          %1964 = vmatprep.subr.bf16.mxu0 %v1682
          %1965 = vmatpush1.bf16.msra.mxu0 %v1681
          %1966 = vmatprep.subr.bf16.mxu0 %v1698
          %1967 = vmatpush1.bf16.msra.mxu0 %v1697
          %1968 = vmatprep.subr.bf16.mxu0 %v1714
          %1969 = vmatpush1.bf16.msra.mxu0 %v1713
          %1970 = vmatprep.subr.bf16.mxu0 %v1730
          %1971 = vmatpush1.bf16.msra.mxu0 %v1729
          %1972 = vmatprep.subr.bf16.mxu0 %v1746
          %1973 = vmatpush1.bf16.msra.mxu0 %v1745
          %1974 = vmatprep.subr.bf16.mxu0 %v1762
          %1975 = vmatpush1.bf16.msra.mxu0 %v1761
          %1976 = vmatprep.subr.bf16.mxu0 %v1778
          %1977 = vmatpush1.bf16.msra.mxu0 %v1777
          %1978 = vmatprep.subr.bf16.mxu0 0
          %1979 = vmatpush1.bf16.msra.mxu0 0
          %1980 = vmatprep.subr.bf16.mxu0 0
          %1981 = vmatpush1.bf16.msra.mxu0 0
          %1982 = vmatprep.subr.bf16.mxu0 0
          %1983 = vmatpush1.bf16.msra.mxu0 0
          %1984 = vmatprep.subr.bf16.mxu0 0
          %1985 = vmatpush1.bf16.msra.mxu0 0
          %1986 = vmatprep.subr.bf16.mxu0 0
          %1987 = vmatpush1.bf16.msra.mxu0 0
          %1988 = vmatprep.subr.bf16.mxu0 0
          %1989 = vmatpush1.bf16.msra.mxu0 0
          %1990 = vmatprep.subr.bf16.mxu0 0
          %1991 = vmatpush1.bf16.msra.mxu0 0
          %1992 = vmatprep.subr.bf16.mxu0 0
          %1993 = vmatpush1.bf16.msra.mxu0 0
          %1994 = vmatprep.mubr.bf16.mxu0 0
          %1995 = vmatmul.mubr.bf16.gmra.mrb[0].mxu0 %v1066
          %v1996 = vpop.f32.mrb[0].mxu0
          %v1997 = vadd.f32 %v1210, %v1996
          %v1998 = vpop.f32.mrb[0].mxu0
          %v1999 = vadd.f32 %v1214, %v1998
          %v2000 = vpop.f32.mrb[0].mxu0
          %v2001 = vadd.f32 %v1210, %v2000
          %v2002 = vpop.f32.mrb[0].mxu0
          %v2003 = vadd.f32 %v1214, %v2002
          %2004 = vdwg.mxu0
          %2005 = vmatprep.subr.bf16.mxu0 %v1668
          %2006 = vmatpush1.bf16.msra.mxu0 %v1667
          %2007 = vmatprep.subr.bf16.mxu0 %v1684
          %2008 = vmatpush1.bf16.msra.mxu0 %v1683
          %2009 = vmatprep.subr.bf16.mxu0 %v1700
          %2010 = vmatpush1.bf16.msra.mxu0 %v1699
          %2011 = vmatprep.subr.bf16.mxu0 %v1716
          %2012 = vmatpush1.bf16.msra.mxu0 %v1715
          %2013 = vmatprep.subr.bf16.mxu0 %v1732
          %2014 = vmatpush1.bf16.msra.mxu0 %v1731
          %2015 = vmatprep.subr.bf16.mxu0 %v1748
          %2016 = vmatpush1.bf16.msra.mxu0 %v1747
          %2017 = vmatprep.subr.bf16.mxu0 %v1764
          %2018 = vmatpush1.bf16.msra.mxu0 %v1763
          %2019 = vmatprep.subr.bf16.mxu0 %v1780
          %2020 = vmatpush1.bf16.msra.mxu0 %v1779
          %2021 = vmatprep.subr.bf16.mxu0 0
          %2022 = vmatpush1.bf16.msra.mxu0 0
          %2023 = vmatprep.subr.bf16.mxu0 0
          %2024 = vmatpush1.bf16.msra.mxu0 0
          %2025 = vmatprep.subr.bf16.mxu0 0
          %2026 = vmatpush1.bf16.msra.mxu0 0
          %2027 = vmatprep.subr.bf16.mxu0 0
          %2028 = vmatpush1.bf16.msra.mxu0 0
          %2029 = vmatprep.subr.bf16.mxu0 0
          %2030 = vmatpush1.bf16.msra.mxu0 0
          %2031 = vmatprep.subr.bf16.mxu0 0
          %2032 = vmatpush1.bf16.msra.mxu0 0
          %2033 = vmatprep.subr.bf16.mxu0 0
          %2034 = vmatpush1.bf16.msra.mxu0 0
          %2035 = vmatprep.subr.bf16.mxu0 0
          %2036 = vmatpush1.bf16.msra.mxu0 0
          %2037 = vmatprep.mubr.bf16.mxu0 0
          %2038 = vmatmul.mubr.bf16.gmra.mrb[0].mxu0 %v1066
          %v2039 = vpop.f32.mrb[0].mxu0
          %v2040 = vadd.f32 %v1218, %v2039
          %v2041 = vpop.f32.mrb[0].mxu0
          %v2042 = vadd.f32 %v1222, %v2041
          %v2043 = vpop.f32.mrb[0].mxu0
          %v2044 = vadd.f32 %v1218, %v2043
          %v2045 = vpop.f32.mrb[0].mxu0
          %v2046 = vadd.f32 %v1222, %v2045
          %2047 = vdwg.mxu0
          %2048 = vmatprep.subr.bf16.mxu0 %v1670
          %2049 = vmatpush1.bf16.msra.mxu0 %v1669
          %2050 = vmatprep.subr.bf16.mxu0 %v1686
          %2051 = vmatpush1.bf16.msra.mxu0 %v1685
          %2052 = vmatprep.subr.bf16.mxu0 %v1702
          %2053 = vmatpush1.bf16.msra.mxu0 %v1701
          %2054 = vmatprep.subr.bf16.mxu0 %v1718
          %2055 = vmatpush1.bf16.msra.mxu0 %v1717
          %2056 = vmatprep.subr.bf16.mxu0 %v1734
          %2057 = vmatpush1.bf16.msra.mxu0 %v1733
          %2058 = vmatprep.subr.bf16.mxu0 %v1750
          %2059 = vmatpush1.bf16.msra.mxu0 %v1749
          %2060 = vmatprep.subr.bf16.mxu0 %v1766
          %2061 = vmatpush1.bf16.msra.mxu0 %v1765
          %2062 = vmatprep.subr.bf16.mxu0 %v1782
          %2063 = vmatpush1.bf16.msra.mxu0 %v1781
          %2064 = vmatprep.subr.bf16.mxu0 0
          %2065 = vmatpush1.bf16.msra.mxu0 0
          %2066 = vmatprep.subr.bf16.mxu0 0
          %2067 = vmatpush1.bf16.msra.mxu0 0
          %2068 = vmatprep.subr.bf16.mxu0 0
          %2069 = vmatpush1.bf16.msra.mxu0 0
          %2070 = vmatprep.subr.bf16.mxu0 0
          %2071 = vmatpush1.bf16.msra.mxu0 0
          %2072 = vmatprep.subr.bf16.mxu0 0
          %2073 = vmatpush1.bf16.msra.mxu0 0
          %2074 = vmatprep.subr.bf16.mxu0 0
          %2075 = vmatpush1.bf16.msra.mxu0 0
          %2076 = vmatprep.subr.bf16.mxu0 0
          %2077 = vmatpush1.bf16.msra.mxu0 0
          %2078 = vmatprep.subr.bf16.mxu0 0
          %2079 = vmatpush1.bf16.msra.mxu0 0
          %2080 = vmatprep.mubr.bf16.mxu0 0
          %2081 = vmatmul.mubr.bf16.gmra.mrb[0].mxu0 %v1066
          %v2082 = vpop.f32.mrb[0].mxu0
          %v2083 = vadd.f32 %v1226, %v2082
          %v2084 = vpop.f32.mrb[0].mxu0
          %v2085 = vadd.f32 %v1230, %v2084
          %v2086 = vpop.f32.mrb[0].mxu0
          %v2087 = vadd.f32 %v1226, %v2086
          %v2088 = vpop.f32.mrb[0].mxu0
          %v2089 = vadd.f32 %v1230, %v2088
          %2090 = vdwg.mxu0
          %2091 = vmatprep.subr.bf16.mxu0 %v1672
          %2092 = vmatpush1.bf16.msra.mxu0 %v1671
          %2093 = vmatprep.subr.bf16.mxu0 %v1688
          %2094 = vmatpush1.bf16.msra.mxu0 %v1687
          %2095 = vmatprep.subr.bf16.mxu0 %v1704
          %2096 = vmatpush1.bf16.msra.mxu0 %v1703
          %2097 = vmatprep.subr.bf16.mxu0 %v1720
          %2098 = vmatpush1.bf16.msra.mxu0 %v1719
          %2099 = vmatprep.subr.bf16.mxu0 %v1736
          %2100 = vmatpush1.bf16.msra.mxu0 %v1735
          %2101 = vmatprep.subr.bf16.mxu0 %v1752
          %2102 = vmatpush1.bf16.msra.mxu0 %v1751
          %2103 = vmatprep.subr.bf16.mxu0 %v1768
          %2104 = vmatpush1.bf16.msra.mxu0 %v1767
          %2105 = vmatprep.subr.bf16.mxu0 %v1784
          %2106 = vmatpush1.bf16.msra.mxu0 %v1783
          %2107 = vmatprep.subr.bf16.mxu0 0
          %2108 = vmatpush1.bf16.msra.mxu0 0
          %2109 = vmatprep.subr.bf16.mxu0 0
          %2110 = vmatpush1.bf16.msra.mxu0 0
          %2111 = vmatprep.subr.bf16.mxu0 0
          %2112 = vmatpush1.bf16.msra.mxu0 0
          %2113 = vmatprep.subr.bf16.mxu0 0
          %2114 = vmatpush1.bf16.msra.mxu0 0
          %2115 = vmatprep.subr.bf16.mxu0 0
          %2116 = vmatpush1.bf16.msra.mxu0 0
          %2117 = vmatprep.subr.bf16.mxu0 0
          %2118 = vmatpush1.bf16.msra.mxu0 0
          %2119 = vmatprep.subr.bf16.mxu0 0
          %2120 = vmatpush1.bf16.msra.mxu0 0
          %2121 = vmatprep.subr.bf16.mxu0 0
          %2122 = vmatpush1.bf16.msra.mxu0 0
          %2123 = vmatprep.mubr.bf16.mxu0 0
          %2124 = vmatmul.mubr.bf16.gmra.mrb[0].mxu0 %v1066
          %v2125 = vpop.f32.mrb[0].mxu0
          %v2126 = vadd.f32 %v1234, %v2125
          %v2127 = vpop.f32.mrb[0].mxu0
          %v2128 = vadd.f32 %v1238, %v2127
          %v2129 = vpop.f32.mrb[0].mxu0
          %v2130 = vadd.f32 %v1234, %v2129
          %v2131 = vpop.f32.mrb[0].mxu0
          %v2132 = vadd.f32 %v1238, %v2131
          %2133 = vdwg.mxu0
          %2134 = vmatprep.subr.bf16.mxu0 %v1674
          %2135 = vmatpush1.bf16.msra.mxu0 %v1673
          %2136 = vmatprep.subr.bf16.mxu0 %v1690
          %2137 = vmatpush1.bf16.msra.mxu0 %v1689
          %2138 = vmatprep.subr.bf16.mxu0 %v1706
          %2139 = vmatpush1.bf16.msra.mxu0 %v1705
          %2140 = vmatprep.subr.bf16.mxu0 %v1722
          %2141 = vmatpush1.bf16.msra.mxu0 %v1721
          %2142 = vmatprep.subr.bf16.mxu0 %v1738
          %2143 = vmatpush1.bf16.msra.mxu0 %v1737
          %2144 = vmatprep.subr.bf16.mxu0 %v1754
          %2145 = vmatpush1.bf16.msra.mxu0 %v1753
          %2146 = vmatprep.subr.bf16.mxu0 %v1770
          %2147 = vmatpush1.bf16.msra.mxu0 %v1769
          %2148 = vmatprep.subr.bf16.mxu0 %v1786
          %2149 = vmatpush1.bf16.msra.mxu0 %v1785
          %2150 = vmatprep.subr.bf16.mxu0 0
          %2151 = vmatpush1.bf16.msra.mxu0 0
          %2152 = vmatprep.subr.bf16.mxu0 0
          %2153 = vmatpush1.bf16.msra.mxu0 0
          %2154 = vmatprep.subr.bf16.mxu0 0
          %2155 = vmatpush1.bf16.msra.mxu0 0
          %2156 = vmatprep.subr.bf16.mxu0 0
          %2157 = vmatpush1.bf16.msra.mxu0 0
          %2158 = vmatprep.subr.bf16.mxu0 0
          %2159 = vmatpush1.bf16.msra.mxu0 0
          %2160 = vmatprep.subr.bf16.mxu0 0
          %2161 = vmatpush1.bf16.msra.mxu0 0
          %2162 = vmatprep.subr.bf16.mxu0 0
          %2163 = vmatpush1.bf16.msra.mxu0 0
          %2164 = vmatprep.subr.bf16.mxu0 0
          %2165 = vmatpush1.bf16.msra.mxu0 0
          %2166 = vmatprep.mubr.bf16.mxu0 0
          %2167 = vmatmul.mubr.bf16.gmra.mrb[0].mxu0 %v1066
          %v2168 = vpop.f32.mrb[0].mxu0
          %v2169 = vadd.f32 %v1242, %v2168
          %v2170 = vpop.f32.mrb[0].mxu0
          %v2171 = vadd.f32 %v1246, %v2170
          %v2172 = vpop.f32.mrb[0].mxu0
          %v2173 = vadd.f32 %v1242, %v2172
          %v2174 = vpop.f32.mrb[0].mxu0
          %v2175 = vadd.f32 %v1246, %v2174
          %2176 = vdwg.mxu0
          %2177 = vmatprep.subr.bf16.mxu0 %v1676
          %2178 = vmatpush1.bf16.msra.mxu0 %v1675
          %2179 = vmatprep.subr.bf16.mxu0 %v1692
          %2180 = vmatpush1.bf16.msra.mxu0 %v1691
          %2181 = vmatprep.subr.bf16.mxu0 %v1708
          %2182 = vmatpush1.bf16.msra.mxu0 %v1707
          %2183 = vmatprep.subr.bf16.mxu0 %v1724
          %2184 = vmatpush1.bf16.msra.mxu0 %v1723
          %2185 = vmatprep.subr.bf16.mxu0 %v1740
          %2186 = vmatpush1.bf16.msra.mxu0 %v1739
          %2187 = vmatprep.subr.bf16.mxu0 %v1756
          %2188 = vmatpush1.bf16.msra.mxu0 %v1755
          %2189 = vmatprep.subr.bf16.mxu0 %v1772
          %2190 = vmatpush1.bf16.msra.mxu0 %v1771
          %2191 = vmatprep.subr.bf16.mxu0 %v1788
          %2192 = vmatpush1.bf16.msra.mxu0 %v1787
          %2193 = vmatprep.subr.bf16.mxu0 0
          %2194 = vmatpush1.bf16.msra.mxu0 0
          %2195 = vmatprep.subr.bf16.mxu0 0
          %2196 = vmatpush1.bf16.msra.mxu0 0
          %2197 = vmatprep.subr.bf16.mxu0 0
          %2198 = vmatpush1.bf16.msra.mxu0 0
          %2199 = vmatprep.subr.bf16.mxu0 0
          %2200 = vmatpush1.bf16.msra.mxu0 0
          %2201 = vmatprep.subr.bf16.mxu0 0
          %2202 = vmatpush1.bf16.msra.mxu0 0
          %2203 = vmatprep.subr.bf16.mxu0 0
          %2204 = vmatpush1.bf16.msra.mxu0 0
          %2205 = vmatprep.subr.bf16.mxu0 0
          %2206 = vmatpush1.bf16.msra.mxu0 0
          %2207 = vmatprep.subr.bf16.mxu0 0
          %2208 = vmatpush1.bf16.msra.mxu0 0
          %2209 = vmatprep.mubr.bf16.mxu0 0
          %2210 = vmatmul.mubr.bf16.gmra.mrb[0].mxu0 %v1066
          %v2211 = vpop.f32.mrb[0].mxu0
          %v2212 = vadd.f32 %v1250, %v2211
          %v2213 = vpop.f32.mrb[0].mxu0
          %v2214 = vadd.f32 %v1254, %v2213
          %v2215 = vpop.f32.mrb[0].mxu0
          %v2216 = vadd.f32 %v1250, %v2215
          %v2217 = vpop.f32.mrb[0].mxu0
          %v2218 = vadd.f32 %v1254, %v2217
          %2219 = vdwg.mxu0
          %2220 = vmatprep.subr.bf16.mxu0 %v1678
          %2221 = vmatpush1.bf16.msra.mxu0 %v1677
          %2222 = vmatprep.subr.bf16.mxu0 %v1694
          %2223 = vmatpush1.bf16.msra.mxu0 %v1693
          %2224 = vmatprep.subr.bf16.mxu0 %v1710
          %2225 = vmatpush1.bf16.msra.mxu0 %v1709
          %2226 = vmatprep.subr.bf16.mxu0 %v1726
          %2227 = vmatpush1.bf16.msra.mxu0 %v1725
          %2228 = vmatprep.subr.bf16.mxu0 %v1742
          %2229 = vmatpush1.bf16.msra.mxu0 %v1741
          %2230 = vmatprep.subr.bf16.mxu0 %v1758
          %2231 = vmatpush1.bf16.msra.mxu0 %v1757
          %2232 = vmatprep.subr.bf16.mxu0 %v1774
          %2233 = vmatpush1.bf16.msra.mxu0 %v1773
          %2234 = vmatprep.subr.bf16.mxu0 %v1790
          %2235 = vmatpush1.bf16.msra.mxu0 %v1789
          %2236 = vmatprep.subr.bf16.mxu0 0
          %2237 = vmatpush1.bf16.msra.mxu0 0
          %2238 = vmatprep.subr.bf16.mxu0 0
          %2239 = vmatpush1.bf16.msra.mxu0 0
          %2240 = vmatprep.subr.bf16.mxu0 0
          %2241 = vmatpush1.bf16.msra.mxu0 0
          %2242 = vmatprep.subr.bf16.mxu0 0
          %2243 = vmatpush1.bf16.msra.mxu0 0
          %2244 = vmatprep.subr.bf16.mxu0 0
          %2245 = vmatpush1.bf16.msra.mxu0 0
          %2246 = vmatprep.subr.bf16.mxu0 0
          %2247 = vmatpush1.bf16.msra.mxu0 0
          %2248 = vmatprep.subr.bf16.mxu0 0
          %2249 = vmatpush1.bf16.msra.mxu0 0
          %2250 = vmatprep.subr.bf16.mxu0 0
          %2251 = vmatpush1.bf16.msra.mxu0 0
          %2252 = vmatprep.mubr.bf16.mxu0 0
          %2253 = vmatmul.mubr.bf16.gmra.mrb[0].mxu0 %v1066
          %v2254 = vpop.f32.mrb[0].mxu0
          %v2255 = vadd.f32 %v1258, %v2254
          %v2256 = vpop.f32.mrb[0].mxu0
          %v2257 = vadd.f32 %v1262, %v2256
          %v2258 = vpop.f32.mrb[0].mxu0
          %v2259 = vadd.f32 %v1258, %v2258
          %v2260 = vpop.f32.mrb[0].mxu0
          %v2261 = vadd.f32 %v1262, %v2260
          %2262 = vdwg.mxu0
          %v2263 = vmax.f32 %v1954, 0.0
          %v2264 = vmax.f32 %v1956, 0.0
          %v2265 = vmax.f32 %v1997, 0.0
          %v2266 = vmax.f32 %v1999, 0.0
          %v2267 = vmax.f32 %v2040, 0.0
          %v2268 = vmax.f32 %v2042, 0.0
          %v2269 = vmax.f32 %v2083, 0.0
          %v2270 = vmax.f32 %v2085, 0.0
          %v2271 = vmax.f32 %v2126, 0.0
          %v2272 = vmax.f32 %v2128, 0.0
          %v2273 = vmax.f32 %v2169, 0.0
          %v2274 = vmax.f32 %v2171, 0.0
          %v2275 = vmax.f32 %v2212, 0.0
          %v2276 = vmax.f32 %v2214, 0.0
          %v2277 = vmax.f32 %v2255, 0.0
          %v2278 = vmax.f32 %v2257, 0.0
          %v2279 = vmax.f32 %v1958, 0.0
          %v2280 = vmax.f32 %v1960, 0.0
          %v2281 = vmax.f32 %v2001, 0.0
          %v2282 = vmax.f32 %v2003, 0.0
          %v2283 = vmax.f32 %v2044, 0.0
          %v2284 = vmax.f32 %v2046, 0.0
          %v2285 = vmax.f32 %v2087, 0.0
          %v2286 = vmax.f32 %v2089, 0.0
          %v2287 = vmax.f32 %v2130, 0.0
          %v2288 = vmax.f32 %v2132, 0.0
          %v2289 = vmax.f32 %v2173, 0.0
          %v2290 = vmax.f32 %v2175, 0.0
          %v2291 = vmax.f32 %v2216, 0.0
          %v2292 = vmax.f32 %v2218, 0.0
          %v2293 = vmax.f32 %v2259, 0.0
          %v2294 = vmax.f32 %v2261, 0.0
          %v2295 = vpack.c.bf16 %v2279, %v2263
          %v2296 = vpack.c.bf16 %v2280, %v2264
          %v2297 = vpack.c.bf16 %v2281, %v2265
          %v2298 = vpack.c.bf16 %v2282, %v2266
          %v2299 = vpack.c.bf16 %v2283, %v2267
          %v2300 = vpack.c.bf16 %v2284, %v2268
          %v2301 = vpack.c.bf16 %v2285, %v2269
          %v2302 = vpack.c.bf16 %v2286, %v2270
          %v2303 = vpack.c.bf16 %v2287, %v2271
          %v2304 = vpack.c.bf16 %v2288, %v2272
          %v2305 = vpack.c.bf16 %v2289, %v2273
          %v2306 = vpack.c.bf16 %v2290, %v2274
          %v2307 = vpack.c.bf16 %v2291, %v2275
          %v2308 = vpack.c.bf16 %v2292, %v2276
          %v2309 = vpack.c.bf16 %v2293, %v2277
          %v2310 = vpack.c.bf16 %v2294, %v2278
          %v2311 = vld [vmem:[#allocation16] sm:$0xf]
          %v2312 = vld [vmem:[#allocation16 + $0x4] sm:$0xf]
          %v2313 = vld [vmem:[#allocation16 + $0x8] sm:$0xf]
          %v2314 = vld [vmem:[#allocation16 + $0xc] sm:$0xf]
          %v2315 = vld [vmem:[#allocation16 + $0x10] sm:$0xf]
          %v2316 = vld [vmem:[#allocation16 + $0x14] sm:$0xf]
          %v2317 = vld [vmem:[#allocation16 + $0x18] sm:$0xf]
          %v2318 = vld [vmem:[#allocation16 + $0x1c] sm:$0xf]
          %v2319 = vld [vmem:[#allocation16 + $0x20] sm:$0xf]
          %v2320 = vld [vmem:[#allocation16 + $0x24] sm:$0xf]
          %v2321 = vld [vmem:[#allocation16 + $0x28] sm:$0xf]
          %v2322 = vld [vmem:[#allocation16 + $0x2c] sm:$0xf]
          %v2323 = vld [vmem:[#allocation16 + $0x30] sm:$0xf]
          %v2324 = vld [vmem:[#allocation16 + $0x34] sm:$0xf]
          %v2325 = vld [vmem:[#allocation16 + $0x38] sm:$0xf]
          %v2326 = vld [vmem:[#allocation16 + $0x3c] sm:$0xf]
          %v2327 = vld [vmem:[#allocation16 + $0x40] sm:$0xf]
          %v2328 = vld [vmem:[#allocation16 + $0x44] sm:$0xf]
          %v2329 = vld [vmem:[#allocation16 + $0x48] sm:$0xf]
          %v2330 = vld [vmem:[#allocation16 + $0x4c] sm:$0xf]
          %v2331 = vld [vmem:[#allocation16 + $0x50] sm:$0xf]
          %v2332 = vld [vmem:[#allocation16 + $0x54] sm:$0xf]
          %v2333 = vld [vmem:[#allocation16 + $0x58] sm:$0xf]
          %v2334 = vld [vmem:[#allocation16 + $0x5c] sm:$0xf]
          %v2335 = vld [vmem:[#allocation16 + $0x60] sm:$0xf]
          %v2336 = vld [vmem:[#allocation16 + $0x64] sm:$0xf]
          %v2337 = vld [vmem:[#allocation16 + $0x68] sm:$0xf]
          %v2338 = vld [vmem:[#allocation16 + $0x6c] sm:$0xf]
          %v2339 = vld [vmem:[#allocation16 + $0x70] sm:$0xf]
          %v2340 = vld [vmem:[#allocation16 + $0x74] sm:$0xf]
          %v2341 = vld [vmem:[#allocation16 + $0x78] sm:$0xf]
          %v2342 = vld [vmem:[#allocation16 + $0x7c] sm:$0xf]
          %v2343 = vld [vmem:[#allocation16 + $0x80] sm:$0xf]
          %v2344 = vld [vmem:[#allocation16 + $0x84] sm:$0xf]
          %v2345 = vld [vmem:[#allocation16 + $0x88] sm:$0xf]
          %v2346 = vld [vmem:[#allocation16 + $0x8c] sm:$0xf]
          %v2347 = vld [vmem:[#allocation16 + $0x90] sm:$0xf]
          %v2348 = vld [vmem:[#allocation16 + $0x94] sm:$0xf]
          %v2349 = vld [vmem:[#allocation16 + $0x98] sm:$0xf]
          %v2350 = vld [vmem:[#allocation16 + $0x9c] sm:$0xf]
          %v2351 = vld [vmem:[#allocation16 + $0xa0] sm:$0xf]
          %v2352 = vld [vmem:[#allocation16 + $0xa4] sm:$0xf]
          %v2353 = vld [vmem:[#allocation16 + $0xa8] sm:$0xf]
          %v2354 = vld [vmem:[#allocation16 + $0xac] sm:$0xf]
          %v2355 = vld [vmem:[#allocation16 + $0xb0] sm:$0xf]
          %v2356 = vld [vmem:[#allocation16 + $0xb4] sm:$0xf]
          %v2357 = vld [vmem:[#allocation16 + $0xb8] sm:$0xf]
          %v2358 = vld [vmem:[#allocation16 + $0xbc] sm:$0xf]
          %v2359 = vld [vmem:[#allocation16 + $0xc0] sm:$0xf]
          %v2360 = vld [vmem:[#allocation16 + $0xc4] sm:$0xf]
          %v2361 = vld [vmem:[#allocation16 + $0xc8] sm:$0xf]
          %v2362 = vld [vmem:[#allocation16 + $0xcc] sm:$0xf]
          %v2363 = vld [vmem:[#allocation16 + $0xd0] sm:$0xf]
          %v2364 = vld [vmem:[#allocation16 + $0xd4] sm:$0xf]
          %v2365 = vld [vmem:[#allocation16 + $0xd8] sm:$0xf]
          %v2366 = vld [vmem:[#allocation16 + $0xdc] sm:$0xf]
          %v2367 = vld [vmem:[#allocation16 + $0xe0] sm:$0xf]
          %v2368 = vld [vmem:[#allocation16 + $0xe4] sm:$0xf]
          %v2369 = vld [vmem:[#allocation16 + $0xe8] sm:$0xf]
          %v2370 = vld [vmem:[#allocation16 + $0xec] sm:$0xf]
          %v2371 = vld [vmem:[#allocation16 + $0xf0] sm:$0xf]
          %v2372 = vld [vmem:[#allocation16 + $0xf4] sm:$0xf]
          %v2373 = vld [vmem:[#allocation16 + $0xf8] sm:$0xf]
          %v2374 = vld [vmem:[#allocation16 + $0xfc] sm:$0xf]
          %v2375 = vld [vmem:[#allocation16 + $0x100] sm:$0xf]
          %v2376 = vld [vmem:[#allocation16 + $0x104] sm:$0xf]
          %v2377 = vld [vmem:[#allocation16 + $0x108] sm:$0xf]
          %v2378 = vld [vmem:[#allocation16 + $0x10c] sm:$0xf]
          %v2379 = vld [vmem:[#allocation16 + $0x110] sm:$0xf]
          %v2380 = vld [vmem:[#allocation16 + $0x114] sm:$0xf]
          %v2381 = vld [vmem:[#allocation16 + $0x118] sm:$0xf]
          %v2382 = vld [vmem:[#allocation16 + $0x11c] sm:$0xf]
          %v2383 = vld [vmem:[#allocation16 + $0x120] sm:$0xf]
          %v2384 = vld [vmem:[#allocation16 + $0x124] sm:$0xf]
          %v2385 = vld [vmem:[#allocation16 + $0x128] sm:$0xf]
          %v2386 = vld [vmem:[#allocation16 + $0x12c] sm:$0xf]
          %v2387 = vld [vmem:[#allocation16 + $0x130] sm:$0xf]
          %v2388 = vld [vmem:[#allocation16 + $0x134] sm:$0xf]
          %v2389 = vld [vmem:[#allocation16 + $0x138] sm:$0xf]
          %v2390 = vld [vmem:[#allocation16 + $0x13c] sm:$0xf]
          %v2391 = vld [vmem:[#allocation16 + $0x140] sm:$0xf]
          %v2392 = vld [vmem:[#allocation16 + $0x144] sm:$0xf]
          %v2393 = vld [vmem:[#allocation16 + $0x148] sm:$0xf]
          %v2394 = vld [vmem:[#allocation16 + $0x14c] sm:$0xf]
          %v2395 = vld [vmem:[#allocation16 + $0x150] sm:$0xf]
          %v2396 = vld [vmem:[#allocation16 + $0x154] sm:$0xf]
          %v2397 = vld [vmem:[#allocation16 + $0x158] sm:$0xf]
          %v2398 = vld [vmem:[#allocation16 + $0x15c] sm:$0xf]
          %v2399 = vld [vmem:[#allocation16 + $0x160] sm:$0xf]
          %v2400 = vld [vmem:[#allocation16 + $0x164] sm:$0xf]
          %v2401 = vld [vmem:[#allocation16 + $0x168] sm:$0xf]
          %v2402 = vld [vmem:[#allocation16 + $0x16c] sm:$0xf]
          %v2403 = vld [vmem:[#allocation16 + $0x170] sm:$0xf]
          %v2404 = vld [vmem:[#allocation16 + $0x174] sm:$0xf]
          %v2405 = vld [vmem:[#allocation16 + $0x178] sm:$0xf]
          %v2406 = vld [vmem:[#allocation16 + $0x17c] sm:$0xf]
          %v2407 = vld [vmem:[#allocation16 + $0x180] sm:$0xf]
          %v2408 = vld [vmem:[#allocation16 + $0x184] sm:$0xf]
          %v2409 = vld [vmem:[#allocation16 + $0x188] sm:$0xf]
          %v2410 = vld [vmem:[#allocation16 + $0x18c] sm:$0xf]
          %v2411 = vld [vmem:[#allocation16 + $0x190] sm:$0xf]
          %v2412 = vld [vmem:[#allocation16 + $0x194] sm:$0xf]
          %v2413 = vld [vmem:[#allocation16 + $0x198] sm:$0xf]
          %v2414 = vld [vmem:[#allocation16 + $0x19c] sm:$0xf]
          %v2415 = vld [vmem:[#allocation16 + $0x1a0] sm:$0xf]
          %v2416 = vld [vmem:[#allocation16 + $0x1a4] sm:$0xf]
          %v2417 = vld [vmem:[#allocation16 + $0x1a8] sm:$0xf]
          %v2418 = vld [vmem:[#allocation16 + $0x1ac] sm:$0xf]
          %v2419 = vld [vmem:[#allocation16 + $0x1b0] sm:$0xf]
          %v2420 = vld [vmem:[#allocation16 + $0x1b4] sm:$0xf]
          %v2421 = vld [vmem:[#allocation16 + $0x1b8] sm:$0xf]
          %v2422 = vld [vmem:[#allocation16 + $0x1bc] sm:$0xf]
          %v2423 = vld [vmem:[#allocation16 + $0x1c0] sm:$0xf]
          %v2424 = vld [vmem:[#allocation16 + $0x1c4] sm:$0xf]
          %v2425 = vld [vmem:[#allocation16 + $0x1c8] sm:$0xf]
          %v2426 = vld [vmem:[#allocation16 + $0x1cc] sm:$0xf]
          %v2427 = vld [vmem:[#allocation16 + $0x1d0] sm:$0xf]
          %v2428 = vld [vmem:[#allocation16 + $0x1d4] sm:$0xf]
          %v2429 = vld [vmem:[#allocation16 + $0x1d8] sm:$0xf]
          %v2430 = vld [vmem:[#allocation16 + $0x1dc] sm:$0xf]
          %v2431 = vld [vmem:[#allocation16 + $0x1e0] sm:$0xf]
          %v2432 = vld [vmem:[#allocation16 + $0x1e4] sm:$0xf]
          %v2433 = vld [vmem:[#allocation16 + $0x1e8] sm:$0xf]
          %v2434 = vld [vmem:[#allocation16 + $0x1ec] sm:$0xf]
          %v2435 = vld [vmem:[#allocation16 + $0x1f0] sm:$0xf]
          %v2436 = vld [vmem:[#allocation16 + $0x1f4] sm:$0xf]
          %v2437 = vld [vmem:[#allocation16 + $0x1f8] sm:$0xf]
          %v2438 = vld [vmem:[#allocation16 + $0x1fc] sm:$0xf]
          %v2439 = vld [vmem:[#allocation16 + $0x200] sm:$0xf]
          %v2440 = vld [vmem:[#allocation16 + $0x204] sm:$0xf]
          %v2441 = vld [vmem:[#allocation16 + $0x208] sm:$0xf]
          %v2442 = vld [vmem:[#allocation16 + $0x20c] sm:$0xf]
          %v2443 = vld [vmem:[#allocation16 + $0x210] sm:$0xf]
          %v2444 = vld [vmem:[#allocation16 + $0x214] sm:$0xf]
          %v2445 = vld [vmem:[#allocation16 + $0x218] sm:$0xf]
          %v2446 = vld [vmem:[#allocation16 + $0x21c] sm:$0xf]
          %v2447 = vld [vmem:[#allocation16 + $0x220] sm:$0xf]
          %v2448 = vld [vmem:[#allocation16 + $0x224] sm:$0xf]
          %v2449 = vld [vmem:[#allocation16 + $0x228] sm:$0xf]
          %v2450 = vld [vmem:[#allocation16 + $0x22c] sm:$0xf]
          %v2451 = vld [vmem:[#allocation16 + $0x230] sm:$0xf]
          %v2452 = vld [vmem:[#allocation16 + $0x234] sm:$0xf]
          %v2453 = vld [vmem:[#allocation16 + $0x238] sm:$0xf]
          %v2454 = vld [vmem:[#allocation16 + $0x23c] sm:$0xf]
          %v2455 = vld [vmem:[#allocation16 + $0x240] sm:$0xf]
          %v2456 = vld [vmem:[#allocation16 + $0x244] sm:$0xf]
          %v2457 = vld [vmem:[#allocation16 + $0x248] sm:$0xf]
          %v2458 = vld [vmem:[#allocation16 + $0x24c] sm:$0xf]
          %v2459 = vld [vmem:[#allocation16 + $0x250] sm:$0xf]
          %v2460 = vld [vmem:[#allocation16 + $0x254] sm:$0xf]
          %v2461 = vld [vmem:[#allocation16 + $0x258] sm:$0xf]
          %v2462 = vld [vmem:[#allocation16 + $0x25c] sm:$0xf]
          %v2463 = vld [vmem:[#allocation16 + $0x260] sm:$0xf]
          %v2464 = vld [vmem:[#allocation16 + $0x264] sm:$0xf]
          %v2465 = vld [vmem:[#allocation16 + $0x268] sm:$0xf]
          %v2466 = vld [vmem:[#allocation16 + $0x26c] sm:$0xf]
          %v2467 = vld [vmem:[#allocation16 + $0x270] sm:$0xf]
          %v2468 = vld [vmem:[#allocation16 + $0x274] sm:$0xf]
          %v2469 = vld [vmem:[#allocation16 + $0x278] sm:$0xf]
          %v2470 = vld [vmem:[#allocation16 + $0x27c] sm:$0xf]
          %v2471 = vld [vmem:[#allocation16 + $0x280] sm:$0xf]
          %v2472 = vld [vmem:[#allocation16 + $0x284] sm:$0xf]
          %v2473 = vld [vmem:[#allocation16 + $0x288] sm:$0xf]
          %v2474 = vld [vmem:[#allocation16 + $0x28c] sm:$0xf]
          %v2475 = vld [vmem:[#allocation16 + $0x290] sm:$0xf]
          %v2476 = vld [vmem:[#allocation16 + $0x294] sm:$0xf]
          %v2477 = vld [vmem:[#allocation16 + $0x298] sm:$0xf]
          %v2478 = vld [vmem:[#allocation16 + $0x29c] sm:$0xf]
          %v2479 = vld [vmem:[#allocation16 + $0x2a0] sm:$0xf]
          %v2480 = vld [vmem:[#allocation16 + $0x2a4] sm:$0xf]
          %v2481 = vld [vmem:[#allocation16 + $0x2a8] sm:$0xf]
          %v2482 = vld [vmem:[#allocation16 + $0x2ac] sm:$0xf]
          %v2483 = vld [vmem:[#allocation16 + $0x2b0] sm:$0xf]
          %v2484 = vld [vmem:[#allocation16 + $0x2b4] sm:$0xf]
          %v2485 = vld [vmem:[#allocation16 + $0x2b8] sm:$0xf]
          %v2486 = vld [vmem:[#allocation16 + $0x2bc] sm:$0xf]
          %v2487 = vld [vmem:[#allocation16 + $0x2c0] sm:$0xf]
          %v2488 = vld [vmem:[#allocation16 + $0x2c4] sm:$0xf]
          %v2489 = vld [vmem:[#allocation16 + $0x2c8] sm:$0xf]
          %v2490 = vld [vmem:[#allocation16 + $0x2cc] sm:$0xf]
          %v2491 = vld [vmem:[#allocation16 + $0x2d0] sm:$0xf]
          %v2492 = vld [vmem:[#allocation16 + $0x2d4] sm:$0xf]
          %v2493 = vld [vmem:[#allocation16 + $0x2d8] sm:$0xf]
          %v2494 = vld [vmem:[#allocation16 + $0x2dc] sm:$0xf]
          %v2495 = vld [vmem:[#allocation16 + $0x2e0] sm:$0xf]
          %v2496 = vld [vmem:[#allocation16 + $0x2e4] sm:$0xf]
          %v2497 = vld [vmem:[#allocation16 + $0x2e8] sm:$0xf]
          %v2498 = vld [vmem:[#allocation16 + $0x2ec] sm:$0xf]
          %v2499 = vld [vmem:[#allocation16 + $0x2f0] sm:$0xf]
          %v2500 = vld [vmem:[#allocation16 + $0x2f4] sm:$0xf]
          %v2501 = vld [vmem:[#allocation16 + $0x2f8] sm:$0xf]
          %v2502 = vld [vmem:[#allocation16 + $0x2fc] sm:$0xf]
          %v2503 = vld [vmem:[#allocation16 + $0x300] sm:$0xf]
          %v2504 = vld [vmem:[#allocation16 + $0x304] sm:$0xf]
          %v2505 = vld [vmem:[#allocation16 + $0x308] sm:$0xf]
          %v2506 = vld [vmem:[#allocation16 + $0x30c] sm:$0xf]
          %v2507 = vld [vmem:[#allocation16 + $0x310] sm:$0xf]
          %v2508 = vld [vmem:[#allocation16 + $0x314] sm:$0xf]
          %v2509 = vld [vmem:[#allocation16 + $0x318] sm:$0xf]
          %v2510 = vld [vmem:[#allocation16 + $0x31c] sm:$0xf]
          %v2511 = vld [vmem:[#allocation16 + $0x320] sm:$0xf]
          %v2512 = vld [vmem:[#allocation16 + $0x324] sm:$0xf]
          %v2513 = vld [vmem:[#allocation16 + $0x328] sm:$0xf]
          %v2514 = vld [vmem:[#allocation16 + $0x32c] sm:$0xf]
          %v2515 = vld [vmem:[#allocation16 + $0x330] sm:$0xf]
          %v2516 = vld [vmem:[#allocation16 + $0x334] sm:$0xf]
          %v2517 = vld [vmem:[#allocation16 + $0x338] sm:$0xf]
          %v2518 = vld [vmem:[#allocation16 + $0x33c] sm:$0xf]
          %v2519 = vld [vmem:[#allocation16 + $0x340] sm:$0xf]
          %v2520 = vld [vmem:[#allocation16 + $0x344] sm:$0xf]
          %v2521 = vld [vmem:[#allocation16 + $0x348] sm:$0xf]
          %v2522 = vld [vmem:[#allocation16 + $0x34c] sm:$0xf]
          %v2523 = vld [vmem:[#allocation16 + $0x350] sm:$0xf]
          %v2524 = vld [vmem:[#allocation16 + $0x354] sm:$0xf]
          %v2525 = vld [vmem:[#allocation16 + $0x358] sm:$0xf]
          %v2526 = vld [vmem:[#allocation16 + $0x35c] sm:$0xf]
          %v2527 = vld [vmem:[#allocation16 + $0x360] sm:$0xf]
          %v2528 = vld [vmem:[#allocation16 + $0x364] sm:$0xf]
          %v2529 = vld [vmem:[#allocation16 + $0x368] sm:$0xf]
          %v2530 = vld [vmem:[#allocation16 + $0x36c] sm:$0xf]
          %v2531 = vld [vmem:[#allocation16 + $0x370] sm:$0xf]
          %v2532 = vld [vmem:[#allocation16 + $0x374] sm:$0xf]
          %v2533 = vld [vmem:[#allocation16 + $0x378] sm:$0xf]
          %v2534 = vld [vmem:[#allocation16 + $0x37c] sm:$0xf]
          %v2535 = vld [vmem:[#allocation16 + $0x380] sm:$0xf]
          %v2536 = vld [vmem:[#allocation16 + $0x384] sm:$0xf]
          %v2537 = vld [vmem:[#allocation16 + $0x388] sm:$0xf]
          %v2538 = vld [vmem:[#allocation16 + $0x38c] sm:$0xf]
          %v2539 = vld [vmem:[#allocation16 + $0x390] sm:$0xf]
          %v2540 = vld [vmem:[#allocation16 + $0x394] sm:$0xf]
          %v2541 = vld [vmem:[#allocation16 + $0x398] sm:$0xf]
          %v2542 = vld [vmem:[#allocation16 + $0x39c] sm:$0xf]
          %v2543 = vld [vmem:[#allocation16 + $0x3a0] sm:$0xf]
          %v2544 = vld [vmem:[#allocation16 + $0x3a4] sm:$0xf]
          %v2545 = vld [vmem:[#allocation16 + $0x3a8] sm:$0xf]
          %v2546 = vld [vmem:[#allocation16 + $0x3ac] sm:$0xf]
          %v2547 = vld [vmem:[#allocation16 + $0x3b0] sm:$0xf]
          %v2548 = vld [vmem:[#allocation16 + $0x3b4] sm:$0xf]
          %v2549 = vld [vmem:[#allocation16 + $0x3b8] sm:$0xf]
          %v2550 = vld [vmem:[#allocation16 + $0x3bc] sm:$0xf]
          %v2551 = vld [vmem:[#allocation16 + $0x3c0] sm:$0xf]
          %v2552 = vld [vmem:[#allocation16 + $0x3c4] sm:$0xf]
          %v2553 = vld [vmem:[#allocation16 + $0x3c8] sm:$0xf]
          %v2554 = vld [vmem:[#allocation16 + $0x3cc] sm:$0xf]
          %v2555 = vld [vmem:[#allocation16 + $0x3d0] sm:$0xf]
          %v2556 = vld [vmem:[#allocation16 + $0x3d4] sm:$0xf]
          %v2557 = vld [vmem:[#allocation16 + $0x3d8] sm:$0xf]
          %v2558 = vld [vmem:[#allocation16 + $0x3dc] sm:$0xf]
          %v2559 = vld [vmem:[#allocation16 + $0x3e0] sm:$0xf]
          %v2560 = vld [vmem:[#allocation16 + $0x3e4] sm:$0xf]
          %v2561 = vld [vmem:[#allocation16 + $0x3e8] sm:$0xf]
          %v2562 = vld [vmem:[#allocation16 + $0x3ec] sm:$0xf]
          %v2563 = vld [vmem:[#allocation16 + $0x3f0] sm:$0xf]
          %v2564 = vld [vmem:[#allocation16 + $0x3f4] sm:$0xf]
          %v2565 = vld [vmem:[#allocation16 + $0x3f8] sm:$0xf]
          %v2566 = vld [vmem:[#allocation16 + $0x3fc] sm:$0xf]
          %v2567 = vlaneseq
          %v2568 = vshrl.u32 %v2567, 7
          %v2569 = vsub.s32 3, %v2568
          %v2570 = vrot.slane %v912, %v2569
          %v2827 = vunpack.c.l.b16 %v2311
          %v2828 = vunpack.c.l.b16 %v2312
          %v2829 = vunpack.c.l.b16 %v2313
          %v2830 = vunpack.c.l.b16 %v2314
          %v2831 = vunpack.c.l.b16 %v2315
          %v2832 = vunpack.c.l.b16 %v2316
          %v2833 = vunpack.c.l.b16 %v2317
          %v2834 = vunpack.c.l.b16 %v2318
          %v2835 = vunpack.c.l.b16 %v2319
          %v2836 = vunpack.c.l.b16 %v2320
          %v2837 = vunpack.c.l.b16 %v2321
          %v2838 = vunpack.c.l.b16 %v2322
          %v2839 = vunpack.c.l.b16 %v2323
          %v2840 = vunpack.c.l.b16 %v2324
          %v2841 = vunpack.c.l.b16 %v2325
          %v2842 = vunpack.c.l.b16 %v2326
          %v2843 = vunpack.c.l.b16 %v2327
          %v2844 = vunpack.c.l.b16 %v2328
          %v2845 = vunpack.c.l.b16 %v2329
          %v2846 = vunpack.c.l.b16 %v2330
          %v2847 = vunpack.c.l.b16 %v2331
          %v2848 = vunpack.c.l.b16 %v2332
          %v2849 = vunpack.c.l.b16 %v2333
          %v2850 = vunpack.c.l.b16 %v2334
          %v2851 = vunpack.c.l.b16 %v2335
          %v2852 = vunpack.c.l.b16 %v2336
          %v2853 = vunpack.c.l.b16 %v2337
          %v2854 = vunpack.c.l.b16 %v2338
          %v2855 = vunpack.c.l.b16 %v2339
          %v2856 = vunpack.c.l.b16 %v2340
          %v2857 = vunpack.c.l.b16 %v2341
          %v2858 = vunpack.c.l.b16 %v2342
          %v2859 = vunpack.c.l.b16 %v2343
          %v2860 = vunpack.c.l.b16 %v2344
          %v2861 = vunpack.c.l.b16 %v2345
          %v2862 = vunpack.c.l.b16 %v2346
          %v2863 = vunpack.c.l.b16 %v2347
          %v2864 = vunpack.c.l.b16 %v2348
          %v2865 = vunpack.c.l.b16 %v2349
          %v2866 = vunpack.c.l.b16 %v2350
          %v2867 = vunpack.c.l.b16 %v2351
          %v2868 = vunpack.c.l.b16 %v2352
          %v2869 = vunpack.c.l.b16 %v2353
          %v2870 = vunpack.c.l.b16 %v2354
          %v2871 = vunpack.c.l.b16 %v2355
          %v2872 = vunpack.c.l.b16 %v2356
          %v2873 = vunpack.c.l.b16 %v2357
          %v2874 = vunpack.c.l.b16 %v2358
          %v2875 = vunpack.c.l.b16 %v2359
          %v2876 = vunpack.c.l.b16 %v2360
          %v2877 = vunpack.c.l.b16 %v2361
          %v2878 = vunpack.c.l.b16 %v2362
          %v2879 = vunpack.c.l.b16 %v2363
          %v2880 = vunpack.c.l.b16 %v2364
          %v2881 = vunpack.c.l.b16 %v2365
          %v2882 = vunpack.c.l.b16 %v2366
          %v2883 = vunpack.c.l.b16 %v2367
          %v2884 = vunpack.c.l.b16 %v2368
          %v2885 = vunpack.c.l.b16 %v2369
          %v2886 = vunpack.c.l.b16 %v2370
          %v2887 = vunpack.c.l.b16 %v2371
          %v2888 = vunpack.c.l.b16 %v2372
          %v2889 = vunpack.c.l.b16 %v2373
          %v2890 = vunpack.c.l.b16 %v2374
          %v2891 = vunpack.c.l.b16 %v2375
          %v2892 = vunpack.c.l.b16 %v2376
          %v2893 = vunpack.c.l.b16 %v2377
          %v2894 = vunpack.c.l.b16 %v2378
          %v2895 = vunpack.c.l.b16 %v2379
          %v2896 = vunpack.c.l.b16 %v2380
          %v2897 = vunpack.c.l.b16 %v2381
          %v2898 = vunpack.c.l.b16 %v2382
          %v2899 = vunpack.c.l.b16 %v2383
          %v2900 = vunpack.c.l.b16 %v2384
          %v2901 = vunpack.c.l.b16 %v2385
          %v2902 = vunpack.c.l.b16 %v2386
          %v2903 = vunpack.c.l.b16 %v2387
          %v2904 = vunpack.c.l.b16 %v2388
          %v2905 = vunpack.c.l.b16 %v2389
          %v2906 = vunpack.c.l.b16 %v2390
          %v2907 = vunpack.c.l.b16 %v2391
          %v2908 = vunpack.c.l.b16 %v2392
          %v2909 = vunpack.c.l.b16 %v2393
          %v2910 = vunpack.c.l.b16 %v2394
          %v2911 = vunpack.c.l.b16 %v2395
          %v2912 = vunpack.c.l.b16 %v2396
          %v2913 = vunpack.c.l.b16 %v2397
          %v2914 = vunpack.c.l.b16 %v2398
          %v2915 = vunpack.c.l.b16 %v2399
          %v2916 = vunpack.c.l.b16 %v2400
          %v2917 = vunpack.c.l.b16 %v2401
          %v2918 = vunpack.c.l.b16 %v2402
          %v2919 = vunpack.c.l.b16 %v2403
          %v2920 = vunpack.c.l.b16 %v2404
          %v2921 = vunpack.c.l.b16 %v2405
          %v2922 = vunpack.c.l.b16 %v2406
          %v2923 = vunpack.c.l.b16 %v2407
          %v2924 = vunpack.c.l.b16 %v2408
          %v2925 = vunpack.c.l.b16 %v2409
          %v2926 = vunpack.c.l.b16 %v2410
          %v2927 = vunpack.c.l.b16 %v2411
          %v2928 = vunpack.c.l.b16 %v2412
          %v2929 = vunpack.c.l.b16 %v2413
          %v2930 = vunpack.c.l.b16 %v2414
          %v2931 = vunpack.c.l.b16 %v2415
          %v2932 = vunpack.c.l.b16 %v2416
          %v2933 = vunpack.c.l.b16 %v2417
          %v2934 = vunpack.c.l.b16 %v2418
          %v2935 = vunpack.c.l.b16 %v2419
          %v2936 = vunpack.c.l.b16 %v2420
          %v2937 = vunpack.c.l.b16 %v2421
          %v2938 = vunpack.c.l.b16 %v2422
          %v2939 = vunpack.c.l.b16 %v2423
          %v2940 = vunpack.c.l.b16 %v2424
          %v2941 = vunpack.c.l.b16 %v2425
          %v2942 = vunpack.c.l.b16 %v2426
          %v2943 = vunpack.c.l.b16 %v2427
          %v2944 = vunpack.c.l.b16 %v2428
          %v2945 = vunpack.c.l.b16 %v2429
          %v2946 = vunpack.c.l.b16 %v2430
          %v2947 = vunpack.c.l.b16 %v2431
          %v2948 = vunpack.c.l.b16 %v2432
          %v2949 = vunpack.c.l.b16 %v2433
          %v2950 = vunpack.c.l.b16 %v2434
          %v2951 = vunpack.c.l.b16 %v2435
          %v2952 = vunpack.c.l.b16 %v2436
          %v2953 = vunpack.c.l.b16 %v2437
          %v2954 = vunpack.c.l.b16 %v2438
          %v2955 = vunpack.c.l.b16 %v2439
          %v2956 = vunpack.c.l.b16 %v2440
          %v2957 = vunpack.c.l.b16 %v2441
          %v2958 = vunpack.c.l.b16 %v2442
          %v2959 = vunpack.c.l.b16 %v2443
          %v2960 = vunpack.c.l.b16 %v2444
          %v2961 = vunpack.c.l.b16 %v2445
          %v2962 = vunpack.c.l.b16 %v2446
          %v2963 = vunpack.c.l.b16 %v2447
          %v2964 = vunpack.c.l.b16 %v2448
          %v2965 = vunpack.c.l.b16 %v2449
          %v2966 = vunpack.c.l.b16 %v2450
          %v2967 = vunpack.c.l.b16 %v2451
          %v2968 = vunpack.c.l.b16 %v2452
          %v2969 = vunpack.c.l.b16 %v2453
          %v2970 = vunpack.c.l.b16 %v2454
          %v2971 = vunpack.c.l.b16 %v2455
          %v2972 = vunpack.c.l.b16 %v2456
          %v2973 = vunpack.c.l.b16 %v2457
          %v2974 = vunpack.c.l.b16 %v2458
          %v2975 = vunpack.c.l.b16 %v2459
          %v2976 = vunpack.c.l.b16 %v2460
          %v2977 = vunpack.c.l.b16 %v2461
          %v2978 = vunpack.c.l.b16 %v2462
          %v2979 = vunpack.c.l.b16 %v2463
          %v2980 = vunpack.c.l.b16 %v2464
          %v2981 = vunpack.c.l.b16 %v2465
          %v2982 = vunpack.c.l.b16 %v2466
          %v2983 = vunpack.c.l.b16 %v2467
          %v2984 = vunpack.c.l.b16 %v2468
          %v2985 = vunpack.c.l.b16 %v2469
          %v2986 = vunpack.c.l.b16 %v2470
          %v2987 = vunpack.c.l.b16 %v2471
          %v2988 = vunpack.c.l.b16 %v2472
          %v2989 = vunpack.c.l.b16 %v2473
          %v2990 = vunpack.c.l.b16 %v2474
          %v2991 = vunpack.c.l.b16 %v2475
          %v2992 = vunpack.c.l.b16 %v2476
          %v2993 = vunpack.c.l.b16 %v2477
          %v2994 = vunpack.c.l.b16 %v2478
          %v2995 = vunpack.c.l.b16 %v2479
          %v2996 = vunpack.c.l.b16 %v2480
          %v2997 = vunpack.c.l.b16 %v2481
          %v2998 = vunpack.c.l.b16 %v2482
          %v2999 = vunpack.c.l.b16 %v2483
          %v3000 = vunpack.c.l.b16 %v2484
          %v3001 = vunpack.c.l.b16 %v2485
          %v3002 = vunpack.c.l.b16 %v2486
          %v3003 = vunpack.c.l.b16 %v2487
          %v3004 = vunpack.c.l.b16 %v2488
          %v3005 = vunpack.c.l.b16 %v2489
          %v3006 = vunpack.c.l.b16 %v2490
          %v3007 = vunpack.c.l.b16 %v2491
          %v3008 = vunpack.c.l.b16 %v2492
          %v3009 = vunpack.c.l.b16 %v2493
          %v3010 = vunpack.c.l.b16 %v2494
          %v3011 = vunpack.c.l.b16 %v2495
          %v3012 = vunpack.c.l.b16 %v2496
          %v3013 = vunpack.c.l.b16 %v2497
          %v3014 = vunpack.c.l.b16 %v2498
          %v3015 = vunpack.c.l.b16 %v2499
          %v3016 = vunpack.c.l.b16 %v2500
          %v3017 = vunpack.c.l.b16 %v2501
          %v3018 = vunpack.c.l.b16 %v2502
          %v3019 = vunpack.c.l.b16 %v2503
          %v3020 = vunpack.c.l.b16 %v2504
          %v3021 = vunpack.c.l.b16 %v2505
          %v3022 = vunpack.c.l.b16 %v2506
          %v3023 = vunpack.c.l.b16 %v2507
          %v3024 = vunpack.c.l.b16 %v2508
          %v3025 = vunpack.c.l.b16 %v2509
          %v3026 = vunpack.c.l.b16 %v2510
          %v3027 = vunpack.c.l.b16 %v2511
          %v3028 = vunpack.c.l.b16 %v2512
          %v3029 = vunpack.c.l.b16 %v2513
          %v3030 = vunpack.c.l.b16 %v2514
          %v3031 = vunpack.c.l.b16 %v2515
          %v3032 = vunpack.c.l.b16 %v2516
          %v3033 = vunpack.c.l.b16 %v2517
          %v3034 = vunpack.c.l.b16 %v2518
          %v3035 = vunpack.c.l.b16 %v2519
          %v3036 = vunpack.c.l.b16 %v2520
          %v3037 = vunpack.c.l.b16 %v2521
          %v3038 = vunpack.c.l.b16 %v2522
          %v3039 = vunpack.c.l.b16 %v2523
          %v3040 = vunpack.c.l.b16 %v2524
          %v3041 = vunpack.c.l.b16 %v2525
          %v3042 = vunpack.c.l.b16 %v2526
          %v3043 = vunpack.c.l.b16 %v2527
          %v3044 = vunpack.c.l.b16 %v2528
          %v3045 = vunpack.c.l.b16 %v2529
          %v3046 = vunpack.c.l.b16 %v2530
          %v3047 = vunpack.c.l.b16 %v2531
          %v3048 = vunpack.c.l.b16 %v2532
          %v3049 = vunpack.c.l.b16 %v2533
          %v3050 = vunpack.c.l.b16 %v2534
          %v3051 = vunpack.c.l.b16 %v2535
          %v3052 = vunpack.c.l.b16 %v2536
          %v3053 = vunpack.c.l.b16 %v2537
          %v3054 = vunpack.c.l.b16 %v2538
          %v3055 = vunpack.c.l.b16 %v2539
          %v3056 = vunpack.c.l.b16 %v2540
          %v3057 = vunpack.c.l.b16 %v2541
          %v3058 = vunpack.c.l.b16 %v2542
          %v3059 = vunpack.c.l.b16 %v2543
          %v3060 = vunpack.c.l.b16 %v2544
          %v3061 = vunpack.c.l.b16 %v2545
          %v3062 = vunpack.c.l.b16 %v2546
          %v3063 = vunpack.c.l.b16 %v2547
          %v3064 = vunpack.c.l.b16 %v2548
          %v3065 = vunpack.c.l.b16 %v2549
          %v3066 = vunpack.c.l.b16 %v2550
          %v3067 = vunpack.c.l.b16 %v2551
          %v3068 = vunpack.c.l.b16 %v2552
          %v3069 = vunpack.c.l.b16 %v2553
          %v3070 = vunpack.c.l.b16 %v2554
          %v3071 = vunpack.c.l.b16 %v2555
          %v3072 = vunpack.c.l.b16 %v2556
          %v3073 = vunpack.c.l.b16 %v2557
          %v3074 = vunpack.c.l.b16 %v2558
          %v3075 = vunpack.c.l.b16 %v2559
          %v3076 = vunpack.c.l.b16 %v2560
          %v3077 = vunpack.c.l.b16 %v2561
          %v3078 = vunpack.c.l.b16 %v2562
          %v3079 = vunpack.c.l.b16 %v2563
          %v3080 = vunpack.c.l.b16 %v2564
          %v3081 = vunpack.c.l.b16 %v2565
          %v3082 = vunpack.c.l.b16 %v2566
          %v3083 = vpack.c.b16 %v2828, %v2827
          %v3084 = vpack.c.b16 %v2830, %v2829
          %v3085 = vpack.c.b16 %v2832, %v2831
          %v3086 = vpack.c.b16 %v2834, %v2833
          %v3087 = vpack.c.b16 %v2836, %v2835
          %v3088 = vpack.c.b16 %v2838, %v2837
          %v3089 = vpack.c.b16 %v2840, %v2839
          %v3090 = vpack.c.b16 %v2842, %v2841
          %v3091 = vpack.c.b16 %v2844, %v2843
          %v3092 = vpack.c.b16 %v2846, %v2845
          %v3093 = vpack.c.b16 %v2848, %v2847
          %v3094 = vpack.c.b16 %v2850, %v2849
          %v3095 = vpack.c.b16 %v2852, %v2851
          %v3096 = vpack.c.b16 %v2854, %v2853
          %v3097 = vpack.c.b16 %v2856, %v2855
          %v3098 = vpack.c.b16 %v2858, %v2857
          %v3099 = vpack.c.b16 %v2860, %v2859
          %v3100 = vpack.c.b16 %v2862, %v2861
          %v3101 = vpack.c.b16 %v2864, %v2863
          %v3102 = vpack.c.b16 %v2866, %v2865
          %v3103 = vpack.c.b16 %v2868, %v2867
          %v3104 = vpack.c.b16 %v2870, %v2869
          %v3105 = vpack.c.b16 %v2872, %v2871
          %v3106 = vpack.c.b16 %v2874, %v2873
          %v3107 = vpack.c.b16 %v2876, %v2875
          %v3108 = vpack.c.b16 %v2878, %v2877
          %v3109 = vpack.c.b16 %v2880, %v2879
          %v3110 = vpack.c.b16 %v2882, %v2881
          %v3111 = vpack.c.b16 %v2884, %v2883
          %v3112 = vpack.c.b16 %v2886, %v2885
          %v3113 = vpack.c.b16 %v2888, %v2887
          %v3114 = vpack.c.b16 %v2890, %v2889
          %v3115 = vpack.c.b16 %v2892, %v2891
          %v3116 = vpack.c.b16 %v2894, %v2893
          %v3117 = vpack.c.b16 %v2896, %v2895
          %v3118 = vpack.c.b16 %v2898, %v2897
          %v3119 = vpack.c.b16 %v2900, %v2899
          %v3120 = vpack.c.b16 %v2902, %v2901
          %v3121 = vpack.c.b16 %v2904, %v2903
          %v3122 = vpack.c.b16 %v2906, %v2905
          %v3123 = vpack.c.b16 %v2908, %v2907
          %v3124 = vpack.c.b16 %v2910, %v2909
          %v3125 = vpack.c.b16 %v2912, %v2911
          %v3126 = vpack.c.b16 %v2914, %v2913
          %v3127 = vpack.c.b16 %v2916, %v2915
          %v3128 = vpack.c.b16 %v2918, %v2917
          %v3129 = vpack.c.b16 %v2920, %v2919
          %v3130 = vpack.c.b16 %v2922, %v2921
          %v3131 = vpack.c.b16 %v2924, %v2923
          %v3132 = vpack.c.b16 %v2926, %v2925
          %v3133 = vpack.c.b16 %v2928, %v2927
          %v3134 = vpack.c.b16 %v2930, %v2929
          %v3135 = vpack.c.b16 %v2932, %v2931
          %v3136 = vpack.c.b16 %v2934, %v2933
          %v3137 = vpack.c.b16 %v2936, %v2935
          %v3138 = vpack.c.b16 %v2938, %v2937
          %v3139 = vpack.c.b16 %v2940, %v2939
          %v3140 = vpack.c.b16 %v2942, %v2941
          %v3141 = vpack.c.b16 %v2944, %v2943
          %v3142 = vpack.c.b16 %v2946, %v2945
          %v3143 = vpack.c.b16 %v2948, %v2947
          %v3144 = vpack.c.b16 %v2950, %v2949
          %v3145 = vpack.c.b16 %v2952, %v2951
          %v3146 = vpack.c.b16 %v2954, %v2953
          %v3147 = vpack.c.b16 %v2956, %v2955
          %v3148 = vpack.c.b16 %v2958, %v2957
          %v3149 = vpack.c.b16 %v2960, %v2959
          %v3150 = vpack.c.b16 %v2962, %v2961
          %v3151 = vpack.c.b16 %v2964, %v2963
          %v3152 = vpack.c.b16 %v2966, %v2965
          %v3153 = vpack.c.b16 %v2968, %v2967
          %v3154 = vpack.c.b16 %v2970, %v2969
          %v3155 = vpack.c.b16 %v2972, %v2971
          %v3156 = vpack.c.b16 %v2974, %v2973
          %v3157 = vpack.c.b16 %v2976, %v2975
          %v3158 = vpack.c.b16 %v2978, %v2977
          %v3159 = vpack.c.b16 %v2980, %v2979
          %v3160 = vpack.c.b16 %v2982, %v2981
          %v3161 = vpack.c.b16 %v2984, %v2983
          %v3162 = vpack.c.b16 %v2986, %v2985
          %v3163 = vpack.c.b16 %v2988, %v2987
          %v3164 = vpack.c.b16 %v2990, %v2989
          %v3165 = vpack.c.b16 %v2992, %v2991
          %v3166 = vpack.c.b16 %v2994, %v2993
          %v3167 = vpack.c.b16 %v2996, %v2995
          %v3168 = vpack.c.b16 %v2998, %v2997
          %v3169 = vpack.c.b16 %v3000, %v2999
          %v3170 = vpack.c.b16 %v3002, %v3001
          %v3171 = vpack.c.b16 %v3004, %v3003
          %v3172 = vpack.c.b16 %v3006, %v3005
          %v3173 = vpack.c.b16 %v3008, %v3007
          %v3174 = vpack.c.b16 %v3010, %v3009
          %v3175 = vpack.c.b16 %v3012, %v3011
          %v3176 = vpack.c.b16 %v3014, %v3013
          %v3177 = vpack.c.b16 %v3016, %v3015
          %v3178 = vpack.c.b16 %v3018, %v3017
          %v3179 = vpack.c.b16 %v3020, %v3019
          %v3180 = vpack.c.b16 %v3022, %v3021
          %v3181 = vpack.c.b16 %v3024, %v3023
          %v3182 = vpack.c.b16 %v3026, %v3025
          %v3183 = vpack.c.b16 %v3028, %v3027
          %v3184 = vpack.c.b16 %v3030, %v3029
          %v3185 = vpack.c.b16 %v3032, %v3031
          %v3186 = vpack.c.b16 %v3034, %v3033
          %v3187 = vpack.c.b16 %v3036, %v3035
          %v3188 = vpack.c.b16 %v3038, %v3037
          %v3189 = vpack.c.b16 %v3040, %v3039
          %v3190 = vpack.c.b16 %v3042, %v3041
          %v3191 = vpack.c.b16 %v3044, %v3043
          %v3192 = vpack.c.b16 %v3046, %v3045
          %v3193 = vpack.c.b16 %v3048, %v3047
          %v3194 = vpack.c.b16 %v3050, %v3049
          %v3195 = vpack.c.b16 %v3052, %v3051
          %v3196 = vpack.c.b16 %v3054, %v3053
          %v3197 = vpack.c.b16 %v3056, %v3055
          %v3198 = vpack.c.b16 %v3058, %v3057
          %v3199 = vpack.c.b16 %v3060, %v3059
          %v3200 = vpack.c.b16 %v3062, %v3061
          %v3201 = vpack.c.b16 %v3064, %v3063
          %v3202 = vpack.c.b16 %v3066, %v3065
          %v3203 = vpack.c.b16 %v3068, %v3067
          %v3204 = vpack.c.b16 %v3070, %v3069
          %v3205 = vpack.c.b16 %v3072, %v3071
          %v3206 = vpack.c.b16 %v3074, %v3073
          %v3207 = vpack.c.b16 %v3076, %v3075
          %v3208 = vpack.c.b16 %v3078, %v3077
          %v3209 = vpack.c.b16 %v3080, %v3079
          %v3210 = vpack.c.b16 %v3082, %v3081
          %3339 = vmatprep.subr.bf16.mxu0 0
          %3340 = vmatpush1.bf16.msra.mxu0 %v3083
          %3341 = vmatprep.subr.bf16.mxu0 0
          %3342 = vmatpush1.bf16.msra.mxu0 %v3084
          %3343 = vmatprep.subr.bf16.mxu0 0
          %3344 = vmatpush1.bf16.msra.mxu0 %v3085
          %3345 = vmatprep.subr.bf16.mxu0 0
          %3346 = vmatpush1.bf16.msra.mxu0 %v3086
          %3347 = vmatprep.subr.bf16.mxu0 0
          %3348 = vmatpush1.bf16.msra.mxu0 %v3087
          %3349 = vmatprep.subr.bf16.mxu0 0
          %3350 = vmatpush1.bf16.msra.mxu0 %v3088
          %3351 = vmatprep.subr.bf16.mxu0 0
          %3352 = vmatpush1.bf16.msra.mxu0 %v3089
          %3353 = vmatprep.subr.bf16.mxu0 0
          %3354 = vmatpush1.bf16.msra.mxu0 %v3090
          %3355 = vmatprep.subr.bf16.mxu0 0
          %3356 = vmatpush1.bf16.msra.mxu0 %v3091
          %3357 = vmatprep.subr.bf16.mxu0 0
          %3358 = vmatpush1.bf16.msra.mxu0 %v3092
          %3359 = vmatprep.subr.bf16.mxu0 0
          %3360 = vmatpush1.bf16.msra.mxu0 %v3093
          %3361 = vmatprep.subr.bf16.mxu0 0
          %3362 = vmatpush1.bf16.msra.mxu0 %v3094
          %3363 = vmatprep.subr.bf16.mxu0 0
          %3364 = vmatpush1.bf16.msra.mxu0 %v3095
          %3365 = vmatprep.subr.bf16.mxu0 0
          %3366 = vmatpush1.bf16.msra.mxu0 %v3096
          %3367 = vmatprep.subr.bf16.mxu0 0
          %3368 = vmatpush1.bf16.msra.mxu0 %v3097
          %3369 = vmatprep.subr.bf16.mxu0 0
          %3370 = vmatpush1.bf16.msra.mxu0 %v3098
          %3371 = vmatprep.mubr.bf16.mxu0 %v2296
          %3372 = vmatmul.mubr.bf16.gmra.mrb[0].mxu0 %v2295
          %v3373 = vpop.f32.mrb[0].mxu0
          %v3374 = vadd.f32 %v2570, %v3373
          %v3375 = vpop.f32.mrb[0].mxu0
          %v3376 = vpop.f32.mrb[0].mxu0
          %v3377 = vadd.f32 %v2570, %v3376
          %v3378 = vpop.f32.mrb[0].mxu0
          %3379 = vdwg.mxu0
          %3380 = vmatprep.subr.bf16.mxu0 0
          %3381 = vmatpush1.bf16.msra.mxu0 %v3099
          %3382 = vmatprep.subr.bf16.mxu0 0
          %3383 = vmatpush1.bf16.msra.mxu0 %v3100
          %3384 = vmatprep.subr.bf16.mxu0 0
          %3385 = vmatpush1.bf16.msra.mxu0 %v3101
          %3386 = vmatprep.subr.bf16.mxu0 0
          %3387 = vmatpush1.bf16.msra.mxu0 %v3102
          %3388 = vmatprep.subr.bf16.mxu0 0
          %3389 = vmatpush1.bf16.msra.mxu0 %v3103
          %3390 = vmatprep.subr.bf16.mxu0 0
          %3391 = vmatpush1.bf16.msra.mxu0 %v3104
          %3392 = vmatprep.subr.bf16.mxu0 0
          %3393 = vmatpush1.bf16.msra.mxu0 %v3105
          %3394 = vmatprep.subr.bf16.mxu0 0
          %3395 = vmatpush1.bf16.msra.mxu0 %v3106
          %3396 = vmatprep.subr.bf16.mxu0 0
          %3397 = vmatpush1.bf16.msra.mxu0 %v3107
          %3398 = vmatprep.subr.bf16.mxu0 0
          %3399 = vmatpush1.bf16.msra.mxu0 %v3108
          %3400 = vmatprep.subr.bf16.mxu0 0
          %3401 = vmatpush1.bf16.msra.mxu0 %v3109
          %3402 = vmatprep.subr.bf16.mxu0 0
          %3403 = vmatpush1.bf16.msra.mxu0 %v3110
          %3404 = vmatprep.subr.bf16.mxu0 0
          %3405 = vmatpush1.bf16.msra.mxu0 %v3111
          %3406 = vmatprep.subr.bf16.mxu0 0
          %3407 = vmatpush1.bf16.msra.mxu0 %v3112
          %3408 = vmatprep.subr.bf16.mxu0 0
          %3409 = vmatpush1.bf16.msra.mxu0 %v3113
          %3410 = vmatprep.subr.bf16.mxu0 0
          %3411 = vmatpush1.bf16.msra.mxu0 %v3114
          %3412 = vmatprep.mubr.bf16.mxu0 %v2298
          %3413 = vmatmul.mubr.bf16.gmra.mrb[0].mxu0 %v2297
          %v3414 = vpop.f32.mrb[0].mxu0
          %v3415 = vadd.f32 %v3374, %v3414
          %v3416 = vpop.f32.mrb[0].mxu0
          %v3417 = vpop.f32.mrb[0].mxu0
          %v3418 = vadd.f32 %v3377, %v3417
          %v3419 = vpop.f32.mrb[0].mxu0
          %3420 = vdwg.mxu0
          %3421 = vmatprep.subr.bf16.mxu0 0
          %3422 = vmatpush1.bf16.msra.mxu0 %v3115
          %3423 = vmatprep.subr.bf16.mxu0 0
          %3424 = vmatpush1.bf16.msra.mxu0 %v3116
          %3425 = vmatprep.subr.bf16.mxu0 0
          %3426 = vmatpush1.bf16.msra.mxu0 %v3117
          %3427 = vmatprep.subr.bf16.mxu0 0
          %3428 = vmatpush1.bf16.msra.mxu0 %v3118
          %3429 = vmatprep.subr.bf16.mxu0 0
          %3430 = vmatpush1.bf16.msra.mxu0 %v3119
          %3431 = vmatprep.subr.bf16.mxu0 0
          %3432 = vmatpush1.bf16.msra.mxu0 %v3120
          %3433 = vmatprep.subr.bf16.mxu0 0
          %3434 = vmatpush1.bf16.msra.mxu0 %v3121
          %3435 = vmatprep.subr.bf16.mxu0 0
          %3436 = vmatpush1.bf16.msra.mxu0 %v3122
          %3437 = vmatprep.subr.bf16.mxu0 0
          %3438 = vmatpush1.bf16.msra.mxu0 %v3123
          %3439 = vmatprep.subr.bf16.mxu0 0
          %3440 = vmatpush1.bf16.msra.mxu0 %v3124
          %3441 = vmatprep.subr.bf16.mxu0 0
          %3442 = vmatpush1.bf16.msra.mxu0 %v3125
          %3443 = vmatprep.subr.bf16.mxu0 0
          %3444 = vmatpush1.bf16.msra.mxu0 %v3126
          %3445 = vmatprep.subr.bf16.mxu0 0
          %3446 = vmatpush1.bf16.msra.mxu0 %v3127
          %3447 = vmatprep.subr.bf16.mxu0 0
          %3448 = vmatpush1.bf16.msra.mxu0 %v3128
          %3449 = vmatprep.subr.bf16.mxu0 0
          %3450 = vmatpush1.bf16.msra.mxu0 %v3129
          %3451 = vmatprep.subr.bf16.mxu0 0
          %3452 = vmatpush1.bf16.msra.mxu0 %v3130
          %3453 = vmatprep.mubr.bf16.mxu0 %v2300
          %3454 = vmatmul.mubr.bf16.gmra.mrb[0].mxu0 %v2299
          %v3455 = vpop.f32.mrb[0].mxu0
          %v3456 = vadd.f32 %v3415, %v3455
          %v3457 = vpop.f32.mrb[0].mxu0
          %v3458 = vpop.f32.mrb[0].mxu0
          %v3459 = vadd.f32 %v3418, %v3458
          %v3460 = vpop.f32.mrb[0].mxu0
          %3461 = vdwg.mxu0
          %3462 = vmatprep.subr.bf16.mxu0 0
          %3463 = vmatpush1.bf16.msra.mxu0 %v3131
          %3464 = vmatprep.subr.bf16.mxu0 0
          %3465 = vmatpush1.bf16.msra.mxu0 %v3132
          %3466 = vmatprep.subr.bf16.mxu0 0
          %3467 = vmatpush1.bf16.msra.mxu0 %v3133
          %3468 = vmatprep.subr.bf16.mxu0 0
          %3469 = vmatpush1.bf16.msra.mxu0 %v3134
          %3470 = vmatprep.subr.bf16.mxu0 0
          %3471 = vmatpush1.bf16.msra.mxu0 %v3135
          %3472 = vmatprep.subr.bf16.mxu0 0
          %3473 = vmatpush1.bf16.msra.mxu0 %v3136
          %3474 = vmatprep.subr.bf16.mxu0 0
          %3475 = vmatpush1.bf16.msra.mxu0 %v3137
          %3476 = vmatprep.subr.bf16.mxu0 0
          %3477 = vmatpush1.bf16.msra.mxu0 %v3138
          %3478 = vmatprep.subr.bf16.mxu0 0
          %3479 = vmatpush1.bf16.msra.mxu0 %v3139
          %3480 = vmatprep.subr.bf16.mxu0 0
          %3481 = vmatpush1.bf16.msra.mxu0 %v3140
          %3482 = vmatprep.subr.bf16.mxu0 0
          %3483 = vmatpush1.bf16.msra.mxu0 %v3141
          %3484 = vmatprep.subr.bf16.mxu0 0
          %3485 = vmatpush1.bf16.msra.mxu0 %v3142
          %3486 = vmatprep.subr.bf16.mxu0 0
          %3487 = vmatpush1.bf16.msra.mxu0 %v3143
          %3488 = vmatprep.subr.bf16.mxu0 0
          %3489 = vmatpush1.bf16.msra.mxu0 %v3144
          %3490 = vmatprep.subr.bf16.mxu0 0
          %3491 = vmatpush1.bf16.msra.mxu0 %v3145
          %3492 = vmatprep.subr.bf16.mxu0 0
          %3493 = vmatpush1.bf16.msra.mxu0 %v3146
          %3494 = vmatprep.mubr.bf16.mxu0 %v2302
          %3495 = vmatmul.mubr.bf16.gmra.mrb[0].mxu0 %v2301
          %v3496 = vpop.f32.mrb[0].mxu0
          %v3497 = vadd.f32 %v3456, %v3496
          %v3498 = vpop.f32.mrb[0].mxu0
          %v3499 = vpop.f32.mrb[0].mxu0
          %v3500 = vadd.f32 %v3459, %v3499
          %v3501 = vpop.f32.mrb[0].mxu0
          %3502 = vdwg.mxu0
          %3503 = vmatprep.subr.bf16.mxu0 0
          %3504 = vmatpush1.bf16.msra.mxu0 %v3147
          %3505 = vmatprep.subr.bf16.mxu0 0
          %3506 = vmatpush1.bf16.msra.mxu0 %v3148
          %3507 = vmatprep.subr.bf16.mxu0 0
          %3508 = vmatpush1.bf16.msra.mxu0 %v3149
          %3509 = vmatprep.subr.bf16.mxu0 0
          %3510 = vmatpush1.bf16.msra.mxu0 %v3150
          %3511 = vmatprep.subr.bf16.mxu0 0
          %3512 = vmatpush1.bf16.msra.mxu0 %v3151
          %3513 = vmatprep.subr.bf16.mxu0 0
          %3514 = vmatpush1.bf16.msra.mxu0 %v3152
          %3515 = vmatprep.subr.bf16.mxu0 0
          %3516 = vmatpush1.bf16.msra.mxu0 %v3153
          %3517 = vmatprep.subr.bf16.mxu0 0
          %3518 = vmatpush1.bf16.msra.mxu0 %v3154
          %3519 = vmatprep.subr.bf16.mxu0 0
          %3520 = vmatpush1.bf16.msra.mxu0 %v3155
          %3521 = vmatprep.subr.bf16.mxu0 0
          %3522 = vmatpush1.bf16.msra.mxu0 %v3156
          %3523 = vmatprep.subr.bf16.mxu0 0
          %3524 = vmatpush1.bf16.msra.mxu0 %v3157
          %3525 = vmatprep.subr.bf16.mxu0 0
          %3526 = vmatpush1.bf16.msra.mxu0 %v3158
          %3527 = vmatprep.subr.bf16.mxu0 0
          %3528 = vmatpush1.bf16.msra.mxu0 %v3159
          %3529 = vmatprep.subr.bf16.mxu0 0
          %3530 = vmatpush1.bf16.msra.mxu0 %v3160
          %3531 = vmatprep.subr.bf16.mxu0 0
          %3532 = vmatpush1.bf16.msra.mxu0 %v3161
          %3533 = vmatprep.subr.bf16.mxu0 0
          %3534 = vmatpush1.bf16.msra.mxu0 %v3162
          %3535 = vmatprep.mubr.bf16.mxu0 %v2304
          %3536 = vmatmul.mubr.bf16.gmra.mrb[0].mxu0 %v2303
          %v3537 = vpop.f32.mrb[0].mxu0
          %v3538 = vadd.f32 %v3497, %v3537
          %v3539 = vpop.f32.mrb[0].mxu0
          %v3540 = vpop.f32.mrb[0].mxu0
          %v3541 = vadd.f32 %v3500, %v3540
          %v3542 = vpop.f32.mrb[0].mxu0
          %3543 = vdwg.mxu0
          %3544 = vmatprep.subr.bf16.mxu0 0
          %3545 = vmatpush1.bf16.msra.mxu0 %v3163
          %3546 = vmatprep.subr.bf16.mxu0 0
          %3547 = vmatpush1.bf16.msra.mxu0 %v3164
          %3548 = vmatprep.subr.bf16.mxu0 0
          %3549 = vmatpush1.bf16.msra.mxu0 %v3165
          %3550 = vmatprep.subr.bf16.mxu0 0
          %3551 = vmatpush1.bf16.msra.mxu0 %v3166
          %3552 = vmatprep.subr.bf16.mxu0 0
          %3553 = vmatpush1.bf16.msra.mxu0 %v3167
          %3554 = vmatprep.subr.bf16.mxu0 0
          %3555 = vmatpush1.bf16.msra.mxu0 %v3168
          %3556 = vmatprep.subr.bf16.mxu0 0
          %3557 = vmatpush1.bf16.msra.mxu0 %v3169
          %3558 = vmatprep.subr.bf16.mxu0 0
          %3559 = vmatpush1.bf16.msra.mxu0 %v3170
          %3560 = vmatprep.subr.bf16.mxu0 0
          %3561 = vmatpush1.bf16.msra.mxu0 %v3171
          %3562 = vmatprep.subr.bf16.mxu0 0
          %3563 = vmatpush1.bf16.msra.mxu0 %v3172
          %3564 = vmatprep.subr.bf16.mxu0 0
          %3565 = vmatpush1.bf16.msra.mxu0 %v3173
          %3566 = vmatprep.subr.bf16.mxu0 0
          %3567 = vmatpush1.bf16.msra.mxu0 %v3174
          %3568 = vmatprep.subr.bf16.mxu0 0
          %3569 = vmatpush1.bf16.msra.mxu0 %v3175
          %3570 = vmatprep.subr.bf16.mxu0 0
          %3571 = vmatpush1.bf16.msra.mxu0 %v3176
          %3572 = vmatprep.subr.bf16.mxu0 0
          %3573 = vmatpush1.bf16.msra.mxu0 %v3177
          %3574 = vmatprep.subr.bf16.mxu0 0
          %3575 = vmatpush1.bf16.msra.mxu0 %v3178
          %3576 = vmatprep.mubr.bf16.mxu0 %v2306
          %3577 = vmatmul.mubr.bf16.gmra.mrb[0].mxu0 %v2305
          %v3578 = vpop.f32.mrb[0].mxu0
          %v3579 = vadd.f32 %v3538, %v3578
          %v3580 = vpop.f32.mrb[0].mxu0
          %v3581 = vpop.f32.mrb[0].mxu0
          %v3582 = vadd.f32 %v3541, %v3581
          %v3583 = vpop.f32.mrb[0].mxu0
          %3584 = vdwg.mxu0
          %3585 = vmatprep.subr.bf16.mxu0 0
          %3586 = vmatpush1.bf16.msra.mxu0 %v3179
          %3587 = vmatprep.subr.bf16.mxu0 0
          %3588 = vmatpush1.bf16.msra.mxu0 %v3180
          %3589 = vmatprep.subr.bf16.mxu0 0
          %3590 = vmatpush1.bf16.msra.mxu0 %v3181
          %3591 = vmatprep.subr.bf16.mxu0 0
          %3592 = vmatpush1.bf16.msra.mxu0 %v3182
          %3593 = vmatprep.subr.bf16.mxu0 0
          %3594 = vmatpush1.bf16.msra.mxu0 %v3183
          %3595 = vmatprep.subr.bf16.mxu0 0
          %3596 = vmatpush1.bf16.msra.mxu0 %v3184
          %3597 = vmatprep.subr.bf16.mxu0 0
          %3598 = vmatpush1.bf16.msra.mxu0 %v3185
          %3599 = vmatprep.subr.bf16.mxu0 0
          %3600 = vmatpush1.bf16.msra.mxu0 %v3186
          %3601 = vmatprep.subr.bf16.mxu0 0
          %3602 = vmatpush1.bf16.msra.mxu0 %v3187
          %3603 = vmatprep.subr.bf16.mxu0 0
          %3604 = vmatpush1.bf16.msra.mxu0 %v3188
          %3605 = vmatprep.subr.bf16.mxu0 0
          %3606 = vmatpush1.bf16.msra.mxu0 %v3189
          %3607 = vmatprep.subr.bf16.mxu0 0
          %3608 = vmatpush1.bf16.msra.mxu0 %v3190
          %3609 = vmatprep.subr.bf16.mxu0 0
          %3610 = vmatpush1.bf16.msra.mxu0 %v3191
          %3611 = vmatprep.subr.bf16.mxu0 0
          %3612 = vmatpush1.bf16.msra.mxu0 %v3192
          %3613 = vmatprep.subr.bf16.mxu0 0
          %3614 = vmatpush1.bf16.msra.mxu0 %v3193
          %3615 = vmatprep.subr.bf16.mxu0 0
          %3616 = vmatpush1.bf16.msra.mxu0 %v3194
          %3617 = vmatprep.mubr.bf16.mxu0 %v2308
          %3618 = vmatmul.mubr.bf16.gmra.mrb[0].mxu0 %v2307
          %v3619 = vpop.f32.mrb[0].mxu0
          %v3620 = vadd.f32 %v3579, %v3619
          %v3621 = vpop.f32.mrb[0].mxu0
          %v3622 = vpop.f32.mrb[0].mxu0
          %v3623 = vadd.f32 %v3582, %v3622
          %v3624 = vpop.f32.mrb[0].mxu0
          %3625 = vdwg.mxu0
          %3626 = vmatprep.subr.bf16.mxu0 0
          %3627 = vmatpush1.bf16.msra.mxu0 %v3195
          %3628 = vmatprep.subr.bf16.mxu0 0
          %3629 = vmatpush1.bf16.msra.mxu0 %v3196
          %3630 = vmatprep.subr.bf16.mxu0 0
          %3631 = vmatpush1.bf16.msra.mxu0 %v3197
          %3632 = vmatprep.subr.bf16.mxu0 0
          %3633 = vmatpush1.bf16.msra.mxu0 %v3198
          %3634 = vmatprep.subr.bf16.mxu0 0
          %3635 = vmatpush1.bf16.msra.mxu0 %v3199
          %3636 = vmatprep.subr.bf16.mxu0 0
          %3637 = vmatpush1.bf16.msra.mxu0 %v3200
          %3638 = vmatprep.subr.bf16.mxu0 0
          %3639 = vmatpush1.bf16.msra.mxu0 %v3201
          %3640 = vmatprep.subr.bf16.mxu0 0
          %3641 = vmatpush1.bf16.msra.mxu0 %v3202
          %3642 = vmatprep.subr.bf16.mxu0 0
          %3643 = vmatpush1.bf16.msra.mxu0 %v3203
          %3644 = vmatprep.subr.bf16.mxu0 0
          %3645 = vmatpush1.bf16.msra.mxu0 %v3204
          %3646 = vmatprep.subr.bf16.mxu0 0
          %3647 = vmatpush1.bf16.msra.mxu0 %v3205
          %3648 = vmatprep.subr.bf16.mxu0 0
          %3649 = vmatpush1.bf16.msra.mxu0 %v3206
          %3650 = vmatprep.subr.bf16.mxu0 0
          %3651 = vmatpush1.bf16.msra.mxu0 %v3207
          %3652 = vmatprep.subr.bf16.mxu0 0
          %3653 = vmatpush1.bf16.msra.mxu0 %v3208
          %3654 = vmatprep.subr.bf16.mxu0 0
          %3655 = vmatpush1.bf16.msra.mxu0 %v3209
          %3656 = vmatprep.subr.bf16.mxu0 0
          %3657 = vmatpush1.bf16.msra.mxu0 %v3210
          %3658 = vmatprep.mubr.bf16.mxu0 %v2310
          %3659 = vmatmul.mubr.bf16.gmra.mrb[0].mxu0 %v2309
          %v3660 = vpop.f32.mrb[0].mxu0
          %v3661 = vadd.f32 %v3620, %v3660
          %v3662 = vpop.f32.mrb[0].mxu0
          %v3663 = vpop.f32.mrb[0].mxu0
          %v3664 = vadd.f32 %v3623, %v3663
          %v3665 = vpop.f32.mrb[0].mxu0
          %3666 = vdwg.mxu0
          %v3667 = vadd.f32 %v1064, %v3661
          %v3668 = vadd.f32 %v1065, %v3664
          %3669 = vadd.xlane.f32.xlu0 %v3667
          %v3670 = vpop.xlane.xlu0 %3669
          %3671 = vadd.xlane.f32.xlu0 %v3668
          %v3672 = vpop.xlane.xlu0 %3671
          %v3673 = vmul.f32 %v3670, %v1029
          %v3674 = vmul.f32 %v3672, %v1029
          %v3675 = vmul.f32 %v3667, %v3667
          %v3676 = vmul.f32 %v3668, %v3668
          %3677 = vadd.xlane.f32.xlu0 %v3675
          %v3678 = vpop.xlane.xlu0 %3677
          %3679 = vadd.xlane.f32.xlu0 %v3676
          %v3680 = vpop.xlane.xlu0 %3679
          %v3681 = vmul.f32 %v3678, %v1029
          %v3682 = vmul.f32 %v3680, %v1029
          %v3683 = vmul.f32 %v3673, %v3673
          %v3684 = vmul.f32 %v3674, %v3674
          %v3685 = vsub.f32 %v3681, %v3683
          %v3686 = vsub.f32 %v3682, %v3684
          %v3687 = vmax.f32 %v3685, 0.0
          %v3688 = vmax.f32 %v3686, 0.0
          %v3689 = vsub.f32 %v3667, %v3673
          %v3690 = vsub.f32 %v3668, %v3674
          %v3691 = vadd.f32 %v3687, 1e-05
          %v3692 = vadd.f32 %v3688, 1e-05
          %v3693 = vrsqrt.pop %v3691
          %v3694 = vrsqrt.pop %v3692
          %v3695 = vmul.f32 %v3689, %v3693
          %v3696 = vmul.f32 %v3690, %v3694
          %v3697 = vlaneseq
          %v3698 = vshrl.u32 %v3697, 7
          %v3699 = vsub.s32 4, %v3698
          %v3700 = vrot.slane %v912, %v3699
          %v3701 = vmul.f32 %v3695, %v3700
          %v3702 = vmul.f32 %v3696, %v3700
          %v3703 = vlaneseq
          %v3704 = vshrl.u32 %v3703, 7
          %v3705 = vsub.s32 5, %v3704
          %v3706 = vrot.slane %v912, %v3705
          %v3707 = vadd.f32 %v3701, %v3706
          %v3708 = vadd.f32 %v3702, %v3706
          %s3709 = scalar_lea.vmem %s9, 8
          %v3710 = vld [vmem:[%s3709] sm:$0xff]
          %v3711 = vpack.c.bf16 %v3708, %v3707
          %s3712 = scalar_lea.vmem [#allocation13], 64
          %v3713 = vld [vmem:[%s3712] sm:$0xf]
          %v3714 = vld [vmem:[%s3712 + $0x4] sm:$0xf]
          %v3715 = vld [vmem:[%s3712 + $0x8] sm:$0xf]
          %v3716 = vld [vmem:[%s3712 + $0xc] sm:$0xf]
          %v3717 = vld [vmem:[%s3712 + $0x10] sm:$0xf]
          %v3718 = vld [vmem:[%s3712 + $0x14] sm:$0xf]
          %v3719 = vld [vmem:[%s3712 + $0x18] sm:$0xf]
          %v3720 = vld [vmem:[%s3712 + $0x1c] sm:$0xf]
          %v3721 = vld [vmem:[%s3712 + $0x20] sm:$0xf]
          %v3722 = vld [vmem:[%s3712 + $0x24] sm:$0xf]
          %v3723 = vld [vmem:[%s3712 + $0x28] sm:$0xf]
          %v3724 = vld [vmem:[%s3712 + $0x2c] sm:$0xf]
          %v3725 = vld [vmem:[%s3712 + $0x30] sm:$0xf]
          %v3726 = vld [vmem:[%s3712 + $0x34] sm:$0xf]
          %v3727 = vld [vmem:[%s3712 + $0x38] sm:$0xf]
          %v3728 = vld [vmem:[%s3712 + $0x3c] sm:$0xf]
          %v3729 = vlaneseq
          %v3730 = vshrl.u32 %v3729, 7
          %v3731 = vsub.s32 0, %v3730
          %v3732 = vrot.slane %v3710, %v3731
          %v3749 = vunpack.c.l.b16 %v3713
          %v3750 = vunpack.c.l.b16 %v3714
          %v3751 = vunpack.c.l.b16 %v3715
          %v3752 = vunpack.c.l.b16 %v3716
          %v3753 = vunpack.c.l.b16 %v3717
          %v3754 = vunpack.c.l.b16 %v3718
          %v3755 = vunpack.c.l.b16 %v3719
          %v3756 = vunpack.c.l.b16 %v3720
          %v3757 = vunpack.c.l.b16 %v3721
          %v3758 = vunpack.c.l.b16 %v3722
          %v3759 = vunpack.c.l.b16 %v3723
          %v3760 = vunpack.c.l.b16 %v3724
          %v3761 = vunpack.c.l.b16 %v3725
          %v3762 = vunpack.c.l.b16 %v3726
          %v3763 = vunpack.c.l.b16 %v3727
          %v3764 = vunpack.c.l.b16 %v3728
          %v3765 = vpack.c.b16 %v3750, %v3749
          %v3766 = vpack.c.b16 %v3752, %v3751
          %v3767 = vpack.c.b16 %v3754, %v3753
          %v3768 = vpack.c.b16 %v3756, %v3755
          %v3769 = vpack.c.b16 %v3758, %v3757
          %v3770 = vpack.c.b16 %v3760, %v3759
          %v3771 = vpack.c.b16 %v3762, %v3761
          %v3772 = vpack.c.b16 %v3764, %v3763
          %3781 = vmatprep.subr.bf16.mxu0 0
          %3782 = vmatpush1.bf16.msra.mxu0 %v3765
          %3783 = vmatprep.subr.bf16.mxu0 0
          %3784 = vmatpush1.bf16.msra.mxu0 %v3766
          %3785 = vmatprep.subr.bf16.mxu0 0
          %3786 = vmatpush1.bf16.msra.mxu0 %v3767
          %3787 = vmatprep.subr.bf16.mxu0 0
          %3788 = vmatpush1.bf16.msra.mxu0 %v3768
          %3789 = vmatprep.subr.bf16.mxu0 0
          %3790 = vmatpush1.bf16.msra.mxu0 %v3769
          %3791 = vmatprep.subr.bf16.mxu0 0
          %3792 = vmatpush1.bf16.msra.mxu0 %v3770
          %3793 = vmatprep.subr.bf16.mxu0 0
          %3794 = vmatpush1.bf16.msra.mxu0 %v3771
          %3795 = vmatprep.subr.bf16.mxu0 0
          %3796 = vmatpush1.bf16.msra.mxu0 %v3772
          %3797 = vmatprep.subr.bf16.mxu0 0
          %3798 = vmatpush1.bf16.msra.mxu0 0
          %3799 = vmatprep.subr.bf16.mxu0 0
          %3800 = vmatpush1.bf16.msra.mxu0 0
          %3801 = vmatprep.subr.bf16.mxu0 0
          %3802 = vmatpush1.bf16.msra.mxu0 0
          %3803 = vmatprep.subr.bf16.mxu0 0
          %3804 = vmatpush1.bf16.msra.mxu0 0
          %3805 = vmatprep.subr.bf16.mxu0 0
          %3806 = vmatpush1.bf16.msra.mxu0 0
          %3807 = vmatprep.subr.bf16.mxu0 0
          %3808 = vmatpush1.bf16.msra.mxu0 0
          %3809 = vmatprep.subr.bf16.mxu0 0
          %3810 = vmatpush1.bf16.msra.mxu0 0
          %3811 = vmatprep.subr.bf16.mxu0 0
          %3812 = vmatpush1.bf16.msra.mxu0 0
          %3813 = vmatprep.mubr.bf16.mxu0 0
          %3814 = vmatmul.mubr.bf16.gmra.mrb[0].mxu0 %v3711
          %v3815 = vpop.f32.mrb[0].mxu0
          %v3816 = vadd.f32 %v3732, %v3815
          %v3817 = vpop.f32.mrb[0].mxu0
          %v3818 = vpop.f32.mrb[0].mxu0
          %v3819 = vadd.f32 %v3732, %v3818
          %v3820 = vpop.f32.mrb[0].mxu0
          %3821 = vdwg.mxu0
          %v3822 = vadd.f32 %v3707, %v3816
          %v3823 = vadd.f32 %v3708, %v3819
          %3824 = vadd.xlane.f32.xlu0 %v3822
          %v3825 = vpop.xlane.xlu0 %3824
          %3826 = vadd.xlane.f32.xlu0 %v3823
          %v3827 = vpop.xlane.xlu0 %3826
          %v3828 = vmul.f32 %v3825, %v1029
          %v3829 = vmul.f32 %v3827, %v1029
          %v3830 = vmul.f32 %v3822, %v3822
          %v3831 = vmul.f32 %v3823, %v3823
          %3832 = vadd.xlane.f32.xlu0 %v3830
          %v3833 = vpop.xlane.xlu0 %3832
          %3834 = vadd.xlane.f32.xlu0 %v3831
          %v3835 = vpop.xlane.xlu0 %3834
          %v3836 = vmul.f32 %v3833, %v1029
          %v3837 = vmul.f32 %v3835, %v1029
          %v3838 = vmul.f32 %v3828, %v3828
          %v3839 = vmul.f32 %v3829, %v3829
          %v3840 = vsub.f32 %v3836, %v3838
          %v3841 = vsub.f32 %v3837, %v3839
          %v3842 = vmax.f32 %v3840, 0.0
          %v3843 = vmax.f32 %v3841, 0.0
          %v3844 = vsub.f32 %v3822, %v3828
          %v3845 = vsub.f32 %v3823, %v3829
          %v3846 = vadd.f32 %v3842, 1e-05
          %v3847 = vadd.f32 %v3843, 1e-05
          %v3848 = vrsqrt.pop %v3846
          %v3849 = vrsqrt.pop %v3847
          %v3850 = vmul.f32 %v3844, %v3848
          %v3851 = vmul.f32 %v3845, %v3849
          %v3852 = vlaneseq
          %v3853 = vshrl.u32 %v3852, 7
          %v3854 = vsub.s32 1, %v3853
          %v3855 = vrot.slane %v3710, %v3854
          %v3856 = vmul.f32 %v3850, %v3855
          %v3857 = vmul.f32 %v3851, %v3855
          %v3858 = vlaneseq
          %v3859 = vshrl.u32 %v3858, 7
          %v3860 = vsub.s32 2, %v3859
          %v3861 = vrot.slane %v3710, %v3860
          %v3862 = vadd.f32 %v3856, %v3861
          %v3863 = vadd.f32 %v3857, %v3861
          %v3864 = vpack.c.bf16 %v3863, %v3862
          %s3865 = scalar_lea.vmem [#allocation15], 1024
          %v3866 = vld [vmem:[%s3865] sm:$0xff]
          %v3867 = vld [vmem:[%s3865 + $0x8] sm:$0xff]
          %v3868 = vld [vmem:[%s3865 + $0x10] sm:$0xff]
          %v3869 = vld [vmem:[%s3865 + $0x18] sm:$0xff]
          %v3870 = vld [vmem:[%s3865 + $0x20] sm:$0xff]
          %v3871 = vld [vmem:[%s3865 + $0x28] sm:$0xff]
          %v3872 = vld [vmem:[%s3865 + $0x30] sm:$0xff]
          %v3873 = vld [vmem:[%s3865 + $0x38] sm:$0xff]
          %v3874 = vld [vmem:[%s3865 + $0x40] sm:$0xff]
          %v3875 = vld [vmem:[%s3865 + $0x48] sm:$0xff]
          %v3876 = vld [vmem:[%s3865 + $0x50] sm:$0xff]
          %v3877 = vld [vmem:[%s3865 + $0x58] sm:$0xff]
          %v3878 = vld [vmem:[%s3865 + $0x60] sm:$0xff]
          %v3879 = vld [vmem:[%s3865 + $0x68] sm:$0xff]
          %v3880 = vld [vmem:[%s3865 + $0x70] sm:$0xff]
          %v3881 = vld [vmem:[%s3865 + $0x78] sm:$0xff]
          %v3882 = vld [vmem:[%s3865 + $0x80] sm:$0xff]
          %v3883 = vld [vmem:[%s3865 + $0x88] sm:$0xff]
          %v3884 = vld [vmem:[%s3865 + $0x90] sm:$0xff]
          %v3885 = vld [vmem:[%s3865 + $0x98] sm:$0xff]
          %v3886 = vld [vmem:[%s3865 + $0xa0] sm:$0xff]
          %v3887 = vld [vmem:[%s3865 + $0xa8] sm:$0xff]
          %v3888 = vld [vmem:[%s3865 + $0xb0] sm:$0xff]
          %v3889 = vld [vmem:[%s3865 + $0xb8] sm:$0xff]
          %v3890 = vld [vmem:[%s3865 + $0xc0] sm:$0xff]
          %v3891 = vld [vmem:[%s3865 + $0xc8] sm:$0xff]
          %v3892 = vld [vmem:[%s3865 + $0xd0] sm:$0xff]
          %v3893 = vld [vmem:[%s3865 + $0xd8] sm:$0xff]
          %v3894 = vld [vmem:[%s3865 + $0xe0] sm:$0xff]
          %v3895 = vld [vmem:[%s3865 + $0xe8] sm:$0xff]
          %v3896 = vld [vmem:[%s3865 + $0xf0] sm:$0xff]
          %v3897 = vld [vmem:[%s3865 + $0xf8] sm:$0xff]
          %v3898 = vld [vmem:[%s3865 + $0x100] sm:$0xff]
          %v3899 = vld [vmem:[%s3865 + $0x108] sm:$0xff]
          %v3900 = vld [vmem:[%s3865 + $0x110] sm:$0xff]
          %v3901 = vld [vmem:[%s3865 + $0x118] sm:$0xff]
          %v3902 = vld [vmem:[%s3865 + $0x120] sm:$0xff]
          %v3903 = vld [vmem:[%s3865 + $0x128] sm:$0xff]
          %v3904 = vld [vmem:[%s3865 + $0x130] sm:$0xff]
          %v3905 = vld [vmem:[%s3865 + $0x138] sm:$0xff]
          %v3906 = vld [vmem:[%s3865 + $0x140] sm:$0xff]
          %v3907 = vld [vmem:[%s3865 + $0x148] sm:$0xff]
          %v3908 = vld [vmem:[%s3865 + $0x150] sm:$0xff]
          %v3909 = vld [vmem:[%s3865 + $0x158] sm:$0xff]
          %v3910 = vld [vmem:[%s3865 + $0x160] sm:$0xff]
          %v3911 = vld [vmem:[%s3865 + $0x168] sm:$0xff]
          %v3912 = vld [vmem:[%s3865 + $0x170] sm:$0xff]
          %v3913 = vld [vmem:[%s3865 + $0x178] sm:$0xff]
          %v3914 = vld [vmem:[%s3865 + $0x180] sm:$0xff]
          %v3915 = vld [vmem:[%s3865 + $0x188] sm:$0xff]
          %v3916 = vld [vmem:[%s3865 + $0x190] sm:$0xff]
          %v3917 = vld [vmem:[%s3865 + $0x198] sm:$0xff]
          %v3918 = vld [vmem:[%s3865 + $0x1a0] sm:$0xff]
          %v3919 = vld [vmem:[%s3865 + $0x1a8] sm:$0xff]
          %v3920 = vld [vmem:[%s3865 + $0x1b0] sm:$0xff]
          %v3921 = vld [vmem:[%s3865 + $0x1b8] sm:$0xff]
          %v3922 = vld [vmem:[%s3865 + $0x1c0] sm:$0xff]
          %v3923 = vld [vmem:[%s3865 + $0x1c8] sm:$0xff]
          %v3924 = vld [vmem:[%s3865 + $0x1d0] sm:$0xff]
          %v3925 = vld [vmem:[%s3865 + $0x1d8] sm:$0xff]
          %v3926 = vld [vmem:[%s3865 + $0x1e0] sm:$0xff]
          %v3927 = vld [vmem:[%s3865 + $0x1e8] sm:$0xff]
          %v3928 = vld [vmem:[%s3865 + $0x1f0] sm:$0xff]
          %v3929 = vld [vmem:[%s3865 + $0x1f8] sm:$0xff]
          %v3930 = vld [vmem:[%s3865 + $0x200] sm:$0xff]
          %v3931 = vld [vmem:[%s3865 + $0x208] sm:$0xff]
          %v3932 = vld [vmem:[%s3865 + $0x210] sm:$0xff]
          %v3933 = vld [vmem:[%s3865 + $0x218] sm:$0xff]
          %v3934 = vld [vmem:[%s3865 + $0x220] sm:$0xff]
          %v3935 = vld [vmem:[%s3865 + $0x228] sm:$0xff]
          %v3936 = vld [vmem:[%s3865 + $0x230] sm:$0xff]
          %v3937 = vld [vmem:[%s3865 + $0x238] sm:$0xff]
          %v3938 = vld [vmem:[%s3865 + $0x240] sm:$0xff]
          %v3939 = vld [vmem:[%s3865 + $0x248] sm:$0xff]
          %v3940 = vld [vmem:[%s3865 + $0x250] sm:$0xff]
          %v3941 = vld [vmem:[%s3865 + $0x258] sm:$0xff]
          %v3942 = vld [vmem:[%s3865 + $0x260] sm:$0xff]
          %v3943 = vld [vmem:[%s3865 + $0x268] sm:$0xff]
          %v3944 = vld [vmem:[%s3865 + $0x270] sm:$0xff]
          %v3945 = vld [vmem:[%s3865 + $0x278] sm:$0xff]
          %v3946 = vld [vmem:[%s3865 + $0x280] sm:$0xff]
          %v3947 = vld [vmem:[%s3865 + $0x288] sm:$0xff]
          %v3948 = vld [vmem:[%s3865 + $0x290] sm:$0xff]
          %v3949 = vld [vmem:[%s3865 + $0x298] sm:$0xff]
          %v3950 = vld [vmem:[%s3865 + $0x2a0] sm:$0xff]
          %v3951 = vld [vmem:[%s3865 + $0x2a8] sm:$0xff]
          %v3952 = vld [vmem:[%s3865 + $0x2b0] sm:$0xff]
          %v3953 = vld [vmem:[%s3865 + $0x2b8] sm:$0xff]
          %v3954 = vld [vmem:[%s3865 + $0x2c0] sm:$0xff]
          %v3955 = vld [vmem:[%s3865 + $0x2c8] sm:$0xff]
          %v3956 = vld [vmem:[%s3865 + $0x2d0] sm:$0xff]
          %v3957 = vld [vmem:[%s3865 + $0x2d8] sm:$0xff]
          %v3958 = vld [vmem:[%s3865 + $0x2e0] sm:$0xff]
          %v3959 = vld [vmem:[%s3865 + $0x2e8] sm:$0xff]
          %v3960 = vld [vmem:[%s3865 + $0x2f0] sm:$0xff]
          %v3961 = vld [vmem:[%s3865 + $0x2f8] sm:$0xff]
          %v3962 = vld [vmem:[%s3865 + $0x300] sm:$0xff]
          %v3963 = vld [vmem:[%s3865 + $0x308] sm:$0xff]
          %v3964 = vld [vmem:[%s3865 + $0x310] sm:$0xff]
          %v3965 = vld [vmem:[%s3865 + $0x318] sm:$0xff]
          %v3966 = vld [vmem:[%s3865 + $0x320] sm:$0xff]
          %v3967 = vld [vmem:[%s3865 + $0x328] sm:$0xff]
          %v3968 = vld [vmem:[%s3865 + $0x330] sm:$0xff]
          %v3969 = vld [vmem:[%s3865 + $0x338] sm:$0xff]
          %v3970 = vld [vmem:[%s3865 + $0x340] sm:$0xff]
          %v3971 = vld [vmem:[%s3865 + $0x348] sm:$0xff]
          %v3972 = vld [vmem:[%s3865 + $0x350] sm:$0xff]
          %v3973 = vld [vmem:[%s3865 + $0x358] sm:$0xff]
          %v3974 = vld [vmem:[%s3865 + $0x360] sm:$0xff]
          %v3975 = vld [vmem:[%s3865 + $0x368] sm:$0xff]
          %v3976 = vld [vmem:[%s3865 + $0x370] sm:$0xff]
          %v3977 = vld [vmem:[%s3865 + $0x378] sm:$0xff]
          %v3978 = vld [vmem:[%s3865 + $0x380] sm:$0xff]
          %v3979 = vld [vmem:[%s3865 + $0x388] sm:$0xff]
          %v3980 = vld [vmem:[%s3865 + $0x390] sm:$0xff]
          %v3981 = vld [vmem:[%s3865 + $0x398] sm:$0xff]
          %v3982 = vld [vmem:[%s3865 + $0x3a0] sm:$0xff]
          %v3983 = vld [vmem:[%s3865 + $0x3a8] sm:$0xff]
          %v3984 = vld [vmem:[%s3865 + $0x3b0] sm:$0xff]
          %v3985 = vld [vmem:[%s3865 + $0x3b8] sm:$0xff]
          %v3986 = vld [vmem:[%s3865 + $0x3c0] sm:$0xff]
          %v3987 = vld [vmem:[%s3865 + $0x3c8] sm:$0xff]
          %v3988 = vld [vmem:[%s3865 + $0x3d0] sm:$0xff]
          %v3989 = vld [vmem:[%s3865 + $0x3d8] sm:$0xff]
          %v3990 = vld [vmem:[%s3865 + $0x3e0] sm:$0xff]
          %v3991 = vld [vmem:[%s3865 + $0x3e8] sm:$0xff]
          %v3992 = vld [vmem:[%s3865 + $0x3f0] sm:$0xff]
          %v3993 = vld [vmem:[%s3865 + $0x3f8] sm:$0xff]
          %s3994 = scalar_lea.vmem [#allocation18], 16
          %v3995 = vld [vmem:[%s3994] sm:$0xff]
          %v3996 = vld [vmem:[%s3994 + $0x8] sm:$0xff]
          %v3999 = vlaneseq
          %v4000 = vshrl.u32 %v3999, 7
          %v4001 = vsub.s32 0, %v4000
          %v4002 = vrot.slane %v3995, %v4001
          %v4003 = vlaneseq
          %v4004 = vshrl.u32 %v4003, 7
          %v4005 = vsub.s32 1, %v4004
          %v4006 = vrot.slane %v3995, %v4005
          %v4007 = vlaneseq
          %v4008 = vshrl.u32 %v4007, 7
          %v4009 = vsub.s32 2, %v4008
          %v4010 = vrot.slane %v3995, %v4009
          %v4011 = vlaneseq
          %v4012 = vshrl.u32 %v4011, 7
          %v4013 = vsub.s32 3, %v4012
          %v4014 = vrot.slane %v3995, %v4013
          %v4015 = vlaneseq
          %v4016 = vshrl.u32 %v4015, 7
          %v4017 = vsub.s32 4, %v4016
          %v4018 = vrot.slane %v3995, %v4017
          %v4019 = vlaneseq
          %v4020 = vshrl.u32 %v4019, 7
          %v4021 = vsub.s32 5, %v4020
          %v4022 = vrot.slane %v3995, %v4021
          %v4023 = vlaneseq
          %v4024 = vshrl.u32 %v4023, 7
          %v4025 = vsub.s32 6, %v4024
          %v4026 = vrot.slane %v3995, %v4025
          %v4027 = vlaneseq
          %v4028 = vshrl.u32 %v4027, 7
          %v4029 = vsub.s32 7, %v4028
          %v4030 = vrot.slane %v3995, %v4029
          %v4031 = vlaneseq
          %v4032 = vshrl.u32 %v4031, 7
          %v4033 = vsub.s32 0, %v4032
          %v4034 = vrot.slane %v3996, %v4033
          %v4035 = vlaneseq
          %v4036 = vshrl.u32 %v4035, 7
          %v4037 = vsub.s32 1, %v4036
          %v4038 = vrot.slane %v3996, %v4037
          %v4039 = vlaneseq
          %v4040 = vshrl.u32 %v4039, 7
          %v4041 = vsub.s32 2, %v4040
          %v4042 = vrot.slane %v3996, %v4041
          %v4043 = vlaneseq
          %v4044 = vshrl.u32 %v4043, 7
          %v4045 = vsub.s32 3, %v4044
          %v4046 = vrot.slane %v3996, %v4045
          %v4047 = vlaneseq
          %v4048 = vshrl.u32 %v4047, 7
          %v4049 = vsub.s32 4, %v4048
          %v4050 = vrot.slane %v3996, %v4049
          %v4051 = vlaneseq
          %v4052 = vshrl.u32 %v4051, 7
          %v4053 = vsub.s32 5, %v4052
          %v4054 = vrot.slane %v3996, %v4053
          %v4055 = vlaneseq
          %v4056 = vshrl.u32 %v4055, 7
          %v4057 = vsub.s32 6, %v4056
          %v4058 = vrot.slane %v3996, %v4057
          %v4059 = vlaneseq
          %v4060 = vshrl.u32 %v4059, 7
          %v4061 = vsub.s32 7, %v4060
          %v4062 = vrot.slane %v3996, %v4061
          %v4207 = vunpack.c.l.b16 %v3866
          %v4208 = vunpack.c.h.b16 %v3866
          %v4209 = vunpack.c.l.b16 %v3867
          %v4210 = vunpack.c.h.b16 %v3867
          %v4211 = vunpack.c.l.b16 %v3868
          %v4212 = vunpack.c.h.b16 %v3868
          %v4213 = vunpack.c.l.b16 %v3869
          %v4214 = vunpack.c.h.b16 %v3869
          %v4215 = vunpack.c.l.b16 %v3870
          %v4216 = vunpack.c.h.b16 %v3870
          %v4217 = vunpack.c.l.b16 %v3871
          %v4218 = vunpack.c.h.b16 %v3871
          %v4219 = vunpack.c.l.b16 %v3872
          %v4220 = vunpack.c.h.b16 %v3872
          %v4221 = vunpack.c.l.b16 %v3873
          %v4222 = vunpack.c.h.b16 %v3873
          %v4223 = vunpack.c.l.b16 %v3874
          %v4224 = vunpack.c.h.b16 %v3874
          %v4225 = vunpack.c.l.b16 %v3875
          %v4226 = vunpack.c.h.b16 %v3875
          %v4227 = vunpack.c.l.b16 %v3876
          %v4228 = vunpack.c.h.b16 %v3876
          %v4229 = vunpack.c.l.b16 %v3877
          %v4230 = vunpack.c.h.b16 %v3877
          %v4231 = vunpack.c.l.b16 %v3878
          %v4232 = vunpack.c.h.b16 %v3878
          %v4233 = vunpack.c.l.b16 %v3879
          %v4234 = vunpack.c.h.b16 %v3879
          %v4235 = vunpack.c.l.b16 %v3880
          %v4236 = vunpack.c.h.b16 %v3880
          %v4237 = vunpack.c.l.b16 %v3881
          %v4238 = vunpack.c.h.b16 %v3881
          %v4239 = vunpack.c.l.b16 %v3882
          %v4240 = vunpack.c.h.b16 %v3882
          %v4241 = vunpack.c.l.b16 %v3883
          %v4242 = vunpack.c.h.b16 %v3883
          %v4243 = vunpack.c.l.b16 %v3884
          %v4244 = vunpack.c.h.b16 %v3884
          %v4245 = vunpack.c.l.b16 %v3885
          %v4246 = vunpack.c.h.b16 %v3885
          %v4247 = vunpack.c.l.b16 %v3886
          %v4248 = vunpack.c.h.b16 %v3886
          %v4249 = vunpack.c.l.b16 %v3887
          %v4250 = vunpack.c.h.b16 %v3887
          %v4251 = vunpack.c.l.b16 %v3888
          %v4252 = vunpack.c.h.b16 %v3888
          %v4253 = vunpack.c.l.b16 %v3889
          %v4254 = vunpack.c.h.b16 %v3889
          %v4255 = vunpack.c.l.b16 %v3890
          %v4256 = vunpack.c.h.b16 %v3890
          %v4257 = vunpack.c.l.b16 %v3891
          %v4258 = vunpack.c.h.b16 %v3891
          %v4259 = vunpack.c.l.b16 %v3892
          %v4260 = vunpack.c.h.b16 %v3892
          %v4261 = vunpack.c.l.b16 %v3893
          %v4262 = vunpack.c.h.b16 %v3893
          %v4263 = vunpack.c.l.b16 %v3894
          %v4264 = vunpack.c.h.b16 %v3894
          %v4265 = vunpack.c.l.b16 %v3895
          %v4266 = vunpack.c.h.b16 %v3895
          %v4267 = vunpack.c.l.b16 %v3896
          %v4268 = vunpack.c.h.b16 %v3896
          %v4269 = vunpack.c.l.b16 %v3897
          %v4270 = vunpack.c.h.b16 %v3897
          %v4271 = vunpack.c.l.b16 %v3898
          %v4272 = vunpack.c.h.b16 %v3898
          %v4273 = vunpack.c.l.b16 %v3899
          %v4274 = vunpack.c.h.b16 %v3899
          %v4275 = vunpack.c.l.b16 %v3900
          %v4276 = vunpack.c.h.b16 %v3900
          %v4277 = vunpack.c.l.b16 %v3901
          %v4278 = vunpack.c.h.b16 %v3901
          %v4279 = vunpack.c.l.b16 %v3902
          %v4280 = vunpack.c.h.b16 %v3902
          %v4281 = vunpack.c.l.b16 %v3903
          %v4282 = vunpack.c.h.b16 %v3903
          %v4283 = vunpack.c.l.b16 %v3904
          %v4284 = vunpack.c.h.b16 %v3904
          %v4285 = vunpack.c.l.b16 %v3905
          %v4286 = vunpack.c.h.b16 %v3905
          %v4287 = vunpack.c.l.b16 %v3906
          %v4288 = vunpack.c.h.b16 %v3906
          %v4289 = vunpack.c.l.b16 %v3907
          %v4290 = vunpack.c.h.b16 %v3907
          %v4291 = vunpack.c.l.b16 %v3908
          %v4292 = vunpack.c.h.b16 %v3908
          %v4293 = vunpack.c.l.b16 %v3909
          %v4294 = vunpack.c.h.b16 %v3909
          %v4295 = vunpack.c.l.b16 %v3910
          %v4296 = vunpack.c.h.b16 %v3910
          %v4297 = vunpack.c.l.b16 %v3911
          %v4298 = vunpack.c.h.b16 %v3911
          %v4299 = vunpack.c.l.b16 %v3912
          %v4300 = vunpack.c.h.b16 %v3912
          %v4301 = vunpack.c.l.b16 %v3913
          %v4302 = vunpack.c.h.b16 %v3913
          %v4303 = vunpack.c.l.b16 %v3914
          %v4304 = vunpack.c.h.b16 %v3914
          %v4305 = vunpack.c.l.b16 %v3915
          %v4306 = vunpack.c.h.b16 %v3915
          %v4307 = vunpack.c.l.b16 %v3916
          %v4308 = vunpack.c.h.b16 %v3916
          %v4309 = vunpack.c.l.b16 %v3917
          %v4310 = vunpack.c.h.b16 %v3917
          %v4311 = vunpack.c.l.b16 %v3918
          %v4312 = vunpack.c.h.b16 %v3918
          %v4313 = vunpack.c.l.b16 %v3919
          %v4314 = vunpack.c.h.b16 %v3919
          %v4315 = vunpack.c.l.b16 %v3920
          %v4316 = vunpack.c.h.b16 %v3920
          %v4317 = vunpack.c.l.b16 %v3921
          %v4318 = vunpack.c.h.b16 %v3921
          %v4319 = vunpack.c.l.b16 %v3922
          %v4320 = vunpack.c.h.b16 %v3922
          %v4321 = vunpack.c.l.b16 %v3923
          %v4322 = vunpack.c.h.b16 %v3923
          %v4323 = vunpack.c.l.b16 %v3924
          %v4324 = vunpack.c.h.b16 %v3924
          %v4325 = vunpack.c.l.b16 %v3925
          %v4326 = vunpack.c.h.b16 %v3925
          %v4327 = vunpack.c.l.b16 %v3926
          %v4328 = vunpack.c.h.b16 %v3926
          %v4329 = vunpack.c.l.b16 %v3927
          %v4330 = vunpack.c.h.b16 %v3927
          %v4331 = vunpack.c.l.b16 %v3928
          %v4332 = vunpack.c.h.b16 %v3928
          %v4333 = vunpack.c.l.b16 %v3929
          %v4334 = vunpack.c.h.b16 %v3929
          %v4335 = vunpack.c.l.b16 %v3930
          %v4336 = vunpack.c.h.b16 %v3930
          %v4337 = vunpack.c.l.b16 %v3931
          %v4338 = vunpack.c.h.b16 %v3931
          %v4339 = vunpack.c.l.b16 %v3932
          %v4340 = vunpack.c.h.b16 %v3932
          %v4341 = vunpack.c.l.b16 %v3933
          %v4342 = vunpack.c.h.b16 %v3933
          %v4343 = vunpack.c.l.b16 %v3934
          %v4344 = vunpack.c.h.b16 %v3934
          %v4345 = vunpack.c.l.b16 %v3935
          %v4346 = vunpack.c.h.b16 %v3935
          %v4347 = vunpack.c.l.b16 %v3936
          %v4348 = vunpack.c.h.b16 %v3936
          %v4349 = vunpack.c.l.b16 %v3937
          %v4350 = vunpack.c.h.b16 %v3937
          %v4351 = vunpack.c.l.b16 %v3938
          %v4352 = vunpack.c.h.b16 %v3938
          %v4353 = vunpack.c.l.b16 %v3939
          %v4354 = vunpack.c.h.b16 %v3939
          %v4355 = vunpack.c.l.b16 %v3940
          %v4356 = vunpack.c.h.b16 %v3940
          %v4357 = vunpack.c.l.b16 %v3941
          %v4358 = vunpack.c.h.b16 %v3941
          %v4359 = vunpack.c.l.b16 %v3942
          %v4360 = vunpack.c.h.b16 %v3942
          %v4361 = vunpack.c.l.b16 %v3943
          %v4362 = vunpack.c.h.b16 %v3943
          %v4363 = vunpack.c.l.b16 %v3944
          %v4364 = vunpack.c.h.b16 %v3944
          %v4365 = vunpack.c.l.b16 %v3945
          %v4366 = vunpack.c.h.b16 %v3945
          %v4367 = vunpack.c.l.b16 %v3946
          %v4368 = vunpack.c.h.b16 %v3946
          %v4369 = vunpack.c.l.b16 %v3947
          %v4370 = vunpack.c.h.b16 %v3947
          %v4371 = vunpack.c.l.b16 %v3948
          %v4372 = vunpack.c.h.b16 %v3948
          %v4373 = vunpack.c.l.b16 %v3949
          %v4374 = vunpack.c.h.b16 %v3949
          %v4375 = vunpack.c.l.b16 %v3950
          %v4376 = vunpack.c.h.b16 %v3950
          %v4377 = vunpack.c.l.b16 %v3951
          %v4378 = vunpack.c.h.b16 %v3951
          %v4379 = vunpack.c.l.b16 %v3952
          %v4380 = vunpack.c.h.b16 %v3952
          %v4381 = vunpack.c.l.b16 %v3953
          %v4382 = vunpack.c.h.b16 %v3953
          %v4383 = vunpack.c.l.b16 %v3954
          %v4384 = vunpack.c.h.b16 %v3954
          %v4385 = vunpack.c.l.b16 %v3955
          %v4386 = vunpack.c.h.b16 %v3955
          %v4387 = vunpack.c.l.b16 %v3956
          %v4388 = vunpack.c.h.b16 %v3956
          %v4389 = vunpack.c.l.b16 %v3957
          %v4390 = vunpack.c.h.b16 %v3957
          %v4391 = vunpack.c.l.b16 %v3958
          %v4392 = vunpack.c.h.b16 %v3958
          %v4393 = vunpack.c.l.b16 %v3959
          %v4394 = vunpack.c.h.b16 %v3959
          %v4395 = vunpack.c.l.b16 %v3960
          %v4396 = vunpack.c.h.b16 %v3960
          %v4397 = vunpack.c.l.b16 %v3961
          %v4398 = vunpack.c.h.b16 %v3961
          %v4399 = vunpack.c.l.b16 %v3962
          %v4400 = vunpack.c.h.b16 %v3962
          %v4401 = vunpack.c.l.b16 %v3963
          %v4402 = vunpack.c.h.b16 %v3963
          %v4403 = vunpack.c.l.b16 %v3964
          %v4404 = vunpack.c.h.b16 %v3964
          %v4405 = vunpack.c.l.b16 %v3965
          %v4406 = vunpack.c.h.b16 %v3965
          %v4407 = vunpack.c.l.b16 %v3966
          %v4408 = vunpack.c.h.b16 %v3966
          %v4409 = vunpack.c.l.b16 %v3967
          %v4410 = vunpack.c.h.b16 %v3967
          %v4411 = vunpack.c.l.b16 %v3968
          %v4412 = vunpack.c.h.b16 %v3968
          %v4413 = vunpack.c.l.b16 %v3969
          %v4414 = vunpack.c.h.b16 %v3969
          %v4415 = vunpack.c.l.b16 %v3970
          %v4416 = vunpack.c.h.b16 %v3970
          %v4417 = vunpack.c.l.b16 %v3971
          %v4418 = vunpack.c.h.b16 %v3971
          %v4419 = vunpack.c.l.b16 %v3972
          %v4420 = vunpack.c.h.b16 %v3972
          %v4421 = vunpack.c.l.b16 %v3973
          %v4422 = vunpack.c.h.b16 %v3973
          %v4423 = vunpack.c.l.b16 %v3974
          %v4424 = vunpack.c.h.b16 %v3974
          %v4425 = vunpack.c.l.b16 %v3975
          %v4426 = vunpack.c.h.b16 %v3975
          %v4427 = vunpack.c.l.b16 %v3976
          %v4428 = vunpack.c.h.b16 %v3976
          %v4429 = vunpack.c.l.b16 %v3977
          %v4430 = vunpack.c.h.b16 %v3977
          %v4431 = vunpack.c.l.b16 %v3978
          %v4432 = vunpack.c.h.b16 %v3978
          %v4433 = vunpack.c.l.b16 %v3979
          %v4434 = vunpack.c.h.b16 %v3979
          %v4435 = vunpack.c.l.b16 %v3980
          %v4436 = vunpack.c.h.b16 %v3980
          %v4437 = vunpack.c.l.b16 %v3981
          %v4438 = vunpack.c.h.b16 %v3981
          %v4439 = vunpack.c.l.b16 %v3982
          %v4440 = vunpack.c.h.b16 %v3982
          %v4441 = vunpack.c.l.b16 %v3983
          %v4442 = vunpack.c.h.b16 %v3983
          %v4443 = vunpack.c.l.b16 %v3984
          %v4444 = vunpack.c.h.b16 %v3984
          %v4445 = vunpack.c.l.b16 %v3985
          %v4446 = vunpack.c.h.b16 %v3985
          %v4447 = vunpack.c.l.b16 %v3986
          %v4448 = vunpack.c.h.b16 %v3986
          %v4449 = vunpack.c.l.b16 %v3987
          %v4450 = vunpack.c.h.b16 %v3987
          %v4451 = vunpack.c.l.b16 %v3988
          %v4452 = vunpack.c.h.b16 %v3988
          %v4453 = vunpack.c.l.b16 %v3989
          %v4454 = vunpack.c.h.b16 %v3989
          %v4455 = vunpack.c.l.b16 %v3990
          %v4456 = vunpack.c.h.b16 %v3990
          %v4457 = vunpack.c.l.b16 %v3991
          %v4458 = vunpack.c.h.b16 %v3991
          %v4459 = vunpack.c.l.b16 %v3992
          %v4460 = vunpack.c.h.b16 %v3992
          %v4461 = vunpack.c.l.b16 %v3993
          %v4462 = vunpack.c.h.b16 %v3993
          %v4463 = vpack.c.b16 %v4223, %v4207
          %v4464 = vpack.c.b16 %v4224, %v4208
          %v4465 = vpack.c.b16 %v4225, %v4209
          %v4466 = vpack.c.b16 %v4226, %v4210
          %v4467 = vpack.c.b16 %v4227, %v4211
          %v4468 = vpack.c.b16 %v4228, %v4212
          %v4469 = vpack.c.b16 %v4229, %v4213
          %v4470 = vpack.c.b16 %v4230, %v4214
          %v4471 = vpack.c.b16 %v4231, %v4215
          %v4472 = vpack.c.b16 %v4232, %v4216
          %v4473 = vpack.c.b16 %v4233, %v4217
          %v4474 = vpack.c.b16 %v4234, %v4218
          %v4475 = vpack.c.b16 %v4235, %v4219
          %v4476 = vpack.c.b16 %v4236, %v4220
          %v4477 = vpack.c.b16 %v4237, %v4221
          %v4478 = vpack.c.b16 %v4238, %v4222
          %v4479 = vpack.c.b16 %v4255, %v4239
          %v4480 = vpack.c.b16 %v4256, %v4240
          %v4481 = vpack.c.b16 %v4257, %v4241
          %v4482 = vpack.c.b16 %v4258, %v4242
          %v4483 = vpack.c.b16 %v4259, %v4243
          %v4484 = vpack.c.b16 %v4260, %v4244
          %v4485 = vpack.c.b16 %v4261, %v4245
          %v4486 = vpack.c.b16 %v4262, %v4246
          %v4487 = vpack.c.b16 %v4263, %v4247
          %v4488 = vpack.c.b16 %v4264, %v4248
          %v4489 = vpack.c.b16 %v4265, %v4249
          %v4490 = vpack.c.b16 %v4266, %v4250
          %v4491 = vpack.c.b16 %v4267, %v4251
          %v4492 = vpack.c.b16 %v4268, %v4252
          %v4493 = vpack.c.b16 %v4269, %v4253
          %v4494 = vpack.c.b16 %v4270, %v4254
          %v4495 = vpack.c.b16 %v4287, %v4271
          %v4496 = vpack.c.b16 %v4288, %v4272
          %v4497 = vpack.c.b16 %v4289, %v4273
          %v4498 = vpack.c.b16 %v4290, %v4274
          %v4499 = vpack.c.b16 %v4291, %v4275
          %v4500 = vpack.c.b16 %v4292, %v4276
          %v4501 = vpack.c.b16 %v4293, %v4277
          %v4502 = vpack.c.b16 %v4294, %v4278
          %v4503 = vpack.c.b16 %v4295, %v4279
          %v4504 = vpack.c.b16 %v4296, %v4280
          %v4505 = vpack.c.b16 %v4297, %v4281
          %v4506 = vpack.c.b16 %v4298, %v4282
          %v4507 = vpack.c.b16 %v4299, %v4283
          %v4508 = vpack.c.b16 %v4300, %v4284
          %v4509 = vpack.c.b16 %v4301, %v4285
          %v4510 = vpack.c.b16 %v4302, %v4286
          %v4511 = vpack.c.b16 %v4319, %v4303
          %v4512 = vpack.c.b16 %v4320, %v4304
          %v4513 = vpack.c.b16 %v4321, %v4305
          %v4514 = vpack.c.b16 %v4322, %v4306
          %v4515 = vpack.c.b16 %v4323, %v4307
          %v4516 = vpack.c.b16 %v4324, %v4308
          %v4517 = vpack.c.b16 %v4325, %v4309
          %v4518 = vpack.c.b16 %v4326, %v4310
          %v4519 = vpack.c.b16 %v4327, %v4311
          %v4520 = vpack.c.b16 %v4328, %v4312
          %v4521 = vpack.c.b16 %v4329, %v4313
          %v4522 = vpack.c.b16 %v4330, %v4314
          %v4523 = vpack.c.b16 %v4331, %v4315
          %v4524 = vpack.c.b16 %v4332, %v4316
          %v4525 = vpack.c.b16 %v4333, %v4317
          %v4526 = vpack.c.b16 %v4334, %v4318
          %v4527 = vpack.c.b16 %v4351, %v4335
          %v4528 = vpack.c.b16 %v4352, %v4336
          %v4529 = vpack.c.b16 %v4353, %v4337
          %v4530 = vpack.c.b16 %v4354, %v4338
          %v4531 = vpack.c.b16 %v4355, %v4339
          %v4532 = vpack.c.b16 %v4356, %v4340
          %v4533 = vpack.c.b16 %v4357, %v4341
          %v4534 = vpack.c.b16 %v4358, %v4342
          %v4535 = vpack.c.b16 %v4359, %v4343
          %v4536 = vpack.c.b16 %v4360, %v4344
          %v4537 = vpack.c.b16 %v4361, %v4345
          %v4538 = vpack.c.b16 %v4362, %v4346
          %v4539 = vpack.c.b16 %v4363, %v4347
          %v4540 = vpack.c.b16 %v4364, %v4348
          %v4541 = vpack.c.b16 %v4365, %v4349
          %v4542 = vpack.c.b16 %v4366, %v4350
          %v4543 = vpack.c.b16 %v4383, %v4367
          %v4544 = vpack.c.b16 %v4384, %v4368
          %v4545 = vpack.c.b16 %v4385, %v4369
          %v4546 = vpack.c.b16 %v4386, %v4370
          %v4547 = vpack.c.b16 %v4387, %v4371
          %v4548 = vpack.c.b16 %v4388, %v4372
          %v4549 = vpack.c.b16 %v4389, %v4373
          %v4550 = vpack.c.b16 %v4390, %v4374
          %v4551 = vpack.c.b16 %v4391, %v4375
          %v4552 = vpack.c.b16 %v4392, %v4376
          %v4553 = vpack.c.b16 %v4393, %v4377
          %v4554 = vpack.c.b16 %v4394, %v4378
          %v4555 = vpack.c.b16 %v4395, %v4379
          %v4556 = vpack.c.b16 %v4396, %v4380
          %v4557 = vpack.c.b16 %v4397, %v4381
          %v4558 = vpack.c.b16 %v4398, %v4382
          %v4559 = vpack.c.b16 %v4415, %v4399
          %v4560 = vpack.c.b16 %v4416, %v4400
          %v4561 = vpack.c.b16 %v4417, %v4401
          %v4562 = vpack.c.b16 %v4418, %v4402
          %v4563 = vpack.c.b16 %v4419, %v4403
          %v4564 = vpack.c.b16 %v4420, %v4404
          %v4565 = vpack.c.b16 %v4421, %v4405
          %v4566 = vpack.c.b16 %v4422, %v4406
          %v4567 = vpack.c.b16 %v4423, %v4407
          %v4568 = vpack.c.b16 %v4424, %v4408
          %v4569 = vpack.c.b16 %v4425, %v4409
          %v4570 = vpack.c.b16 %v4426, %v4410
          %v4571 = vpack.c.b16 %v4427, %v4411
          %v4572 = vpack.c.b16 %v4428, %v4412
          %v4573 = vpack.c.b16 %v4429, %v4413
          %v4574 = vpack.c.b16 %v4430, %v4414
          %v4575 = vpack.c.b16 %v4447, %v4431
          %v4576 = vpack.c.b16 %v4448, %v4432
          %v4577 = vpack.c.b16 %v4449, %v4433
          %v4578 = vpack.c.b16 %v4450, %v4434
          %v4579 = vpack.c.b16 %v4451, %v4435
          %v4580 = vpack.c.b16 %v4452, %v4436
          %v4581 = vpack.c.b16 %v4453, %v4437
          %v4582 = vpack.c.b16 %v4454, %v4438
          %v4583 = vpack.c.b16 %v4455, %v4439
          %v4584 = vpack.c.b16 %v4456, %v4440
          %v4585 = vpack.c.b16 %v4457, %v4441
          %v4586 = vpack.c.b16 %v4458, %v4442
          %v4587 = vpack.c.b16 %v4459, %v4443
          %v4588 = vpack.c.b16 %v4460, %v4444
          %v4589 = vpack.c.b16 %v4461, %v4445
          %v4590 = vpack.c.b16 %v4462, %v4446
          %4719 = vmatprep.subr.bf16.mxu0 %v4464
          %4720 = vmatpush1.bf16.msra.mxu0 %v4463
          %4721 = vmatprep.subr.bf16.mxu0 %v4480
          %4722 = vmatpush1.bf16.msra.mxu0 %v4479
          %4723 = vmatprep.subr.bf16.mxu0 %v4496
          %4724 = vmatpush1.bf16.msra.mxu0 %v4495
          %4725 = vmatprep.subr.bf16.mxu0 %v4512
          %4726 = vmatpush1.bf16.msra.mxu0 %v4511
          %4727 = vmatprep.subr.bf16.mxu0 %v4528
          %4728 = vmatpush1.bf16.msra.mxu0 %v4527
          %4729 = vmatprep.subr.bf16.mxu0 %v4544
          %4730 = vmatpush1.bf16.msra.mxu0 %v4543
          %4731 = vmatprep.subr.bf16.mxu0 %v4560
          %4732 = vmatpush1.bf16.msra.mxu0 %v4559
          %4733 = vmatprep.subr.bf16.mxu0 %v4576
          %4734 = vmatpush1.bf16.msra.mxu0 %v4575
          %4735 = vmatprep.subr.bf16.mxu0 0
          %4736 = vmatpush1.bf16.msra.mxu0 0
          %4737 = vmatprep.subr.bf16.mxu0 0
          %4738 = vmatpush1.bf16.msra.mxu0 0
          %4739 = vmatprep.subr.bf16.mxu0 0
          %4740 = vmatpush1.bf16.msra.mxu0 0
          %4741 = vmatprep.subr.bf16.mxu0 0
          %4742 = vmatpush1.bf16.msra.mxu0 0
          %4743 = vmatprep.subr.bf16.mxu0 0
          %4744 = vmatpush1.bf16.msra.mxu0 0
          %4745 = vmatprep.subr.bf16.mxu0 0
          %4746 = vmatpush1.bf16.msra.mxu0 0
          %4747 = vmatprep.subr.bf16.mxu0 0
          %4748 = vmatpush1.bf16.msra.mxu0 0
          %4749 = vmatprep.subr.bf16.mxu0 0
          %4750 = vmatpush1.bf16.msra.mxu0 0
          %4751 = vmatprep.mubr.bf16.mxu0 0
          %4752 = vmatmul.mubr.bf16.gmra.mrb[0].mxu0 %v3864
          %v4753 = vpop.f32.mrb[0].mxu0
          %v4754 = vadd.f32 %v4002, %v4753
          %v4755 = vpop.f32.mrb[0].mxu0
          %v4756 = vadd.f32 %v4006, %v4755
          %v4757 = vpop.f32.mrb[0].mxu0
          %v4758 = vadd.f32 %v4002, %v4757
          %v4759 = vpop.f32.mrb[0].mxu0
          %v4760 = vadd.f32 %v4006, %v4759
          %4761 = vdwg.mxu0
          %4762 = vmatprep.subr.bf16.mxu0 %v4466
          %4763 = vmatpush1.bf16.msra.mxu0 %v4465
          %4764 = vmatprep.subr.bf16.mxu0 %v4482
          %4765 = vmatpush1.bf16.msra.mxu0 %v4481
          %4766 = vmatprep.subr.bf16.mxu0 %v4498
          %4767 = vmatpush1.bf16.msra.mxu0 %v4497
          %4768 = vmatprep.subr.bf16.mxu0 %v4514
          %4769 = vmatpush1.bf16.msra.mxu0 %v4513
          %4770 = vmatprep.subr.bf16.mxu0 %v4530
          %4771 = vmatpush1.bf16.msra.mxu0 %v4529
          %4772 = vmatprep.subr.bf16.mxu0 %v4546
          %4773 = vmatpush1.bf16.msra.mxu0 %v4545
          %4774 = vmatprep.subr.bf16.mxu0 %v4562
          %4775 = vmatpush1.bf16.msra.mxu0 %v4561
          %4776 = vmatprep.subr.bf16.mxu0 %v4578
          %4777 = vmatpush1.bf16.msra.mxu0 %v4577
          %4778 = vmatprep.subr.bf16.mxu0 0
          %4779 = vmatpush1.bf16.msra.mxu0 0
          %4780 = vmatprep.subr.bf16.mxu0 0
          %4781 = vmatpush1.bf16.msra.mxu0 0
          %4782 = vmatprep.subr.bf16.mxu0 0
          %4783 = vmatpush1.bf16.msra.mxu0 0
          %4784 = vmatprep.subr.bf16.mxu0 0
          %4785 = vmatpush1.bf16.msra.mxu0 0
          %4786 = vmatprep.subr.bf16.mxu0 0
          %4787 = vmatpush1.bf16.msra.mxu0 0
          %4788 = vmatprep.subr.bf16.mxu0 0
          %4789 = vmatpush1.bf16.msra.mxu0 0
          %4790 = vmatprep.subr.bf16.mxu0 0
          %4791 = vmatpush1.bf16.msra.mxu0 0
          %4792 = vmatprep.subr.bf16.mxu0 0
          %4793 = vmatpush1.bf16.msra.mxu0 0
          %4794 = vmatprep.mubr.bf16.mxu0 0
          %4795 = vmatmul.mubr.bf16.gmra.mrb[0].mxu0 %v3864
          %v4796 = vpop.f32.mrb[0].mxu0
          %v4797 = vadd.f32 %v4010, %v4796
          %v4798 = vpop.f32.mrb[0].mxu0
          %v4799 = vadd.f32 %v4014, %v4798
          %v4800 = vpop.f32.mrb[0].mxu0
          %v4801 = vadd.f32 %v4010, %v4800
          %v4802 = vpop.f32.mrb[0].mxu0
          %v4803 = vadd.f32 %v4014, %v4802
          %4804 = vdwg.mxu0
          %4805 = vmatprep.subr.bf16.mxu0 %v4468
          %4806 = vmatpush1.bf16.msra.mxu0 %v4467
          %4807 = vmatprep.subr.bf16.mxu0 %v4484
          %4808 = vmatpush1.bf16.msra.mxu0 %v4483
          %4809 = vmatprep.subr.bf16.mxu0 %v4500
          %4810 = vmatpush1.bf16.msra.mxu0 %v4499
          %4811 = vmatprep.subr.bf16.mxu0 %v4516
          %4812 = vmatpush1.bf16.msra.mxu0 %v4515
          %4813 = vmatprep.subr.bf16.mxu0 %v4532
          %4814 = vmatpush1.bf16.msra.mxu0 %v4531
          %4815 = vmatprep.subr.bf16.mxu0 %v4548
          %4816 = vmatpush1.bf16.msra.mxu0 %v4547
          %4817 = vmatprep.subr.bf16.mxu0 %v4564
          %4818 = vmatpush1.bf16.msra.mxu0 %v4563
          %4819 = vmatprep.subr.bf16.mxu0 %v4580
          %4820 = vmatpush1.bf16.msra.mxu0 %v4579
          %4821 = vmatprep.subr.bf16.mxu0 0
          %4822 = vmatpush1.bf16.msra.mxu0 0
          %4823 = vmatprep.subr.bf16.mxu0 0
          %4824 = vmatpush1.bf16.msra.mxu0 0
          %4825 = vmatprep.subr.bf16.mxu0 0
          %4826 = vmatpush1.bf16.msra.mxu0 0
          %4827 = vmatprep.subr.bf16.mxu0 0
          %4828 = vmatpush1.bf16.msra.mxu0 0
          %4829 = vmatprep.subr.bf16.mxu0 0
          %4830 = vmatpush1.bf16.msra.mxu0 0
          %4831 = vmatprep.subr.bf16.mxu0 0
          %4832 = vmatpush1.bf16.msra.mxu0 0
          %4833 = vmatprep.subr.bf16.mxu0 0
          %4834 = vmatpush1.bf16.msra.mxu0 0
          %4835 = vmatprep.subr.bf16.mxu0 0
          %4836 = vmatpush1.bf16.msra.mxu0 0
          %4837 = vmatprep.mubr.bf16.mxu0 0
          %4838 = vmatmul.mubr.bf16.gmra.mrb[0].mxu0 %v3864
          %v4839 = vpop.f32.mrb[0].mxu0
          %v4840 = vadd.f32 %v4018, %v4839
          %v4841 = vpop.f32.mrb[0].mxu0
          %v4842 = vadd.f32 %v4022, %v4841
          %v4843 = vpop.f32.mrb[0].mxu0
          %v4844 = vadd.f32 %v4018, %v4843
          %v4845 = vpop.f32.mrb[0].mxu0
          %v4846 = vadd.f32 %v4022, %v4845
          %4847 = vdwg.mxu0
          %4848 = vmatprep.subr.bf16.mxu0 %v4470
          %4849 = vmatpush1.bf16.msra.mxu0 %v4469
          %4850 = vmatprep.subr.bf16.mxu0 %v4486
          %4851 = vmatpush1.bf16.msra.mxu0 %v4485
          %4852 = vmatprep.subr.bf16.mxu0 %v4502
          %4853 = vmatpush1.bf16.msra.mxu0 %v4501
          %4854 = vmatprep.subr.bf16.mxu0 %v4518
          %4855 = vmatpush1.bf16.msra.mxu0 %v4517
          %4856 = vmatprep.subr.bf16.mxu0 %v4534
          %4857 = vmatpush1.bf16.msra.mxu0 %v4533
          %4858 = vmatprep.subr.bf16.mxu0 %v4550
          %4859 = vmatpush1.bf16.msra.mxu0 %v4549
          %4860 = vmatprep.subr.bf16.mxu0 %v4566
          %4861 = vmatpush1.bf16.msra.mxu0 %v4565
          %4862 = vmatprep.subr.bf16.mxu0 %v4582
          %4863 = vmatpush1.bf16.msra.mxu0 %v4581
          %4864 = vmatprep.subr.bf16.mxu0 0
          %4865 = vmatpush1.bf16.msra.mxu0 0
          %4866 = vmatprep.subr.bf16.mxu0 0
          %4867 = vmatpush1.bf16.msra.mxu0 0
          %4868 = vmatprep.subr.bf16.mxu0 0
          %4869 = vmatpush1.bf16.msra.mxu0 0
          %4870 = vmatprep.subr.bf16.mxu0 0
          %4871 = vmatpush1.bf16.msra.mxu0 0
          %4872 = vmatprep.subr.bf16.mxu0 0
          %4873 = vmatpush1.bf16.msra.mxu0 0
          %4874 = vmatprep.subr.bf16.mxu0 0
          %4875 = vmatpush1.bf16.msra.mxu0 0
          %4876 = vmatprep.subr.bf16.mxu0 0
          %4877 = vmatpush1.bf16.msra.mxu0 0
          %4878 = vmatprep.subr.bf16.mxu0 0
          %4879 = vmatpush1.bf16.msra.mxu0 0
          %4880 = vmatprep.mubr.bf16.mxu0 0
          %4881 = vmatmul.mubr.bf16.gmra.mrb[0].mxu0 %v3864
          %v4882 = vpop.f32.mrb[0].mxu0
          %v4883 = vadd.f32 %v4026, %v4882
          %v4884 = vpop.f32.mrb[0].mxu0
          %v4885 = vadd.f32 %v4030, %v4884
          %v4886 = vpop.f32.mrb[0].mxu0
          %v4887 = vadd.f32 %v4026, %v4886
          %v4888 = vpop.f32.mrb[0].mxu0
          %v4889 = vadd.f32 %v4030, %v4888
          %4890 = vdwg.mxu0
          %4891 = vmatprep.subr.bf16.mxu0 %v4472
          %4892 = vmatpush1.bf16.msra.mxu0 %v4471
          %4893 = vmatprep.subr.bf16.mxu0 %v4488
          %4894 = vmatpush1.bf16.msra.mxu0 %v4487
          %4895 = vmatprep.subr.bf16.mxu0 %v4504
          %4896 = vmatpush1.bf16.msra.mxu0 %v4503
          %4897 = vmatprep.subr.bf16.mxu0 %v4520
          %4898 = vmatpush1.bf16.msra.mxu0 %v4519
          %4899 = vmatprep.subr.bf16.mxu0 %v4536
          %4900 = vmatpush1.bf16.msra.mxu0 %v4535
          %4901 = vmatprep.subr.bf16.mxu0 %v4552
          %4902 = vmatpush1.bf16.msra.mxu0 %v4551
          %4903 = vmatprep.subr.bf16.mxu0 %v4568
          %4904 = vmatpush1.bf16.msra.mxu0 %v4567
          %4905 = vmatprep.subr.bf16.mxu0 %v4584
          %4906 = vmatpush1.bf16.msra.mxu0 %v4583
          %4907 = vmatprep.subr.bf16.mxu0 0
          %4908 = vmatpush1.bf16.msra.mxu0 0
          %4909 = vmatprep.subr.bf16.mxu0 0
          %4910 = vmatpush1.bf16.msra.mxu0 0
          %4911 = vmatprep.subr.bf16.mxu0 0
          %4912 = vmatpush1.bf16.msra.mxu0 0
          %4913 = vmatprep.subr.bf16.mxu0 0
          %4914 = vmatpush1.bf16.msra.mxu0 0
          %4915 = vmatprep.subr.bf16.mxu0 0
          %4916 = vmatpush1.bf16.msra.mxu0 0
          %4917 = vmatprep.subr.bf16.mxu0 0
          %4918 = vmatpush1.bf16.msra.mxu0 0
          %4919 = vmatprep.subr.bf16.mxu0 0
          %4920 = vmatpush1.bf16.msra.mxu0 0
          %4921 = vmatprep.subr.bf16.mxu0 0
          %4922 = vmatpush1.bf16.msra.mxu0 0
          %4923 = vmatprep.mubr.bf16.mxu0 0
          %4924 = vmatmul.mubr.bf16.gmra.mrb[0].mxu0 %v3864
          %v4925 = vpop.f32.mrb[0].mxu0
          %v4926 = vadd.f32 %v4034, %v4925
          %v4927 = vpop.f32.mrb[0].mxu0
          %v4928 = vadd.f32 %v4038, %v4927
          %v4929 = vpop.f32.mrb[0].mxu0
          %v4930 = vadd.f32 %v4034, %v4929
          %v4931 = vpop.f32.mrb[0].mxu0
          %v4932 = vadd.f32 %v4038, %v4931
          %4933 = vdwg.mxu0
          %4934 = vmatprep.subr.bf16.mxu0 %v4474
          %4935 = vmatpush1.bf16.msra.mxu0 %v4473
          %4936 = vmatprep.subr.bf16.mxu0 %v4490
          %4937 = vmatpush1.bf16.msra.mxu0 %v4489
          %4938 = vmatprep.subr.bf16.mxu0 %v4506
          %4939 = vmatpush1.bf16.msra.mxu0 %v4505
          %4940 = vmatprep.subr.bf16.mxu0 %v4522
          %4941 = vmatpush1.bf16.msra.mxu0 %v4521
          %4942 = vmatprep.subr.bf16.mxu0 %v4538
          %4943 = vmatpush1.bf16.msra.mxu0 %v4537
          %4944 = vmatprep.subr.bf16.mxu0 %v4554
          %4945 = vmatpush1.bf16.msra.mxu0 %v4553
          %4946 = vmatprep.subr.bf16.mxu0 %v4570
          %4947 = vmatpush1.bf16.msra.mxu0 %v4569
          %4948 = vmatprep.subr.bf16.mxu0 %v4586
          %4949 = vmatpush1.bf16.msra.mxu0 %v4585
          %4950 = vmatprep.subr.bf16.mxu0 0
          %4951 = vmatpush1.bf16.msra.mxu0 0
          %4952 = vmatprep.subr.bf16.mxu0 0
          %4953 = vmatpush1.bf16.msra.mxu0 0
          %4954 = vmatprep.subr.bf16.mxu0 0
          %4955 = vmatpush1.bf16.msra.mxu0 0
          %4956 = vmatprep.subr.bf16.mxu0 0
          %4957 = vmatpush1.bf16.msra.mxu0 0
          %4958 = vmatprep.subr.bf16.mxu0 0
          %4959 = vmatpush1.bf16.msra.mxu0 0
          %4960 = vmatprep.subr.bf16.mxu0 0
          %4961 = vmatpush1.bf16.msra.mxu0 0
          %4962 = vmatprep.subr.bf16.mxu0 0
          %4963 = vmatpush1.bf16.msra.mxu0 0
          %4964 = vmatprep.subr.bf16.mxu0 0
          %4965 = vmatpush1.bf16.msra.mxu0 0
          %4966 = vmatprep.mubr.bf16.mxu0 0
          %4967 = vmatmul.mubr.bf16.gmra.mrb[0].mxu0 %v3864
          %v4968 = vpop.f32.mrb[0].mxu0
          %v4969 = vadd.f32 %v4042, %v4968
          %v4970 = vpop.f32.mrb[0].mxu0
          %v4971 = vadd.f32 %v4046, %v4970
          %v4972 = vpop.f32.mrb[0].mxu0
          %v4973 = vadd.f32 %v4042, %v4972
          %v4974 = vpop.f32.mrb[0].mxu0
          %v4975 = vadd.f32 %v4046, %v4974
          %4976 = vdwg.mxu0
          %4977 = vmatprep.subr.bf16.mxu0 %v4476
          %4978 = vmatpush1.bf16.msra.mxu0 %v4475
          %4979 = vmatprep.subr.bf16.mxu0 %v4492
          %4980 = vmatpush1.bf16.msra.mxu0 %v4491
          %4981 = vmatprep.subr.bf16.mxu0 %v4508
          %4982 = vmatpush1.bf16.msra.mxu0 %v4507
          %4983 = vmatprep.subr.bf16.mxu0 %v4524
          %4984 = vmatpush1.bf16.msra.mxu0 %v4523
          %4985 = vmatprep.subr.bf16.mxu0 %v4540
          %4986 = vmatpush1.bf16.msra.mxu0 %v4539
          %4987 = vmatprep.subr.bf16.mxu0 %v4556
          %4988 = vmatpush1.bf16.msra.mxu0 %v4555
          %4989 = vmatprep.subr.bf16.mxu0 %v4572
          %4990 = vmatpush1.bf16.msra.mxu0 %v4571
          %4991 = vmatprep.subr.bf16.mxu0 %v4588
          %4992 = vmatpush1.bf16.msra.mxu0 %v4587
          %4993 = vmatprep.subr.bf16.mxu0 0
          %4994 = vmatpush1.bf16.msra.mxu0 0
          %4995 = vmatprep.subr.bf16.mxu0 0
          %4996 = vmatpush1.bf16.msra.mxu0 0
          %4997 = vmatprep.subr.bf16.mxu0 0
          %4998 = vmatpush1.bf16.msra.mxu0 0
          %4999 = vmatprep.subr.bf16.mxu0 0
          %5000 = vmatpush1.bf16.msra.mxu0 0
          %5001 = vmatprep.subr.bf16.mxu0 0
          %5002 = vmatpush1.bf16.msra.mxu0 0
          %5003 = vmatprep.subr.bf16.mxu0 0
          %5004 = vmatpush1.bf16.msra.mxu0 0
          %5005 = vmatprep.subr.bf16.mxu0 0
          %5006 = vmatpush1.bf16.msra.mxu0 0
          %5007 = vmatprep.subr.bf16.mxu0 0
          %5008 = vmatpush1.bf16.msra.mxu0 0
          %5009 = vmatprep.mubr.bf16.mxu0 0
          %5010 = vmatmul.mubr.bf16.gmra.mrb[0].mxu0 %v3864
          %v5011 = vpop.f32.mrb[0].mxu0
          %v5012 = vadd.f32 %v4050, %v5011
          %v5013 = vpop.f32.mrb[0].mxu0
          %v5014 = vadd.f32 %v4054, %v5013
          %v5015 = vpop.f32.mrb[0].mxu0
          %v5016 = vadd.f32 %v4050, %v5015
          %v5017 = vpop.f32.mrb[0].mxu0
          %v5018 = vadd.f32 %v4054, %v5017
          %5019 = vdwg.mxu0
          %5020 = vmatprep.subr.bf16.mxu0 %v4478
          %5021 = vmatpush1.bf16.msra.mxu0 %v4477
          %5022 = vmatprep.subr.bf16.mxu0 %v4494
          %5023 = vmatpush1.bf16.msra.mxu0 %v4493
          %5024 = vmatprep.subr.bf16.mxu0 %v4510
          %5025 = vmatpush1.bf16.msra.mxu0 %v4509
          %5026 = vmatprep.subr.bf16.mxu0 %v4526
          %5027 = vmatpush1.bf16.msra.mxu0 %v4525
          %5028 = vmatprep.subr.bf16.mxu0 %v4542
          %5029 = vmatpush1.bf16.msra.mxu0 %v4541
          %5030 = vmatprep.subr.bf16.mxu0 %v4558
          %5031 = vmatpush1.bf16.msra.mxu0 %v4557
          %5032 = vmatprep.subr.bf16.mxu0 %v4574
          %5033 = vmatpush1.bf16.msra.mxu0 %v4573
          %5034 = vmatprep.subr.bf16.mxu0 %v4590
          %5035 = vmatpush1.bf16.msra.mxu0 %v4589
          %5036 = vmatprep.subr.bf16.mxu0 0
          %5037 = vmatpush1.bf16.msra.mxu0 0
          %5038 = vmatprep.subr.bf16.mxu0 0
          %5039 = vmatpush1.bf16.msra.mxu0 0
          %5040 = vmatprep.subr.bf16.mxu0 0
          %5041 = vmatpush1.bf16.msra.mxu0 0
          %5042 = vmatprep.subr.bf16.mxu0 0
          %5043 = vmatpush1.bf16.msra.mxu0 0
          %5044 = vmatprep.subr.bf16.mxu0 0
          %5045 = vmatpush1.bf16.msra.mxu0 0
          %5046 = vmatprep.subr.bf16.mxu0 0
          %5047 = vmatpush1.bf16.msra.mxu0 0
          %5048 = vmatprep.subr.bf16.mxu0 0
          %5049 = vmatpush1.bf16.msra.mxu0 0
          %5050 = vmatprep.subr.bf16.mxu0 0
          %5051 = vmatpush1.bf16.msra.mxu0 0
          %5052 = vmatprep.mubr.bf16.mxu0 0
          %5053 = vmatmul.mubr.bf16.gmra.mrb[0].mxu0 %v3864
          %v5054 = vpop.f32.mrb[0].mxu0
          %v5055 = vadd.f32 %v4058, %v5054
          %v5056 = vpop.f32.mrb[0].mxu0
          %v5057 = vadd.f32 %v4062, %v5056
          %v5058 = vpop.f32.mrb[0].mxu0
          %v5059 = vadd.f32 %v4058, %v5058
          %v5060 = vpop.f32.mrb[0].mxu0
          %v5061 = vadd.f32 %v4062, %v5060
          %5062 = vdwg.mxu0
          %v5063 = vmax.f32 %v4754, 0.0
          %v5064 = vmax.f32 %v4756, 0.0
          %v5065 = vmax.f32 %v4797, 0.0
          %v5066 = vmax.f32 %v4799, 0.0
          %v5067 = vmax.f32 %v4840, 0.0
          %v5068 = vmax.f32 %v4842, 0.0
          %v5069 = vmax.f32 %v4883, 0.0
          %v5070 = vmax.f32 %v4885, 0.0
          %v5071 = vmax.f32 %v4926, 0.0
          %v5072 = vmax.f32 %v4928, 0.0
          %v5073 = vmax.f32 %v4969, 0.0
          %v5074 = vmax.f32 %v4971, 0.0
          %v5075 = vmax.f32 %v5012, 0.0
          %v5076 = vmax.f32 %v5014, 0.0
          %v5077 = vmax.f32 %v5055, 0.0
          %v5078 = vmax.f32 %v5057, 0.0
          %v5079 = vmax.f32 %v4758, 0.0
          %v5080 = vmax.f32 %v4760, 0.0
          %v5081 = vmax.f32 %v4801, 0.0
          %v5082 = vmax.f32 %v4803, 0.0
          %v5083 = vmax.f32 %v4844, 0.0
          %v5084 = vmax.f32 %v4846, 0.0
          %v5085 = vmax.f32 %v4887, 0.0
          %v5086 = vmax.f32 %v4889, 0.0
          %v5087 = vmax.f32 %v4930, 0.0
          %v5088 = vmax.f32 %v4932, 0.0
          %v5089 = vmax.f32 %v4973, 0.0
          %v5090 = vmax.f32 %v4975, 0.0
          %v5091 = vmax.f32 %v5016, 0.0
          %v5092 = vmax.f32 %v5018, 0.0
          %v5093 = vmax.f32 %v5059, 0.0
          %v5094 = vmax.f32 %v5061, 0.0
          %v5095 = vpack.c.bf16 %v5079, %v5063
          %v5096 = vpack.c.bf16 %v5080, %v5064
          %v5097 = vpack.c.bf16 %v5081, %v5065
          %v5098 = vpack.c.bf16 %v5082, %v5066
          %v5099 = vpack.c.bf16 %v5083, %v5067
          %v5100 = vpack.c.bf16 %v5084, %v5068
          %v5101 = vpack.c.bf16 %v5085, %v5069
          %v5102 = vpack.c.bf16 %v5086, %v5070
          %v5103 = vpack.c.bf16 %v5087, %v5071
          %v5104 = vpack.c.bf16 %v5088, %v5072
          %v5105 = vpack.c.bf16 %v5089, %v5073
          %v5106 = vpack.c.bf16 %v5090, %v5074
          %v5107 = vpack.c.bf16 %v5091, %v5075
          %v5108 = vpack.c.bf16 %v5092, %v5076
          %v5109 = vpack.c.bf16 %v5093, %v5077
          %v5110 = vpack.c.bf16 %v5094, %v5078
          %s5111 = scalar_lea.vmem [#allocation16], 1024
          %v5112 = vld [vmem:[%s5111] sm:$0xf]
          %v5113 = vld [vmem:[%s5111 + $0x4] sm:$0xf]
          %v5114 = vld [vmem:[%s5111 + $0x8] sm:$0xf]
          %v5115 = vld [vmem:[%s5111 + $0xc] sm:$0xf]
          %v5116 = vld [vmem:[%s5111 + $0x10] sm:$0xf]
          %v5117 = vld [vmem:[%s5111 + $0x14] sm:$0xf]
          %v5118 = vld [vmem:[%s5111 + $0x18] sm:$0xf]
          %v5119 = vld [vmem:[%s5111 + $0x1c] sm:$0xf]
          %v5120 = vld [vmem:[%s5111 + $0x20] sm:$0xf]
          %v5121 = vld [vmem:[%s5111 + $0x24] sm:$0xf]
          %v5122 = vld [vmem:[%s5111 + $0x28] sm:$0xf]
          %v5123 = vld [vmem:[%s5111 + $0x2c] sm:$0xf]
          %v5124 = vld [vmem:[%s5111 + $0x30] sm:$0xf]
          %v5125 = vld [vmem:[%s5111 + $0x34] sm:$0xf]
          %v5126 = vld [vmem:[%s5111 + $0x38] sm:$0xf]
          %v5127 = vld [vmem:[%s5111 + $0x3c] sm:$0xf]
          %v5128 = vld [vmem:[%s5111 + $0x40] sm:$0xf]
          %v5129 = vld [vmem:[%s5111 + $0x44] sm:$0xf]
          %v5130 = vld [vmem:[%s5111 + $0x48] sm:$0xf]
          %v5131 = vld [vmem:[%s5111 + $0x4c] sm:$0xf]
          %v5132 = vld [vmem:[%s5111 + $0x50] sm:$0xf]
          %v5133 = vld [vmem:[%s5111 + $0x54] sm:$0xf]
          %v5134 = vld [vmem:[%s5111 + $0x58] sm:$0xf]
          %v5135 = vld [vmem:[%s5111 + $0x5c] sm:$0xf]
          %v5136 = vld [vmem:[%s5111 + $0x60] sm:$0xf]
          %v5137 = vld [vmem:[%s5111 + $0x64] sm:$0xf]
          %v5138 = vld [vmem:[%s5111 + $0x68] sm:$0xf]
          %v5139 = vld [vmem:[%s5111 + $0x6c] sm:$0xf]
          %v5140 = vld [vmem:[%s5111 + $0x70] sm:$0xf]
          %v5141 = vld [vmem:[%s5111 + $0x74] sm:$0xf]
          %v5142 = vld [vmem:[%s5111 + $0x78] sm:$0xf]
          %v5143 = vld [vmem:[%s5111 + $0x7c] sm:$0xf]
          %v5144 = vld [vmem:[%s5111 + $0x80] sm:$0xf]
          %v5145 = vld [vmem:[%s5111 + $0x84] sm:$0xf]
          %v5146 = vld [vmem:[%s5111 + $0x88] sm:$0xf]
          %v5147 = vld [vmem:[%s5111 + $0x8c] sm:$0xf]
          %v5148 = vld [vmem:[%s5111 + $0x90] sm:$0xf]
          %v5149 = vld [vmem:[%s5111 + $0x94] sm:$0xf]
          %v5150 = vld [vmem:[%s5111 + $0x98] sm:$0xf]
          %v5151 = vld [vmem:[%s5111 + $0x9c] sm:$0xf]
          %v5152 = vld [vmem:[%s5111 + $0xa0] sm:$0xf]
          %v5153 = vld [vmem:[%s5111 + $0xa4] sm:$0xf]
          %v5154 = vld [vmem:[%s5111 + $0xa8] sm:$0xf]
          %v5155 = vld [vmem:[%s5111 + $0xac] sm:$0xf]
          %v5156 = vld [vmem:[%s5111 + $0xb0] sm:$0xf]
          %v5157 = vld [vmem:[%s5111 + $0xb4] sm:$0xf]
          %v5158 = vld [vmem:[%s5111 + $0xb8] sm:$0xf]
          %v5159 = vld [vmem:[%s5111 + $0xbc] sm:$0xf]
          %v5160 = vld [vmem:[%s5111 + $0xc0] sm:$0xf]
          %v5161 = vld [vmem:[%s5111 + $0xc4] sm:$0xf]
          %v5162 = vld [vmem:[%s5111 + $0xc8] sm:$0xf]
          %v5163 = vld [vmem:[%s5111 + $0xcc] sm:$0xf]
          %v5164 = vld [vmem:[%s5111 + $0xd0] sm:$0xf]
          %v5165 = vld [vmem:[%s5111 + $0xd4] sm:$0xf]
          %v5166 = vld [vmem:[%s5111 + $0xd8] sm:$0xf]
          %v5167 = vld [vmem:[%s5111 + $0xdc] sm:$0xf]
          %v5168 = vld [vmem:[%s5111 + $0xe0] sm:$0xf]
          %v5169 = vld [vmem:[%s5111 + $0xe4] sm:$0xf]
          %v5170 = vld [vmem:[%s5111 + $0xe8] sm:$0xf]
          %v5171 = vld [vmem:[%s5111 + $0xec] sm:$0xf]
          %v5172 = vld [vmem:[%s5111 + $0xf0] sm:$0xf]
          %v5173 = vld [vmem:[%s5111 + $0xf4] sm:$0xf]
          %v5174 = vld [vmem:[%s5111 + $0xf8] sm:$0xf]
          %v5175 = vld [vmem:[%s5111 + $0xfc] sm:$0xf]
          %v5176 = vld [vmem:[%s5111 + $0x100] sm:$0xf]
          %v5177 = vld [vmem:[%s5111 + $0x104] sm:$0xf]
          %v5178 = vld [vmem:[%s5111 + $0x108] sm:$0xf]
          %v5179 = vld [vmem:[%s5111 + $0x10c] sm:$0xf]
          %v5180 = vld [vmem:[%s5111 + $0x110] sm:$0xf]
          %v5181 = vld [vmem:[%s5111 + $0x114] sm:$0xf]
          %v5182 = vld [vmem:[%s5111 + $0x118] sm:$0xf]
          %v5183 = vld [vmem:[%s5111 + $0x11c] sm:$0xf]
          %v5184 = vld [vmem:[%s5111 + $0x120] sm:$0xf]
          %v5185 = vld [vmem:[%s5111 + $0x124] sm:$0xf]
          %v5186 = vld [vmem:[%s5111 + $0x128] sm:$0xf]
          %v5187 = vld [vmem:[%s5111 + $0x12c] sm:$0xf]
          %v5188 = vld [vmem:[%s5111 + $0x130] sm:$0xf]
          %v5189 = vld [vmem:[%s5111 + $0x134] sm:$0xf]
          %v5190 = vld [vmem:[%s5111 + $0x138] sm:$0xf]
          %v5191 = vld [vmem:[%s5111 + $0x13c] sm:$0xf]
          %v5192 = vld [vmem:[%s5111 + $0x140] sm:$0xf]
          %v5193 = vld [vmem:[%s5111 + $0x144] sm:$0xf]
          %v5194 = vld [vmem:[%s5111 + $0x148] sm:$0xf]
          %v5195 = vld [vmem:[%s5111 + $0x14c] sm:$0xf]
          %v5196 = vld [vmem:[%s5111 + $0x150] sm:$0xf]
          %v5197 = vld [vmem:[%s5111 + $0x154] sm:$0xf]
          %v5198 = vld [vmem:[%s5111 + $0x158] sm:$0xf]
          %v5199 = vld [vmem:[%s5111 + $0x15c] sm:$0xf]
          %v5200 = vld [vmem:[%s5111 + $0x160] sm:$0xf]
          %v5201 = vld [vmem:[%s5111 + $0x164] sm:$0xf]
          %v5202 = vld [vmem:[%s5111 + $0x168] sm:$0xf]
          %v5203 = vld [vmem:[%s5111 + $0x16c] sm:$0xf]
          %v5204 = vld [vmem:[%s5111 + $0x170] sm:$0xf]
          %v5205 = vld [vmem:[%s5111 + $0x174] sm:$0xf]
          %v5206 = vld [vmem:[%s5111 + $0x178] sm:$0xf]
          %v5207 = vld [vmem:[%s5111 + $0x17c] sm:$0xf]
          %v5208 = vld [vmem:[%s5111 + $0x180] sm:$0xf]
          %v5209 = vld [vmem:[%s5111 + $0x184] sm:$0xf]
          %v5210 = vld [vmem:[%s5111 + $0x188] sm:$0xf]
          %v5211 = vld [vmem:[%s5111 + $0x18c] sm:$0xf]
          %v5212 = vld [vmem:[%s5111 + $0x190] sm:$0xf]
          %v5213 = vld [vmem:[%s5111 + $0x194] sm:$0xf]
          %v5214 = vld [vmem:[%s5111 + $0x198] sm:$0xf]
          %v5215 = vld [vmem:[%s5111 + $0x19c] sm:$0xf]
          %v5216 = vld [vmem:[%s5111 + $0x1a0] sm:$0xf]
          %v5217 = vld [vmem:[%s5111 + $0x1a4] sm:$0xf]
          %v5218 = vld [vmem:[%s5111 + $0x1a8] sm:$0xf]
          %v5219 = vld [vmem:[%s5111 + $0x1ac] sm:$0xf]
          %v5220 = vld [vmem:[%s5111 + $0x1b0] sm:$0xf]
          %v5221 = vld [vmem:[%s5111 + $0x1b4] sm:$0xf]
          %v5222 = vld [vmem:[%s5111 + $0x1b8] sm:$0xf]
          %v5223 = vld [vmem:[%s5111 + $0x1bc] sm:$0xf]
          %v5224 = vld [vmem:[%s5111 + $0x1c0] sm:$0xf]
          %v5225 = vld [vmem:[%s5111 + $0x1c4] sm:$0xf]
          %v5226 = vld [vmem:[%s5111 + $0x1c8] sm:$0xf]
          %v5227 = vld [vmem:[%s5111 + $0x1cc] sm:$0xf]
          %v5228 = vld [vmem:[%s5111 + $0x1d0] sm:$0xf]
          %v5229 = vld [vmem:[%s5111 + $0x1d4] sm:$0xf]
          %v5230 = vld [vmem:[%s5111 + $0x1d8] sm:$0xf]
          %v5231 = vld [vmem:[%s5111 + $0x1dc] sm:$0xf]
          %v5232 = vld [vmem:[%s5111 + $0x1e0] sm:$0xf]
          %v5233 = vld [vmem:[%s5111 + $0x1e4] sm:$0xf]
          %v5234 = vld [vmem:[%s5111 + $0x1e8] sm:$0xf]
          %v5235 = vld [vmem:[%s5111 + $0x1ec] sm:$0xf]
          %v5236 = vld [vmem:[%s5111 + $0x1f0] sm:$0xf]
          %v5237 = vld [vmem:[%s5111 + $0x1f4] sm:$0xf]
          %v5238 = vld [vmem:[%s5111 + $0x1f8] sm:$0xf]
          %v5239 = vld [vmem:[%s5111 + $0x1fc] sm:$0xf]
          %v5240 = vld [vmem:[%s5111 + $0x200] sm:$0xf]
          %v5241 = vld [vmem:[%s5111 + $0x204] sm:$0xf]
          %v5242 = vld [vmem:[%s5111 + $0x208] sm:$0xf]
          %v5243 = vld [vmem:[%s5111 + $0x20c] sm:$0xf]
          %v5244 = vld [vmem:[%s5111 + $0x210] sm:$0xf]
          %v5245 = vld [vmem:[%s5111 + $0x214] sm:$0xf]
          %v5246 = vld [vmem:[%s5111 + $0x218] sm:$0xf]
          %v5247 = vld [vmem:[%s5111 + $0x21c] sm:$0xf]
          %v5248 = vld [vmem:[%s5111 + $0x220] sm:$0xf]
          %v5249 = vld [vmem:[%s5111 + $0x224] sm:$0xf]
          %v5250 = vld [vmem:[%s5111 + $0x228] sm:$0xf]
          %v5251 = vld [vmem:[%s5111 + $0x22c] sm:$0xf]
          %v5252 = vld [vmem:[%s5111 + $0x230] sm:$0xf]
          %v5253 = vld [vmem:[%s5111 + $0x234] sm:$0xf]
          %v5254 = vld [vmem:[%s5111 + $0x238] sm:$0xf]
          %v5255 = vld [vmem:[%s5111 + $0x23c] sm:$0xf]
          %v5256 = vld [vmem:[%s5111 + $0x240] sm:$0xf]
          %v5257 = vld [vmem:[%s5111 + $0x244] sm:$0xf]
          %v5258 = vld [vmem:[%s5111 + $0x248] sm:$0xf]
          %v5259 = vld [vmem:[%s5111 + $0x24c] sm:$0xf]
          %v5260 = vld [vmem:[%s5111 + $0x250] sm:$0xf]
          %v5261 = vld [vmem:[%s5111 + $0x254] sm:$0xf]
          %v5262 = vld [vmem:[%s5111 + $0x258] sm:$0xf]
          %v5263 = vld [vmem:[%s5111 + $0x25c] sm:$0xf]
          %v5264 = vld [vmem:[%s5111 + $0x260] sm:$0xf]
          %v5265 = vld [vmem:[%s5111 + $0x264] sm:$0xf]
          %v5266 = vld [vmem:[%s5111 + $0x268] sm:$0xf]
          %v5267 = vld [vmem:[%s5111 + $0x26c] sm:$0xf]
          %v5268 = vld [vmem:[%s5111 + $0x270] sm:$0xf]
          %v5269 = vld [vmem:[%s5111 + $0x274] sm:$0xf]
          %v5270 = vld [vmem:[%s5111 + $0x278] sm:$0xf]
          %v5271 = vld [vmem:[%s5111 + $0x27c] sm:$0xf]
          %v5272 = vld [vmem:[%s5111 + $0x280] sm:$0xf]
          %v5273 = vld [vmem:[%s5111 + $0x284] sm:$0xf]
          %v5274 = vld [vmem:[%s5111 + $0x288] sm:$0xf]
          %v5275 = vld [vmem:[%s5111 + $0x28c] sm:$0xf]
          %v5276 = vld [vmem:[%s5111 + $0x290] sm:$0xf]
          %v5277 = vld [vmem:[%s5111 + $0x294] sm:$0xf]
          %v5278 = vld [vmem:[%s5111 + $0x298] sm:$0xf]
          %v5279 = vld [vmem:[%s5111 + $0x29c] sm:$0xf]
          %v5280 = vld [vmem:[%s5111 + $0x2a0] sm:$0xf]
          %v5281 = vld [vmem:[%s5111 + $0x2a4] sm:$0xf]
          %v5282 = vld [vmem:[%s5111 + $0x2a8] sm:$0xf]
          %v5283 = vld [vmem:[%s5111 + $0x2ac] sm:$0xf]
          %v5284 = vld [vmem:[%s5111 + $0x2b0] sm:$0xf]
          %v5285 = vld [vmem:[%s5111 + $0x2b4] sm:$0xf]
          %v5286 = vld [vmem:[%s5111 + $0x2b8] sm:$0xf]
          %v5287 = vld [vmem:[%s5111 + $0x2bc] sm:$0xf]
          %v5288 = vld [vmem:[%s5111 + $0x2c0] sm:$0xf]
          %v5289 = vld [vmem:[%s5111 + $0x2c4] sm:$0xf]
          %v5290 = vld [vmem:[%s5111 + $0x2c8] sm:$0xf]
          %v5291 = vld [vmem:[%s5111 + $0x2cc] sm:$0xf]
          %v5292 = vld [vmem:[%s5111 + $0x2d0] sm:$0xf]
          %v5293 = vld [vmem:[%s5111 + $0x2d4] sm:$0xf]
          %v5294 = vld [vmem:[%s5111 + $0x2d8] sm:$0xf]
          %v5295 = vld [vmem:[%s5111 + $0x2dc] sm:$0xf]
          %v5296 = vld [vmem:[%s5111 + $0x2e0] sm:$0xf]
          %v5297 = vld [vmem:[%s5111 + $0x2e4] sm:$0xf]
          %v5298 = vld [vmem:[%s5111 + $0x2e8] sm:$0xf]
          %v5299 = vld [vmem:[%s5111 + $0x2ec] sm:$0xf]
          %v5300 = vld [vmem:[%s5111 + $0x2f0] sm:$0xf]
          %v5301 = vld [vmem:[%s5111 + $0x2f4] sm:$0xf]
          %v5302 = vld [vmem:[%s5111 + $0x2f8] sm:$0xf]
          %v5303 = vld [vmem:[%s5111 + $0x2fc] sm:$0xf]
          %v5304 = vld [vmem:[%s5111 + $0x300] sm:$0xf]
          %v5305 = vld [vmem:[%s5111 + $0x304] sm:$0xf]
          %v5306 = vld [vmem:[%s5111 + $0x308] sm:$0xf]
          %v5307 = vld [vmem:[%s5111 + $0x30c] sm:$0xf]
          %v5308 = vld [vmem:[%s5111 + $0x310] sm:$0xf]
          %v5309 = vld [vmem:[%s5111 + $0x314] sm:$0xf]
          %v5310 = vld [vmem:[%s5111 + $0x318] sm:$0xf]
          %v5311 = vld [vmem:[%s5111 + $0x31c] sm:$0xf]
          %v5312 = vld [vmem:[%s5111 + $0x320] sm:$0xf]
          %v5313 = vld [vmem:[%s5111 + $0x324] sm:$0xf]
          %v5314 = vld [vmem:[%s5111 + $0x328] sm:$0xf]
          %v5315 = vld [vmem:[%s5111 + $0x32c] sm:$0xf]
          %v5316 = vld [vmem:[%s5111 + $0x330] sm:$0xf]
          %v5317 = vld [vmem:[%s5111 + $0x334] sm:$0xf]
          %v5318 = vld [vmem:[%s5111 + $0x338] sm:$0xf]
          %v5319 = vld [vmem:[%s5111 + $0x33c] sm:$0xf]
          %v5320 = vld [vmem:[%s5111 + $0x340] sm:$0xf]
          %v5321 = vld [vmem:[%s5111 + $0x344] sm:$0xf]
          %v5322 = vld [vmem:[%s5111 + $0x348] sm:$0xf]
          %v5323 = vld [vmem:[%s5111 + $0x34c] sm:$0xf]
          %v5324 = vld [vmem:[%s5111 + $0x350] sm:$0xf]
          %v5325 = vld [vmem:[%s5111 + $0x354] sm:$0xf]
          %v5326 = vld [vmem:[%s5111 + $0x358] sm:$0xf]
          %v5327 = vld [vmem:[%s5111 + $0x35c] sm:$0xf]
          %v5328 = vld [vmem:[%s5111 + $0x360] sm:$0xf]
          %v5329 = vld [vmem:[%s5111 + $0x364] sm:$0xf]
          %v5330 = vld [vmem:[%s5111 + $0x368] sm:$0xf]
          %v5331 = vld [vmem:[%s5111 + $0x36c] sm:$0xf]
          %v5332 = vld [vmem:[%s5111 + $0x370] sm:$0xf]
          %v5333 = vld [vmem:[%s5111 + $0x374] sm:$0xf]
          %v5334 = vld [vmem:[%s5111 + $0x378] sm:$0xf]
          %v5335 = vld [vmem:[%s5111 + $0x37c] sm:$0xf]
          %v5336 = vld [vmem:[%s5111 + $0x380] sm:$0xf]
          %v5337 = vld [vmem:[%s5111 + $0x384] sm:$0xf]
          %v5338 = vld [vmem:[%s5111 + $0x388] sm:$0xf]
          %v5339 = vld [vmem:[%s5111 + $0x38c] sm:$0xf]
          %v5340 = vld [vmem:[%s5111 + $0x390] sm:$0xf]
          %v5341 = vld [vmem:[%s5111 + $0x394] sm:$0xf]
          %v5342 = vld [vmem:[%s5111 + $0x398] sm:$0xf]
          %v5343 = vld [vmem:[%s5111 + $0x39c] sm:$0xf]
          %v5344 = vld [vmem:[%s5111 + $0x3a0] sm:$0xf]
          %v5345 = vld [vmem:[%s5111 + $0x3a4] sm:$0xf]
          %v5346 = vld [vmem:[%s5111 + $0x3a8] sm:$0xf]
          %v5347 = vld [vmem:[%s5111 + $0x3ac] sm:$0xf]
          %v5348 = vld [vmem:[%s5111 + $0x3b0] sm:$0xf]
          %v5349 = vld [vmem:[%s5111 + $0x3b4] sm:$0xf]
          %v5350 = vld [vmem:[%s5111 + $0x3b8] sm:$0xf]
          %v5351 = vld [vmem:[%s5111 + $0x3bc] sm:$0xf]
          %v5352 = vld [vmem:[%s5111 + $0x3c0] sm:$0xf]
          %v5353 = vld [vmem:[%s5111 + $0x3c4] sm:$0xf]
          %v5354 = vld [vmem:[%s5111 + $0x3c8] sm:$0xf]
          %v5355 = vld [vmem:[%s5111 + $0x3cc] sm:$0xf]
          %v5356 = vld [vmem:[%s5111 + $0x3d0] sm:$0xf]
          %v5357 = vld [vmem:[%s5111 + $0x3d4] sm:$0xf]
          %v5358 = vld [vmem:[%s5111 + $0x3d8] sm:$0xf]
          %v5359 = vld [vmem:[%s5111 + $0x3dc] sm:$0xf]
          %v5360 = vld [vmem:[%s5111 + $0x3e0] sm:$0xf]
          %v5361 = vld [vmem:[%s5111 + $0x3e4] sm:$0xf]
          %v5362 = vld [vmem:[%s5111 + $0x3e8] sm:$0xf]
          %v5363 = vld [vmem:[%s5111 + $0x3ec] sm:$0xf]
          %v5364 = vld [vmem:[%s5111 + $0x3f0] sm:$0xf]
          %v5365 = vld [vmem:[%s5111 + $0x3f4] sm:$0xf]
          %v5366 = vld [vmem:[%s5111 + $0x3f8] sm:$0xf]
          %v5367 = vld [vmem:[%s5111 + $0x3fc] sm:$0xf]
          %v5368 = vlaneseq
          %v5369 = vshrl.u32 %v5368, 7
          %v5370 = vsub.s32 3, %v5369
          %v5371 = vrot.slane %v3710, %v5370
          %v5628 = vunpack.c.l.b16 %v5112
          %v5629 = vunpack.c.l.b16 %v5113
          %v5630 = vunpack.c.l.b16 %v5114
          %v5631 = vunpack.c.l.b16 %v5115
          %v5632 = vunpack.c.l.b16 %v5116
          %v5633 = vunpack.c.l.b16 %v5117
          %v5634 = vunpack.c.l.b16 %v5118
          %v5635 = vunpack.c.l.b16 %v5119
          %v5636 = vunpack.c.l.b16 %v5120
          %v5637 = vunpack.c.l.b16 %v5121
          %v5638 = vunpack.c.l.b16 %v5122
          %v5639 = vunpack.c.l.b16 %v5123
          %v5640 = vunpack.c.l.b16 %v5124
          %v5641 = vunpack.c.l.b16 %v5125
          %v5642 = vunpack.c.l.b16 %v5126
          %v5643 = vunpack.c.l.b16 %v5127
          %v5644 = vunpack.c.l.b16 %v5128
          %v5645 = vunpack.c.l.b16 %v5129
          %v5646 = vunpack.c.l.b16 %v5130
          %v5647 = vunpack.c.l.b16 %v5131
          %v5648 = vunpack.c.l.b16 %v5132
          %v5649 = vunpack.c.l.b16 %v5133
          %v5650 = vunpack.c.l.b16 %v5134
          %v5651 = vunpack.c.l.b16 %v5135
          %v5652 = vunpack.c.l.b16 %v5136
          %v5653 = vunpack.c.l.b16 %v5137
          %v5654 = vunpack.c.l.b16 %v5138
          %v5655 = vunpack.c.l.b16 %v5139
          %v5656 = vunpack.c.l.b16 %v5140
          %v5657 = vunpack.c.l.b16 %v5141
          %v5658 = vunpack.c.l.b16 %v5142
          %v5659 = vunpack.c.l.b16 %v5143
          %v5660 = vunpack.c.l.b16 %v5144
          %v5661 = vunpack.c.l.b16 %v5145
          %v5662 = vunpack.c.l.b16 %v5146
          %v5663 = vunpack.c.l.b16 %v5147
          %v5664 = vunpack.c.l.b16 %v5148
          %v5665 = vunpack.c.l.b16 %v5149
          %v5666 = vunpack.c.l.b16 %v5150
          %v5667 = vunpack.c.l.b16 %v5151
          %v5668 = vunpack.c.l.b16 %v5152
          %v5669 = vunpack.c.l.b16 %v5153
          %v5670 = vunpack.c.l.b16 %v5154
          %v5671 = vunpack.c.l.b16 %v5155
          %v5672 = vunpack.c.l.b16 %v5156
          %v5673 = vunpack.c.l.b16 %v5157
          %v5674 = vunpack.c.l.b16 %v5158
          %v5675 = vunpack.c.l.b16 %v5159
          %v5676 = vunpack.c.l.b16 %v5160
          %v5677 = vunpack.c.l.b16 %v5161
          %v5678 = vunpack.c.l.b16 %v5162
          %v5679 = vunpack.c.l.b16 %v5163
          %v5680 = vunpack.c.l.b16 %v5164
          %v5681 = vunpack.c.l.b16 %v5165
          %v5682 = vunpack.c.l.b16 %v5166
          %v5683 = vunpack.c.l.b16 %v5167
          %v5684 = vunpack.c.l.b16 %v5168
          %v5685 = vunpack.c.l.b16 %v5169
          %v5686 = vunpack.c.l.b16 %v5170
          %v5687 = vunpack.c.l.b16 %v5171
          %v5688 = vunpack.c.l.b16 %v5172
          %v5689 = vunpack.c.l.b16 %v5173
          %v5690 = vunpack.c.l.b16 %v5174
          %v5691 = vunpack.c.l.b16 %v5175
          %v5692 = vunpack.c.l.b16 %v5176
          %v5693 = vunpack.c.l.b16 %v5177
          %v5694 = vunpack.c.l.b16 %v5178
          %v5695 = vunpack.c.l.b16 %v5179
          %v5696 = vunpack.c.l.b16 %v5180
          %v5697 = vunpack.c.l.b16 %v5181
          %v5698 = vunpack.c.l.b16 %v5182
          %v5699 = vunpack.c.l.b16 %v5183
          %v5700 = vunpack.c.l.b16 %v5184
          %v5701 = vunpack.c.l.b16 %v5185
          %v5702 = vunpack.c.l.b16 %v5186
          %v5703 = vunpack.c.l.b16 %v5187
          %v5704 = vunpack.c.l.b16 %v5188
          %v5705 = vunpack.c.l.b16 %v5189
          %v5706 = vunpack.c.l.b16 %v5190
          %v5707 = vunpack.c.l.b16 %v5191
          %v5708 = vunpack.c.l.b16 %v5192
          %v5709 = vunpack.c.l.b16 %v5193
          %v5710 = vunpack.c.l.b16 %v5194
          %v5711 = vunpack.c.l.b16 %v5195
          %v5712 = vunpack.c.l.b16 %v5196
          %v5713 = vunpack.c.l.b16 %v5197
          %v5714 = vunpack.c.l.b16 %v5198
          %v5715 = vunpack.c.l.b16 %v5199
          %v5716 = vunpack.c.l.b16 %v5200
          %v5717 = vunpack.c.l.b16 %v5201
          %v5718 = vunpack.c.l.b16 %v5202
          %v5719 = vunpack.c.l.b16 %v5203
          %v5720 = vunpack.c.l.b16 %v5204
          %v5721 = vunpack.c.l.b16 %v5205
          %v5722 = vunpack.c.l.b16 %v5206
          %v5723 = vunpack.c.l.b16 %v5207
          %v5724 = vunpack.c.l.b16 %v5208
          %v5725 = vunpack.c.l.b16 %v5209
          %v5726 = vunpack.c.l.b16 %v5210
          %v5727 = vunpack.c.l.b16 %v5211
          %v5728 = vunpack.c.l.b16 %v5212
          %v5729 = vunpack.c.l.b16 %v5213
          %v5730 = vunpack.c.l.b16 %v5214
          %v5731 = vunpack.c.l.b16 %v5215
          %v5732 = vunpack.c.l.b16 %v5216
          %v5733 = vunpack.c.l.b16 %v5217
          %v5734 = vunpack.c.l.b16 %v5218
          %v5735 = vunpack.c.l.b16 %v5219
          %v5736 = vunpack.c.l.b16 %v5220
          %v5737 = vunpack.c.l.b16 %v5221
          %v5738 = vunpack.c.l.b16 %v5222
          %v5739 = vunpack.c.l.b16 %v5223
          %v5740 = vunpack.c.l.b16 %v5224
          %v5741 = vunpack.c.l.b16 %v5225
          %v5742 = vunpack.c.l.b16 %v5226
          %v5743 = vunpack.c.l.b16 %v5227
          %v5744 = vunpack.c.l.b16 %v5228
          %v5745 = vunpack.c.l.b16 %v5229
          %v5746 = vunpack.c.l.b16 %v5230
          %v5747 = vunpack.c.l.b16 %v5231
          %v5748 = vunpack.c.l.b16 %v5232
          %v5749 = vunpack.c.l.b16 %v5233
          %v5750 = vunpack.c.l.b16 %v5234
          %v5751 = vunpack.c.l.b16 %v5235
          %v5752 = vunpack.c.l.b16 %v5236
          %v5753 = vunpack.c.l.b16 %v5237
          %v5754 = vunpack.c.l.b16 %v5238
          %v5755 = vunpack.c.l.b16 %v5239
          %v5756 = vunpack.c.l.b16 %v5240
          %v5757 = vunpack.c.l.b16 %v5241
          %v5758 = vunpack.c.l.b16 %v5242
          %v5759 = vunpack.c.l.b16 %v5243
          %v5760 = vunpack.c.l.b16 %v5244
          %v5761 = vunpack.c.l.b16 %v5245
          %v5762 = vunpack.c.l.b16 %v5246
          %v5763 = vunpack.c.l.b16 %v5247
          %v5764 = vunpack.c.l.b16 %v5248
          %v5765 = vunpack.c.l.b16 %v5249
          %v5766 = vunpack.c.l.b16 %v5250
          %v5767 = vunpack.c.l.b16 %v5251
          %v5768 = vunpack.c.l.b16 %v5252
          %v5769 = vunpack.c.l.b16 %v5253
          %v5770 = vunpack.c.l.b16 %v5254
          %v5771 = vunpack.c.l.b16 %v5255
          %v5772 = vunpack.c.l.b16 %v5256
          %v5773 = vunpack.c.l.b16 %v5257
          %v5774 = vunpack.c.l.b16 %v5258
          %v5775 = vunpack.c.l.b16 %v5259
          %v5776 = vunpack.c.l.b16 %v5260
          %v5777 = vunpack.c.l.b16 %v5261
          %v5778 = vunpack.c.l.b16 %v5262
          %v5779 = vunpack.c.l.b16 %v5263
          %v5780 = vunpack.c.l.b16 %v5264
          %v5781 = vunpack.c.l.b16 %v5265
          %v5782 = vunpack.c.l.b16 %v5266
          %v5783 = vunpack.c.l.b16 %v5267
          %v5784 = vunpack.c.l.b16 %v5268
          %v5785 = vunpack.c.l.b16 %v5269
          %v5786 = vunpack.c.l.b16 %v5270
          %v5787 = vunpack.c.l.b16 %v5271
          %v5788 = vunpack.c.l.b16 %v5272
          %v5789 = vunpack.c.l.b16 %v5273
          %v5790 = vunpack.c.l.b16 %v5274
          %v5791 = vunpack.c.l.b16 %v5275
          %v5792 = vunpack.c.l.b16 %v5276
          %v5793 = vunpack.c.l.b16 %v5277
          %v5794 = vunpack.c.l.b16 %v5278
          %v5795 = vunpack.c.l.b16 %v5279
          %v5796 = vunpack.c.l.b16 %v5280
          %v5797 = vunpack.c.l.b16 %v5281
          %v5798 = vunpack.c.l.b16 %v5282
          %v5799 = vunpack.c.l.b16 %v5283
          %v5800 = vunpack.c.l.b16 %v5284
          %v5801 = vunpack.c.l.b16 %v5285
          %v5802 = vunpack.c.l.b16 %v5286
          %v5803 = vunpack.c.l.b16 %v5287
          %v5804 = vunpack.c.l.b16 %v5288
          %v5805 = vunpack.c.l.b16 %v5289
          %v5806 = vunpack.c.l.b16 %v5290
          %v5807 = vunpack.c.l.b16 %v5291
          %v5808 = vunpack.c.l.b16 %v5292
          %v5809 = vunpack.c.l.b16 %v5293
          %v5810 = vunpack.c.l.b16 %v5294
          %v5811 = vunpack.c.l.b16 %v5295
          %v5812 = vunpack.c.l.b16 %v5296
          %v5813 = vunpack.c.l.b16 %v5297
          %v5814 = vunpack.c.l.b16 %v5298
          %v5815 = vunpack.c.l.b16 %v5299
          %v5816 = vunpack.c.l.b16 %v5300
          %v5817 = vunpack.c.l.b16 %v5301
          %v5818 = vunpack.c.l.b16 %v5302
          %v5819 = vunpack.c.l.b16 %v5303
          %v5820 = vunpack.c.l.b16 %v5304
          %v5821 = vunpack.c.l.b16 %v5305
          %v5822 = vunpack.c.l.b16 %v5306
          %v5823 = vunpack.c.l.b16 %v5307
          %v5824 = vunpack.c.l.b16 %v5308
          %v5825 = vunpack.c.l.b16 %v5309
          %v5826 = vunpack.c.l.b16 %v5310
          %v5827 = vunpack.c.l.b16 %v5311
          %v5828 = vunpack.c.l.b16 %v5312
          %v5829 = vunpack.c.l.b16 %v5313
          %v5830 = vunpack.c.l.b16 %v5314
          %v5831 = vunpack.c.l.b16 %v5315
          %v5832 = vunpack.c.l.b16 %v5316
          %v5833 = vunpack.c.l.b16 %v5317
          %v5834 = vunpack.c.l.b16 %v5318
          %v5835 = vunpack.c.l.b16 %v5319
          %v5836 = vunpack.c.l.b16 %v5320
          %v5837 = vunpack.c.l.b16 %v5321
          %v5838 = vunpack.c.l.b16 %v5322
          %v5839 = vunpack.c.l.b16 %v5323
          %v5840 = vunpack.c.l.b16 %v5324
          %v5841 = vunpack.c.l.b16 %v5325
          %v5842 = vunpack.c.l.b16 %v5326
          %v5843 = vunpack.c.l.b16 %v5327
          %v5844 = vunpack.c.l.b16 %v5328
          %v5845 = vunpack.c.l.b16 %v5329
          %v5846 = vunpack.c.l.b16 %v5330
          %v5847 = vunpack.c.l.b16 %v5331
          %v5848 = vunpack.c.l.b16 %v5332
          %v5849 = vunpack.c.l.b16 %v5333
          %v5850 = vunpack.c.l.b16 %v5334
          %v5851 = vunpack.c.l.b16 %v5335
          %v5852 = vunpack.c.l.b16 %v5336
          %v5853 = vunpack.c.l.b16 %v5337
          %v5854 = vunpack.c.l.b16 %v5338
          %v5855 = vunpack.c.l.b16 %v5339
          %v5856 = vunpack.c.l.b16 %v5340
          %v5857 = vunpack.c.l.b16 %v5341
          %v5858 = vunpack.c.l.b16 %v5342
          %v5859 = vunpack.c.l.b16 %v5343
          %v5860 = vunpack.c.l.b16 %v5344
          %v5861 = vunpack.c.l.b16 %v5345
          %v5862 = vunpack.c.l.b16 %v5346
          %v5863 = vunpack.c.l.b16 %v5347
          %v5864 = vunpack.c.l.b16 %v5348
          %v5865 = vunpack.c.l.b16 %v5349
          %v5866 = vunpack.c.l.b16 %v5350
          %v5867 = vunpack.c.l.b16 %v5351
          %v5868 = vunpack.c.l.b16 %v5352
          %v5869 = vunpack.c.l.b16 %v5353
          %v5870 = vunpack.c.l.b16 %v5354
          %v5871 = vunpack.c.l.b16 %v5355
          %v5872 = vunpack.c.l.b16 %v5356
          %v5873 = vunpack.c.l.b16 %v5357
          %v5874 = vunpack.c.l.b16 %v5358
          %v5875 = vunpack.c.l.b16 %v5359
          %v5876 = vunpack.c.l.b16 %v5360
          %v5877 = vunpack.c.l.b16 %v5361
          %v5878 = vunpack.c.l.b16 %v5362
          %v5879 = vunpack.c.l.b16 %v5363
          %v5880 = vunpack.c.l.b16 %v5364
          %v5881 = vunpack.c.l.b16 %v5365
          %v5882 = vunpack.c.l.b16 %v5366
          %v5883 = vunpack.c.l.b16 %v5367
          %v5884 = vpack.c.b16 %v5629, %v5628
          %v5885 = vpack.c.b16 %v5631, %v5630
          %v5886 = vpack.c.b16 %v5633, %v5632
          %v5887 = vpack.c.b16 %v5635, %v5634
          %v5888 = vpack.c.b16 %v5637, %v5636
          %v5889 = vpack.c.b16 %v5639, %v5638
          %v5890 = vpack.c.b16 %v5641, %v5640
          %v5891 = vpack.c.b16 %v5643, %v5642
          %v5892 = vpack.c.b16 %v5645, %v5644
          %v5893 = vpack.c.b16 %v5647, %v5646
          %v5894 = vpack.c.b16 %v5649, %v5648
          %v5895 = vpack.c.b16 %v5651, %v5650
          %v5896 = vpack.c.b16 %v5653, %v5652
          %v5897 = vpack.c.b16 %v5655, %v5654
          %v5898 = vpack.c.b16 %v5657, %v5656
          %v5899 = vpack.c.b16 %v5659, %v5658
          %v5900 = vpack.c.b16 %v5661, %v5660
          %v5901 = vpack.c.b16 %v5663, %v5662
          %v5902 = vpack.c.b16 %v5665, %v5664
          %v5903 = vpack.c.b16 %v5667, %v5666
          %v5904 = vpack.c.b16 %v5669, %v5668
          %v5905 = vpack.c.b16 %v5671, %v5670
          %v5906 = vpack.c.b16 %v5673, %v5672
          %v5907 = vpack.c.b16 %v5675, %v5674
          %v5908 = vpack.c.b16 %v5677, %v5676
          %v5909 = vpack.c.b16 %v5679, %v5678
          %v5910 = vpack.c.b16 %v5681, %v5680
          %v5911 = vpack.c.b16 %v5683, %v5682
          %v5912 = vpack.c.b16 %v5685, %v5684
          %v5913 = vpack.c.b16 %v5687, %v5686
          %v5914 = vpack.c.b16 %v5689, %v5688
          %v5915 = vpack.c.b16 %v5691, %v5690
          %v5916 = vpack.c.b16 %v5693, %v5692
          %v5917 = vpack.c.b16 %v5695, %v5694
          %v5918 = vpack.c.b16 %v5697, %v5696
          %v5919 = vpack.c.b16 %v5699, %v5698
          %v5920 = vpack.c.b16 %v5701, %v5700
          %v5921 = vpack.c.b16 %v5703, %v5702
          %v5922 = vpack.c.b16 %v5705, %v5704
          %v5923 = vpack.c.b16 %v5707, %v5706
          %v5924 = vpack.c.b16 %v5709, %v5708
          %v5925 = vpack.c.b16 %v5711, %v5710
          %v5926 = vpack.c.b16 %v5713, %v5712
          %v5927 = vpack.c.b16 %v5715, %v5714
          %v5928 = vpack.c.b16 %v5717, %v5716
          %v5929 = vpack.c.b16 %v5719, %v5718
          %v5930 = vpack.c.b16 %v5721, %v5720
          %v5931 = vpack.c.b16 %v5723, %v5722
          %v5932 = vpack.c.b16 %v5725, %v5724
          %v5933 = vpack.c.b16 %v5727, %v5726
          %v5934 = vpack.c.b16 %v5729, %v5728
          %v5935 = vpack.c.b16 %v5731, %v5730
          %v5936 = vpack.c.b16 %v5733, %v5732
          %v5937 = vpack.c.b16 %v5735, %v5734
          %v5938 = vpack.c.b16 %v5737, %v5736
          %v5939 = vpack.c.b16 %v5739, %v5738
          %v5940 = vpack.c.b16 %v5741, %v5740
          %v5941 = vpack.c.b16 %v5743, %v5742
          %v5942 = vpack.c.b16 %v5745, %v5744
          %v5943 = vpack.c.b16 %v5747, %v5746
          %v5944 = vpack.c.b16 %v5749, %v5748
          %v5945 = vpack.c.b16 %v5751, %v5750
          %v5946 = vpack.c.b16 %v5753, %v5752
          %v5947 = vpack.c.b16 %v5755, %v5754
          %v5948 = vpack.c.b16 %v5757, %v5756
          %v5949 = vpack.c.b16 %v5759, %v5758
          %v5950 = vpack.c.b16 %v5761, %v5760
          %v5951 = vpack.c.b16 %v5763, %v5762
          %v5952 = vpack.c.b16 %v5765, %v5764
          %v5953 = vpack.c.b16 %v5767, %v5766
          %v5954 = vpack.c.b16 %v5769, %v5768
          %v5955 = vpack.c.b16 %v5771, %v5770
          %v5956 = vpack.c.b16 %v5773, %v5772
          %v5957 = vpack.c.b16 %v5775, %v5774
          %v5958 = vpack.c.b16 %v5777, %v5776
          %v5959 = vpack.c.b16 %v5779, %v5778
          %v5960 = vpack.c.b16 %v5781, %v5780
          %v5961 = vpack.c.b16 %v5783, %v5782
          %v5962 = vpack.c.b16 %v5785, %v5784
          %v5963 = vpack.c.b16 %v5787, %v5786
          %v5964 = vpack.c.b16 %v5789, %v5788
          %v5965 = vpack.c.b16 %v5791, %v5790
          %v5966 = vpack.c.b16 %v5793, %v5792
          %v5967 = vpack.c.b16 %v5795, %v5794
          %v5968 = vpack.c.b16 %v5797, %v5796
          %v5969 = vpack.c.b16 %v5799, %v5798
          %v5970 = vpack.c.b16 %v5801, %v5800
          %v5971 = vpack.c.b16 %v5803, %v5802
          %v5972 = vpack.c.b16 %v5805, %v5804
          %v5973 = vpack.c.b16 %v5807, %v5806
          %v5974 = vpack.c.b16 %v5809, %v5808
          %v5975 = vpack.c.b16 %v5811, %v5810
          %v5976 = vpack.c.b16 %v5813, %v5812
          %v5977 = vpack.c.b16 %v5815, %v5814
          %v5978 = vpack.c.b16 %v5817, %v5816
          %v5979 = vpack.c.b16 %v5819, %v5818
          %v5980 = vpack.c.b16 %v5821, %v5820
          %v5981 = vpack.c.b16 %v5823, %v5822
          %v5982 = vpack.c.b16 %v5825, %v5824
          %v5983 = vpack.c.b16 %v5827, %v5826
          %v5984 = vpack.c.b16 %v5829, %v5828
          %v5985 = vpack.c.b16 %v5831, %v5830
          %v5986 = vpack.c.b16 %v5833, %v5832
          %v5987 = vpack.c.b16 %v5835, %v5834
          %v5988 = vpack.c.b16 %v5837, %v5836
          %v5989 = vpack.c.b16 %v5839, %v5838
          %v5990 = vpack.c.b16 %v5841, %v5840
          %v5991 = vpack.c.b16 %v5843, %v5842
          %v5992 = vpack.c.b16 %v5845, %v5844
          %v5993 = vpack.c.b16 %v5847, %v5846
          %v5994 = vpack.c.b16 %v5849, %v5848
          %v5995 = vpack.c.b16 %v5851, %v5850
          %v5996 = vpack.c.b16 %v5853, %v5852
          %v5997 = vpack.c.b16 %v5855, %v5854
          %v5998 = vpack.c.b16 %v5857, %v5856
          %v5999 = vpack.c.b16 %v5859, %v5858
          %v6000 = vpack.c.b16 %v5861, %v5860
          %v6001 = vpack.c.b16 %v5863, %v5862
          %v6002 = vpack.c.b16 %v5865, %v5864
          %v6003 = vpack.c.b16 %v5867, %v5866
          %v6004 = vpack.c.b16 %v5869, %v5868
          %v6005 = vpack.c.b16 %v5871, %v5870
          %v6006 = vpack.c.b16 %v5873, %v5872
          %v6007 = vpack.c.b16 %v5875, %v5874
          %v6008 = vpack.c.b16 %v5877, %v5876
          %v6009 = vpack.c.b16 %v5879, %v5878
          %v6010 = vpack.c.b16 %v5881, %v5880
          %v6011 = vpack.c.b16 %v5883, %v5882
          %6140 = vmatprep.subr.bf16.mxu0 0
          %6141 = vmatpush1.bf16.msra.mxu0 %v5884
          %6142 = vmatprep.subr.bf16.mxu0 0
          %6143 = vmatpush1.bf16.msra.mxu0 %v5885
          %6144 = vmatprep.subr.bf16.mxu0 0
          %6145 = vmatpush1.bf16.msra.mxu0 %v5886
          %6146 = vmatprep.subr.bf16.mxu0 0
          %6147 = vmatpush1.bf16.msra.mxu0 %v5887
          %6148 = vmatprep.subr.bf16.mxu0 0
          %6149 = vmatpush1.bf16.msra.mxu0 %v5888
          %6150 = vmatprep.subr.bf16.mxu0 0
          %6151 = vmatpush1.bf16.msra.mxu0 %v5889
          %6152 = vmatprep.subr.bf16.mxu0 0
          %6153 = vmatpush1.bf16.msra.mxu0 %v5890
          %6154 = vmatprep.subr.bf16.mxu0 0
          %6155 = vmatpush1.bf16.msra.mxu0 %v5891
          %6156 = vmatprep.subr.bf16.mxu0 0
          %6157 = vmatpush1.bf16.msra.mxu0 %v5892
          %6158 = vmatprep.subr.bf16.mxu0 0
          %6159 = vmatpush1.bf16.msra.mxu0 %v5893
          %6160 = vmatprep.subr.bf16.mxu0 0
          %6161 = vmatpush1.bf16.msra.mxu0 %v5894
          %6162 = vmatprep.subr.bf16.mxu0 0
          %6163 = vmatpush1.bf16.msra.mxu0 %v5895
          %6164 = vmatprep.subr.bf16.mxu0 0
          %6165 = vmatpush1.bf16.msra.mxu0 %v5896
          %6166 = vmatprep.subr.bf16.mxu0 0
          %6167 = vmatpush1.bf16.msra.mxu0 %v5897
          %6168 = vmatprep.subr.bf16.mxu0 0
          %6169 = vmatpush1.bf16.msra.mxu0 %v5898
          %6170 = vmatprep.subr.bf16.mxu0 0
          %6171 = vmatpush1.bf16.msra.mxu0 %v5899
          %6172 = vmatprep.mubr.bf16.mxu0 %v5096
          %6173 = vmatmul.mubr.bf16.gmra.mrb[0].mxu0 %v5095
          %v6174 = vpop.f32.mrb[0].mxu0
          %v6175 = vadd.f32 %v5371, %v6174
          %v6176 = vpop.f32.mrb[0].mxu0
          %v6177 = vpop.f32.mrb[0].mxu0
          %v6178 = vadd.f32 %v5371, %v6177
          %v6179 = vpop.f32.mrb[0].mxu0
          %6180 = vdwg.mxu0
          %6181 = vmatprep.subr.bf16.mxu0 0
          %6182 = vmatpush1.bf16.msra.mxu0 %v5900
          %6183 = vmatprep.subr.bf16.mxu0 0
          %6184 = vmatpush1.bf16.msra.mxu0 %v5901
          %6185 = vmatprep.subr.bf16.mxu0 0
          %6186 = vmatpush1.bf16.msra.mxu0 %v5902
          %6187 = vmatprep.subr.bf16.mxu0 0
          %6188 = vmatpush1.bf16.msra.mxu0 %v5903
          %6189 = vmatprep.subr.bf16.mxu0 0
          %6190 = vmatpush1.bf16.msra.mxu0 %v5904
          %6191 = vmatprep.subr.bf16.mxu0 0
          %6192 = vmatpush1.bf16.msra.mxu0 %v5905
          %6193 = vmatprep.subr.bf16.mxu0 0
          %6194 = vmatpush1.bf16.msra.mxu0 %v5906
          %6195 = vmatprep.subr.bf16.mxu0 0
          %6196 = vmatpush1.bf16.msra.mxu0 %v5907
          %6197 = vmatprep.subr.bf16.mxu0 0
          %6198 = vmatpush1.bf16.msra.mxu0 %v5908
          %6199 = vmatprep.subr.bf16.mxu0 0
          %6200 = vmatpush1.bf16.msra.mxu0 %v5909
          %6201 = vmatprep.subr.bf16.mxu0 0
          %6202 = vmatpush1.bf16.msra.mxu0 %v5910
          %6203 = vmatprep.subr.bf16.mxu0 0
          %6204 = vmatpush1.bf16.msra.mxu0 %v5911
          %6205 = vmatprep.subr.bf16.mxu0 0
          %6206 = vmatpush1.bf16.msra.mxu0 %v5912
          %6207 = vmatprep.subr.bf16.mxu0 0
          %6208 = vmatpush1.bf16.msra.mxu0 %v5913
          %6209 = vmatprep.subr.bf16.mxu0 0
          %6210 = vmatpush1.bf16.msra.mxu0 %v5914
          %6211 = vmatprep.subr.bf16.mxu0 0
          %6212 = vmatpush1.bf16.msra.mxu0 %v5915
          %6213 = vmatprep.mubr.bf16.mxu0 %v5098
          %6214 = vmatmul.mubr.bf16.gmra.mrb[0].mxu0 %v5097
          %v6215 = vpop.f32.mrb[0].mxu0
          %v6216 = vadd.f32 %v6175, %v6215
          %v6217 = vpop.f32.mrb[0].mxu0
          %v6218 = vpop.f32.mrb[0].mxu0
          %v6219 = vadd.f32 %v6178, %v6218
          %v6220 = vpop.f32.mrb[0].mxu0
          %6221 = vdwg.mxu0
          %6222 = vmatprep.subr.bf16.mxu0 0
          %6223 = vmatpush1.bf16.msra.mxu0 %v5916
          %6224 = vmatprep.subr.bf16.mxu0 0
          %6225 = vmatpush1.bf16.msra.mxu0 %v5917
          %6226 = vmatprep.subr.bf16.mxu0 0
          %6227 = vmatpush1.bf16.msra.mxu0 %v5918
          %6228 = vmatprep.subr.bf16.mxu0 0
          %6229 = vmatpush1.bf16.msra.mxu0 %v5919
          %6230 = vmatprep.subr.bf16.mxu0 0
          %6231 = vmatpush1.bf16.msra.mxu0 %v5920
          %6232 = vmatprep.subr.bf16.mxu0 0
          %6233 = vmatpush1.bf16.msra.mxu0 %v5921
          %6234 = vmatprep.subr.bf16.mxu0 0
          %6235 = vmatpush1.bf16.msra.mxu0 %v5922
          %6236 = vmatprep.subr.bf16.mxu0 0
          %6237 = vmatpush1.bf16.msra.mxu0 %v5923
          %6238 = vmatprep.subr.bf16.mxu0 0
          %6239 = vmatpush1.bf16.msra.mxu0 %v5924
          %6240 = vmatprep.subr.bf16.mxu0 0
          %6241 = vmatpush1.bf16.msra.mxu0 %v5925
          %6242 = vmatprep.subr.bf16.mxu0 0
          %6243 = vmatpush1.bf16.msra.mxu0 %v5926
          %6244 = vmatprep.subr.bf16.mxu0 0
          %6245 = vmatpush1.bf16.msra.mxu0 %v5927
          %6246 = vmatprep.subr.bf16.mxu0 0
          %6247 = vmatpush1.bf16.msra.mxu0 %v5928
          %6248 = vmatprep.subr.bf16.mxu0 0
          %6249 = vmatpush1.bf16.msra.mxu0 %v5929
          %6250 = vmatprep.subr.bf16.mxu0 0
          %6251 = vmatpush1.bf16.msra.mxu0 %v5930
          %6252 = vmatprep.subr.bf16.mxu0 0
          %6253 = vmatpush1.bf16.msra.mxu0 %v5931
          %6254 = vmatprep.mubr.bf16.mxu0 %v5100
          %6255 = vmatmul.mubr.bf16.gmra.mrb[0].mxu0 %v5099
          %v6256 = vpop.f32.mrb[0].mxu0
          %v6257 = vadd.f32 %v6216, %v6256
          %v6258 = vpop.f32.mrb[0].mxu0
          %v6259 = vpop.f32.mrb[0].mxu0
          %v6260 = vadd.f32 %v6219, %v6259
          %v6261 = vpop.f32.mrb[0].mxu0
          %6262 = vdwg.mxu0
          %6263 = vmatprep.subr.bf16.mxu0 0
          %6264 = vmatpush1.bf16.msra.mxu0 %v5932
          %6265 = vmatprep.subr.bf16.mxu0 0
          %6266 = vmatpush1.bf16.msra.mxu0 %v5933
          %6267 = vmatprep.subr.bf16.mxu0 0
          %6268 = vmatpush1.bf16.msra.mxu0 %v5934
          %6269 = vmatprep.subr.bf16.mxu0 0
          %6270 = vmatpush1.bf16.msra.mxu0 %v5935
          %6271 = vmatprep.subr.bf16.mxu0 0
          %6272 = vmatpush1.bf16.msra.mxu0 %v5936
          %6273 = vmatprep.subr.bf16.mxu0 0
          %6274 = vmatpush1.bf16.msra.mxu0 %v5937
          %6275 = vmatprep.subr.bf16.mxu0 0
          %6276 = vmatpush1.bf16.msra.mxu0 %v5938
          %6277 = vmatprep.subr.bf16.mxu0 0
          %6278 = vmatpush1.bf16.msra.mxu0 %v5939
          %6279 = vmatprep.subr.bf16.mxu0 0
          %6280 = vmatpush1.bf16.msra.mxu0 %v5940
          %6281 = vmatprep.subr.bf16.mxu0 0
          %6282 = vmatpush1.bf16.msra.mxu0 %v5941
          %6283 = vmatprep.subr.bf16.mxu0 0
          %6284 = vmatpush1.bf16.msra.mxu0 %v5942
          %6285 = vmatprep.subr.bf16.mxu0 0
          %6286 = vmatpush1.bf16.msra.mxu0 %v5943
          %6287 = vmatprep.subr.bf16.mxu0 0
          %6288 = vmatpush1.bf16.msra.mxu0 %v5944
          %6289 = vmatprep.subr.bf16.mxu0 0
          %6290 = vmatpush1.bf16.msra.mxu0 %v5945
          %6291 = vmatprep.subr.bf16.mxu0 0
          %6292 = vmatpush1.bf16.msra.mxu0 %v5946
          %6293 = vmatprep.subr.bf16.mxu0 0
          %6294 = vmatpush1.bf16.msra.mxu0 %v5947
          %6295 = vmatprep.mubr.bf16.mxu0 %v5102
          %6296 = vmatmul.mubr.bf16.gmra.mrb[0].mxu0 %v5101
          %v6297 = vpop.f32.mrb[0].mxu0
          %v6298 = vadd.f32 %v6257, %v6297
          %v6299 = vpop.f32.mrb[0].mxu0
          %v6300 = vpop.f32.mrb[0].mxu0
          %v6301 = vadd.f32 %v6260, %v6300
          %v6302 = vpop.f32.mrb[0].mxu0
          %6303 = vdwg.mxu0
          %6304 = vmatprep.subr.bf16.mxu0 0
          %6305 = vmatpush1.bf16.msra.mxu0 %v5948
          %6306 = vmatprep.subr.bf16.mxu0 0
          %6307 = vmatpush1.bf16.msra.mxu0 %v5949
          %6308 = vmatprep.subr.bf16.mxu0 0
          %6309 = vmatpush1.bf16.msra.mxu0 %v5950
          %6310 = vmatprep.subr.bf16.mxu0 0
          %6311 = vmatpush1.bf16.msra.mxu0 %v5951
          %6312 = vmatprep.subr.bf16.mxu0 0
          %6313 = vmatpush1.bf16.msra.mxu0 %v5952
          %6314 = vmatprep.subr.bf16.mxu0 0
          %6315 = vmatpush1.bf16.msra.mxu0 %v5953
          %6316 = vmatprep.subr.bf16.mxu0 0
          %6317 = vmatpush1.bf16.msra.mxu0 %v5954
          %6318 = vmatprep.subr.bf16.mxu0 0
          %6319 = vmatpush1.bf16.msra.mxu0 %v5955
          %6320 = vmatprep.subr.bf16.mxu0 0
          %6321 = vmatpush1.bf16.msra.mxu0 %v5956
          %6322 = vmatprep.subr.bf16.mxu0 0
          %6323 = vmatpush1.bf16.msra.mxu0 %v5957
          %6324 = vmatprep.subr.bf16.mxu0 0
          %6325 = vmatpush1.bf16.msra.mxu0 %v5958
          %6326 = vmatprep.subr.bf16.mxu0 0
          %6327 = vmatpush1.bf16.msra.mxu0 %v5959
          %6328 = vmatprep.subr.bf16.mxu0 0
          %6329 = vmatpush1.bf16.msra.mxu0 %v5960
          %6330 = vmatprep.subr.bf16.mxu0 0
          %6331 = vmatpush1.bf16.msra.mxu0 %v5961
          %6332 = vmatprep.subr.bf16.mxu0 0
          %6333 = vmatpush1.bf16.msra.mxu0 %v5962
          %6334 = vmatprep.subr.bf16.mxu0 0
          %6335 = vmatpush1.bf16.msra.mxu0 %v5963
          %6336 = vmatprep.mubr.bf16.mxu0 %v5104
          %6337 = vmatmul.mubr.bf16.gmra.mrb[0].mxu0 %v5103
          %v6338 = vpop.f32.mrb[0].mxu0
          %v6339 = vadd.f32 %v6298, %v6338
          %v6340 = vpop.f32.mrb[0].mxu0
          %v6341 = vpop.f32.mrb[0].mxu0
          %v6342 = vadd.f32 %v6301, %v6341
          %v6343 = vpop.f32.mrb[0].mxu0
          %6344 = vdwg.mxu0
          %6345 = vmatprep.subr.bf16.mxu0 0
          %6346 = vmatpush1.bf16.msra.mxu0 %v5964
          %6347 = vmatprep.subr.bf16.mxu0 0
          %6348 = vmatpush1.bf16.msra.mxu0 %v5965
          %6349 = vmatprep.subr.bf16.mxu0 0
          %6350 = vmatpush1.bf16.msra.mxu0 %v5966
          %6351 = vmatprep.subr.bf16.mxu0 0
          %6352 = vmatpush1.bf16.msra.mxu0 %v5967
          %6353 = vmatprep.subr.bf16.mxu0 0
          %6354 = vmatpush1.bf16.msra.mxu0 %v5968
          %6355 = vmatprep.subr.bf16.mxu0 0
          %6356 = vmatpush1.bf16.msra.mxu0 %v5969
          %6357 = vmatprep.subr.bf16.mxu0 0
          %6358 = vmatpush1.bf16.msra.mxu0 %v5970
          %6359 = vmatprep.subr.bf16.mxu0 0
          %6360 = vmatpush1.bf16.msra.mxu0 %v5971
          %6361 = vmatprep.subr.bf16.mxu0 0
          %6362 = vmatpush1.bf16.msra.mxu0 %v5972
          %6363 = vmatprep.subr.bf16.mxu0 0
          %6364 = vmatpush1.bf16.msra.mxu0 %v5973
          %6365 = vmatprep.subr.bf16.mxu0 0
          %6366 = vmatpush1.bf16.msra.mxu0 %v5974
          %6367 = vmatprep.subr.bf16.mxu0 0
          %6368 = vmatpush1.bf16.msra.mxu0 %v5975
          %6369 = vmatprep.subr.bf16.mxu0 0
          %6370 = vmatpush1.bf16.msra.mxu0 %v5976
          %6371 = vmatprep.subr.bf16.mxu0 0
          %6372 = vmatpush1.bf16.msra.mxu0 %v5977
          %6373 = vmatprep.subr.bf16.mxu0 0
          %6374 = vmatpush1.bf16.msra.mxu0 %v5978
          %6375 = vmatprep.subr.bf16.mxu0 0
          %6376 = vmatpush1.bf16.msra.mxu0 %v5979
          %6377 = vmatprep.mubr.bf16.mxu0 %v5106
          %6378 = vmatmul.mubr.bf16.gmra.mrb[0].mxu0 %v5105
          %v6379 = vpop.f32.mrb[0].mxu0
          %v6380 = vadd.f32 %v6339, %v6379
          %v6381 = vpop.f32.mrb[0].mxu0
          %v6382 = vpop.f32.mrb[0].mxu0
          %v6383 = vadd.f32 %v6342, %v6382
          %v6384 = vpop.f32.mrb[0].mxu0
          %6385 = vdwg.mxu0
          %6386 = vmatprep.subr.bf16.mxu0 0
          %6387 = vmatpush1.bf16.msra.mxu0 %v5980
          %6388 = vmatprep.subr.bf16.mxu0 0
          %6389 = vmatpush1.bf16.msra.mxu0 %v5981
          %6390 = vmatprep.subr.bf16.mxu0 0
          %6391 = vmatpush1.bf16.msra.mxu0 %v5982
          %6392 = vmatprep.subr.bf16.mxu0 0
          %6393 = vmatpush1.bf16.msra.mxu0 %v5983
          %6394 = vmatprep.subr.bf16.mxu0 0
          %6395 = vmatpush1.bf16.msra.mxu0 %v5984
          %6396 = vmatprep.subr.bf16.mxu0 0
          %6397 = vmatpush1.bf16.msra.mxu0 %v5985
          %6398 = vmatprep.subr.bf16.mxu0 0
          %6399 = vmatpush1.bf16.msra.mxu0 %v5986
          %6400 = vmatprep.subr.bf16.mxu0 0
          %6401 = vmatpush1.bf16.msra.mxu0 %v5987
          %6402 = vmatprep.subr.bf16.mxu0 0
          %6403 = vmatpush1.bf16.msra.mxu0 %v5988
          %6404 = vmatprep.subr.bf16.mxu0 0
          %6405 = vmatpush1.bf16.msra.mxu0 %v5989
          %6406 = vmatprep.subr.bf16.mxu0 0
          %6407 = vmatpush1.bf16.msra.mxu0 %v5990
          %6408 = vmatprep.subr.bf16.mxu0 0
          %6409 = vmatpush1.bf16.msra.mxu0 %v5991
          %6410 = vmatprep.subr.bf16.mxu0 0
          %6411 = vmatpush1.bf16.msra.mxu0 %v5992
          %6412 = vmatprep.subr.bf16.mxu0 0
          %6413 = vmatpush1.bf16.msra.mxu0 %v5993
          %6414 = vmatprep.subr.bf16.mxu0 0
          %6415 = vmatpush1.bf16.msra.mxu0 %v5994
          %6416 = vmatprep.subr.bf16.mxu0 0
          %6417 = vmatpush1.bf16.msra.mxu0 %v5995
          %6418 = vmatprep.mubr.bf16.mxu0 %v5108
          %6419 = vmatmul.mubr.bf16.gmra.mrb[0].mxu0 %v5107
          %v6420 = vpop.f32.mrb[0].mxu0
          %v6421 = vadd.f32 %v6380, %v6420
          %v6422 = vpop.f32.mrb[0].mxu0
          %v6423 = vpop.f32.mrb[0].mxu0
          %v6424 = vadd.f32 %v6383, %v6423
          %v6425 = vpop.f32.mrb[0].mxu0
          %6426 = vdwg.mxu0
          %6427 = vmatprep.subr.bf16.mxu0 0
          %6428 = vmatpush1.bf16.msra.mxu0 %v5996
          %6429 = vmatprep.subr.bf16.mxu0 0
          %6430 = vmatpush1.bf16.msra.mxu0 %v5997
          %6431 = vmatprep.subr.bf16.mxu0 0
          %6432 = vmatpush1.bf16.msra.mxu0 %v5998
          %6433 = vmatprep.subr.bf16.mxu0 0
          %6434 = vmatpush1.bf16.msra.mxu0 %v5999
          %6435 = vmatprep.subr.bf16.mxu0 0
          %6436 = vmatpush1.bf16.msra.mxu0 %v6000
          %6437 = vmatprep.subr.bf16.mxu0 0
          %6438 = vmatpush1.bf16.msra.mxu0 %v6001
          %6439 = vmatprep.subr.bf16.mxu0 0
          %6440 = vmatpush1.bf16.msra.mxu0 %v6002
          %6441 = vmatprep.subr.bf16.mxu0 0
          %6442 = vmatpush1.bf16.msra.mxu0 %v6003
          %6443 = vmatprep.subr.bf16.mxu0 0
          %6444 = vmatpush1.bf16.msra.mxu0 %v6004
          %6445 = vmatprep.subr.bf16.mxu0 0
          %6446 = vmatpush1.bf16.msra.mxu0 %v6005
          %6447 = vmatprep.subr.bf16.mxu0 0
          %6448 = vmatpush1.bf16.msra.mxu0 %v6006
          %6449 = vmatprep.subr.bf16.mxu0 0
          %6450 = vmatpush1.bf16.msra.mxu0 %v6007
          %6451 = vmatprep.subr.bf16.mxu0 0
          %6452 = vmatpush1.bf16.msra.mxu0 %v6008
          %6453 = vmatprep.subr.bf16.mxu0 0
          %6454 = vmatpush1.bf16.msra.mxu0 %v6009
          %6455 = vmatprep.subr.bf16.mxu0 0
          %6456 = vmatpush1.bf16.msra.mxu0 %v6010
          %6457 = vmatprep.subr.bf16.mxu0 0
          %6458 = vmatpush1.bf16.msra.mxu0 %v6011
          %6459 = vmatprep.mubr.bf16.mxu0 %v5110
          %6460 = vmatmul.mubr.bf16.gmra.mrb[0].mxu0 %v5109
          %v6461 = vpop.f32.mrb[0].mxu0
          %v6462 = vadd.f32 %v6421, %v6461
          %v6463 = vpop.f32.mrb[0].mxu0
          %v6464 = vpop.f32.mrb[0].mxu0
          %v6465 = vadd.f32 %v6424, %v6464
          %v6466 = vpop.f32.mrb[0].mxu0
          %6467 = vdwg.mxu0
          %v6468 = vadd.f32 %v3862, %v6462
          %v6469 = vadd.f32 %v3863, %v6465
          %6470 = vadd.xlane.f32.xlu0 %v6468
          %v6471 = vpop.xlane.xlu0 %6470
          %6472 = vadd.xlane.f32.xlu0 %v6469
          %v6473 = vpop.xlane.xlu0 %6472
          %v6474 = vmul.f32 %v6471, %v1029
          %v6475 = vmul.f32 %v6473, %v1029
          %v6476 = vmul.f32 %v6468, %v6468
          %v6477 = vmul.f32 %v6469, %v6469
          %6478 = vadd.xlane.f32.xlu0 %v6476
          %v6479 = vpop.xlane.xlu0 %6478
          %6480 = vadd.xlane.f32.xlu0 %v6477
          %v6481 = vpop.xlane.xlu0 %6480
          %v6482 = vmul.f32 %v6479, %v1029
          %v6483 = vmul.f32 %v6481, %v1029
          %v6484 = vmul.f32 %v6474, %v6474
          %v6485 = vmul.f32 %v6475, %v6475
          %v6486 = vsub.f32 %v6482, %v6484
          %v6487 = vsub.f32 %v6483, %v6485
          %v6488 = vmax.f32 %v6486, 0.0
          %v6489 = vmax.f32 %v6487, 0.0
          %v6490 = vsub.f32 %v6468, %v6474
          %v6491 = vsub.f32 %v6469, %v6475
          %v6492 = vadd.f32 %v6488, 1e-05
          %v6493 = vadd.f32 %v6489, 1e-05
          %v6494 = vrsqrt.pop %v6492
          %v6495 = vrsqrt.pop %v6493
          %v6496 = vmul.f32 %v6490, %v6494
          %v6497 = vmul.f32 %v6491, %v6495
          %v6498 = vlaneseq
          %v6499 = vshrl.u32 %v6498, 7
          %v6500 = vsub.s32 4, %v6499
          %v6501 = vrot.slane %v3710, %v6500
          %v6502 = vmul.f32 %v6496, %v6501
          %v6503 = vmul.f32 %v6497, %v6501
          %v6504 = vlaneseq
          %v6505 = vshrl.u32 %v6504, 7
          %v6506 = vsub.s32 5, %v6505
          %v6507 = vrot.slane %v3710, %v6506
          %v6508 = vadd.f32 %v6502, %v6507
          %v6509 = vadd.f32 %v6503, %v6507
          %v6510 = vpack.c.bf16 %v6509, %v6508
          %v6511 = vld [vmem:[#allocation12] sm:$0xf]
          %v6512 = vld [vmem:[#allocation12 + $0x4] sm:$0xf]
          %v6513 = vld [vmem:[#allocation12 + $0x8] sm:$0xf]
          %v6514 = vld [vmem:[#allocation12 + $0xc] sm:$0xf]
          %v6515 = vld [vmem:[#allocation12 + $0x10] sm:$0xf]
          %v6516 = vld [vmem:[#allocation12 + $0x14] sm:$0xf]
          %v6517 = vld [vmem:[#allocation12 + $0x18] sm:$0xf]
          %v6518 = vld [vmem:[#allocation12 + $0x1c] sm:$0xf]
          %v6519 = vld [vmem:[#allocation12 + $0x20] sm:$0xf]
          %v6520 = vld [vmem:[#allocation12 + $0x24] sm:$0xf]
          %v6521 = vld [vmem:[#allocation12 + $0x28] sm:$0xf]
          %v6522 = vld [vmem:[#allocation12 + $0x2c] sm:$0xf]
          %v6523 = vld [vmem:[#allocation12 + $0x30] sm:$0xf]
          %v6524 = vld [vmem:[#allocation12 + $0x34] sm:$0xf]
          %v6525 = vld [vmem:[#allocation12 + $0x38] sm:$0xf]
          %v6526 = vld [vmem:[#allocation12 + $0x3c] sm:$0xf]
          %v6527 = vld [vmem:[%s10 + $0x2] sm:$0x1]
          %v6528 = vlaneseq
          %v6529 = vshrl.u32 %v6528, 7
          %v6530 = vsub.s32 0, %v6529
          %v6531 = vrot.slane %v6527, %v6530
          %v6548 = vunpack.c.l.b16 %v6511
          %v6549 = vunpack.c.l.b16 %v6512
          %v6550 = vunpack.c.l.b16 %v6513
          %v6551 = vunpack.c.l.b16 %v6514
          %v6552 = vunpack.c.l.b16 %v6515
          %v6553 = vunpack.c.l.b16 %v6516
          %v6554 = vunpack.c.l.b16 %v6517
          %v6555 = vunpack.c.l.b16 %v6518
          %v6556 = vunpack.c.l.b16 %v6519
          %v6557 = vunpack.c.l.b16 %v6520
          %v6558 = vunpack.c.l.b16 %v6521
          %v6559 = vunpack.c.l.b16 %v6522
          %v6560 = vunpack.c.l.b16 %v6523
          %v6561 = vunpack.c.l.b16 %v6524
          %v6562 = vunpack.c.l.b16 %v6525
          %v6563 = vunpack.c.l.b16 %v6526
          %v6564 = vpack.c.b16 %v6549, %v6548
          %v6565 = vpack.c.b16 %v6551, %v6550
          %v6566 = vpack.c.b16 %v6553, %v6552
          %v6567 = vpack.c.b16 %v6555, %v6554
          %v6568 = vpack.c.b16 %v6557, %v6556
          %v6569 = vpack.c.b16 %v6559, %v6558
          %v6570 = vpack.c.b16 %v6561, %v6560
          %v6571 = vpack.c.b16 %v6563, %v6562
          %6580 = vmatprep.subr.bf16.mxu0 0
          %6581 = vmatpush1.bf16.msra.mxu0 %v6564
          %6582 = vmatprep.subr.bf16.mxu0 0
          %6583 = vmatpush1.bf16.msra.mxu0 %v6565
          %6584 = vmatprep.subr.bf16.mxu0 0
          %6585 = vmatpush1.bf16.msra.mxu0 %v6566
          %6586 = vmatprep.subr.bf16.mxu0 0
          %6587 = vmatpush1.bf16.msra.mxu0 %v6567
          %6588 = vmatprep.subr.bf16.mxu0 0
          %6589 = vmatpush1.bf16.msra.mxu0 %v6568
          %6590 = vmatprep.subr.bf16.mxu0 0
          %6591 = vmatpush1.bf16.msra.mxu0 %v6569
          %6592 = vmatprep.subr.bf16.mxu0 0
          %6593 = vmatpush1.bf16.msra.mxu0 %v6570
          %6594 = vmatprep.subr.bf16.mxu0 0
          %6595 = vmatpush1.bf16.msra.mxu0 %v6571
          %6596 = vmatprep.subr.bf16.mxu0 0
          %6597 = vmatpush1.bf16.msra.mxu0 0
          %6598 = vmatprep.subr.bf16.mxu0 0
          %6599 = vmatpush1.bf16.msra.mxu0 0
          %6600 = vmatprep.subr.bf16.mxu0 0
          %6601 = vmatpush1.bf16.msra.mxu0 0
          %6602 = vmatprep.subr.bf16.mxu0 0
          %6603 = vmatpush1.bf16.msra.mxu0 0
          %6604 = vmatprep.subr.bf16.mxu0 0
          %6605 = vmatpush1.bf16.msra.mxu0 0
          %6606 = vmatprep.subr.bf16.mxu0 0
          %6607 = vmatpush1.bf16.msra.mxu0 0
          %6608 = vmatprep.subr.bf16.mxu0 0
          %6609 = vmatpush1.bf16.msra.mxu0 0
          %6610 = vmatprep.subr.bf16.mxu0 0
          %6611 = vmatpush1.bf16.msra.mxu0 0
          %6612 = vmatprep.mubr.bf16.mxu0 0
          %6613 = vmatmul.mubr.bf16.gmra.mrb[0].mxu0 %v6510
          %v6614 = vpop.f32.mrb[0].mxu0
          %v6615 = vadd.f32 %v6531, %v6614
          %v6616 = vpop.f32.mrb[0].mxu0
          %v6617 = vpop.f32.mrb[0].mxu0
          %v6618 = vadd.f32 %v6531, %v6617
          %v6619 = vpop.f32.mrb[0].mxu0
          %6620 = vdwg.mxu0
          %6621 = vst [vmem:[%s542] sm:$0xff] %v6615
          %6622 = vst [vmem:[%s542 + $0x8] sm:$0xff] %v6618
        $region112: #{tpu_custom_call.1} parent=63 // pred_fallthru
          _
        %s6623 = sand.u32 %s296, 1
        %s6624 = scalar_lea.sflag [#allocation6], %s6623
        %s6625 = sand.u32 %s296, 1
        %s6626 = smul.addr %s6625, 16
        %s6627 = scalar_lea.vmem [#allocation19], %s6626
        // Predicated region
        $region113: #{tpu_custom_call.1} parent=63 // pred_check
          %p6628 = pneg %p306
        $region114: #{tpu_custom_call.1} parent=63 // pred_check_branch
          %6630 = sbr.rel (%p6628) target = $region116
        $region115: #{tpu_custom_call.1} parent=63 // pred_region
          %p6631 = scmp.eq.s32.totalorder %s36, 2
          %s6632 = scalar_select %p6631, %s37, 0
          %s6633 = smul.u32 2, %s6632
          %s6635 = ssub.s32 256, 256
          %6636 = vsyncadd %s6624, %s6635
          %s6637 = smul.addr %s6633, 128
          %s6638 = scalar_lea.hbm %s11, %s6637
          %s6639 = sshll.u32 %s6627, 4
          %s6640 = int_to_ptr.vmem [resolvable:$true] %s6639
          %6645 = dma.vmem_to_hbm [thread:$0]  %s6640, 256, %s6638, %s6624, 128, 128, 8
        $region116: #{tpu_custom_call.1} parent=63 // pred_fallthru
          _
      $region64: #{tpu_custom_call.1} parent=5 // pred_fallthru
        _
      %p6646 = scmp.le.s32.totalorder 2, %s27
      // Predicated region
      $region117: #{tpu_custom_call.1} parent=5 // pred_check
        %p6647 = pneg %p6646
      $region118: #{tpu_custom_call.1} parent=5 // pred_check_branch
        %6649 = sbr.rel (%p6647) target = $region120
      $region119: #{tpu_custom_call.1} parent=5 // pred_region
        %s6650 = ssub.s32 %s27, 2
        // Predicated region
        $region121: #{tpu_custom_call.1} parent=119 // pred_check
          %p6651 = pneg %p312
        $region122: #{tpu_custom_call.1} parent=119 // pred_check_branch
          %6653 = sbr.rel (%p6651) target = $region124
        $region123: #{tpu_custom_call.1} parent=119 // pred_region
          %s6654 = sand.u32 %s297, 1
          %s6655 = scalar_lea.sflag [#allocation6], %s6654
          %s6656 = sand.u32 %s297, 1
          %s6657 = smul.addr %s6656, 16
          %s6658 = scalar_lea.vmem [#allocation19], %s6657
          %6659 = dma.done %s6655, 256
        $region124: #{tpu_custom_call.1} parent=119 // pred_fallthru
          _
      $region120: #{tpu_custom_call.1} parent=5 // pred_fallthru
        _
    $region6: #{tpu_custom_call.1} parent=1 // loop_footer
      %s31 = sadd.s32 1, %s27
    $region7: #{tpu_custom_call.1} parent=1 // loop_footer_branch
      %26 = sbr.rel target = $region3
    $region8: #{tpu_custom_call.1} parent=1 // loop_exit
      _
    %6660 = vsyncpa [#allocation5], 1
    %s6661 = scalar_lea.sflag [#allocation5], 1
    %6662 = vsyncpa %s6661, 1
    %6663 = vsyncpa [#allocation8], 1
    %6664 = vsyncpa [#allocation11], 1
    %6665 = vsyncpa [#allocation14], 1
    %6666 = vsyncpa [#allocation17], 1
    %6667 = vsyncpa [#allocation6], 1
    %s6668 = scalar_lea.sflag [#allocation6], 1
    %6669 = vsyncpa %s6668, 1

</llo_original>
